<compile_context>
chip_gen: v7x
topology: tpu7x:2x2x1
jax: 0.10.0
libtpu: 0.0.40
codegen_flags: <defaults>
</compile_context>

<pallas_src>
import jax
import jax.numpy as jnp
from jax.experimental import pallas as pl
from jax.experimental.pallas import tpu as pltpu

V = 512    # output_dim (vocab)  -- scaled down from the default 50004
E = 128    # emb_dim             -- scaled down from the default 200 (lane-aligned)
H = 256    # hid_dim             -- matches the module default
B = 8      # batch
S = 16     # encoder/context sequence length
TV = 256   # vocab tile (multiple of 128) -> grid of V // TV steps

# bf16 weight storage / MXU inputs on all generations (f32 accumulation);
# biases, LSTM gates and attention element-wise math stay f32.
WEIGHT_DTYPE = jnp.bfloat16


# ---------------------------------------------------------------------------
# Fused, vocab-tiled decoder-step kernel
# ---------------------------------------------------------------------------
def decoder_step_kernel(tok_ref,                       # SMEM (B,) int32 (scalar prefetch)
                        h0_ref, c0_ref, ctx_ref,       # VMEM f32 activations
                        emb_hbm_ref,                   # HBM (V, E) f32 embedding table
                        w_lstm_ref, b_lstm_ref,        # (E+H, 4H) bf16 / (1, 4H) f32
                        w_att_ref, b_att_ref,          # (H, H) bf16   / (1, H) f32
                        w_out_ref, b_out_ref,          # (E+H, TV) bf16 / (1, TV) f32
                        pred_ref, h1_ref, c1_ref,      # outputs
                        emb_sc, cat_sc, sem):          # scratch
    j = pl.program_id(0)
    b, e = emb_sc.shape
    h = h0_ref.shape[1]

    # ----- recurrent + attention part: runs once (first vocab tile) -----------
    @pl.when(j == 0)
    def _():
        # Embedding row gather: B tiny DMAs straight from the HBM-resident table.
        copies = []
        for i in range(b):
            cp = pltpu.make_async_copy(
                emb_hbm_ref.at[pl.ds(tok_ref[i], 1)],
                emb_sc.at[pl.ds(i, 1)],
                sem.at[i])
            cp.start()
            copies.append(cp)
        for cp in copies:
            cp.wait()
        # TODO(synk): nn.Dropout implemented as inference-mode identity (no mask).

        emb = emb_sc[...]                                        # (B, E) f32
        h0 = h0_ref[...]
        c0 = c0_ref[...]

        # LSTM cell: ONE MXU pass of [emb | h0] against pre-stacked (E+H, 4H).
        x = jnp.concatenate([emb, h0], axis=1).astype(w_lstm_ref.dtype)
        gates = (jnp.dot(x, w_lstm_ref[...],
                         preferred_element_type=jnp.float32)
                 + b_lstm_ref[...])                              # (B, 4H) f32
        i_g = jax.nn.sigmoid(gates[:, 0 * h:1 * h])
        f_g = jax.nn.sigmoid(gates[:, 1 * h:2 * h])
        g_g = jnp.tanh(gates[:, 2 * h:3 * h])
        o_g = jax.nn.sigmoid(gates[:, 3 * h:4 * h])
        c1 = f_g * c0 + i_g * g_g
        h1 = o_g * jnp.tanh(c1)
        h1_ref[...] = h1
        c1_ref[...] = c1

        # Attention over the (pre-tanh'ed) context.  Scores / weighted context
        # use VPU multiplies + XLU reductions (M=1 matmuls would waste the MXU).
        ctx = ctx_ref[...]                                       # (B, S, H) f32
        h_att = jax.nn.relu(
            jnp.dot(h1.astype(w_att_ref.dtype), w_att_ref[...],
                    preferred_element_type=jnp.float32)
            + b_att_ref[...])                                    # (B, H) f32
        scores = jnp.sum(h_att[:, None, :] * ctx, axis=-1)       # (B, S)
        scores = scores - jnp.max(scores, axis=-1, keepdims=True)
        expw = jnp.exp(scores)
        attn = expw * pl.reciprocal(jnp.sum(expw, axis=-1, keepdims=True),
                                    approx=True)                 # softmax (EUP recip)
        wctx = jnp.sum(attn[:, :, None] * ctx, axis=1)           # (B, H)

        cat_sc[...] = jnp.concatenate([emb, wctx], axis=1)       # (B, E+H) f32

    # ----- vocab projection: one lane-dense (B, TV) tile per grid step --------
    pred_ref[...] = (jnp.dot(cat_sc[...].astype(w_out_ref.dtype), w_out_ref[...],
                             preferred_element_type=jnp.float32)
                     + b_out_ref[...])


# ---------------------------------------------------------------------------
# Parameters: PyTorch-layout init, packed once into kernel (right-multiply) layout
# ---------------------------------------------------------------------------
def init_torch_params(key):
    ks = jax.random.split(key, 9)

    def w(k, shape):
        return jax.random.normal(k, shape, jnp.float32) * 0.08

    return {
        'embedding.weight': w(ks[0], (V, E)),
        'rnn.weight_ih_l0': w(ks[1], (4 * H, E)),
        'rnn.weight_hh_l0': w(ks[2], (4 * H, H)),
        'rnn.bias_ih_l0':   w(ks[3], (4 * H,)),
        'rnn.bias_hh_l0':   w(ks[4], (4 * H,)),
        'attention.weight': w(ks[5], (H, H)),
        'attention.bias':   w(ks[6], (H,)),
        'fc_out.weight':    w(ks[7], (V, E + H)),
        'fc_out.bias':      w(ks[8], (V,)),
    }


def pack_params(tp, weight_dtype=WEIGHT_DTYPE):
    """One-time offline prep: transpose/stack and store matmul weights in bf16."""
    return {
        # Embedding table stays f32 + HBM-resident; only B rows are gathered.
        'emb':    tp['embedding.weight'],                                      # (V, E)
        'w_lstm': jnp.concatenate([tp['rnn.weight_ih_l0'].T,
                                   tp['rnn.weight_hh_l0'].T],
                                  axis=0).astype(weight_dtype),                # (E+H, 4H)
        'b_lstm': (tp['rnn.bias_ih_l0'] + tp['rnn.bias_hh_l0'])[None, :],      # (1, 4H)
        'w_att':  tp['attention.weight'].T.astype(weight_dtype),               # (H, H)
        'b_att':  tp['attention.bias'][None, :],                               # (1, H)
        'w_out':  tp['fc_out.weight'].T.astype(weight_dtype),                  # (E+H, V)
        'b_out':  tp['fc_out.bias'][None, :],                                  # (1, V)
    }


# ---------------------------------------------------------------------------
# Decoder.forward equivalent (inference mode)
# ---------------------------------------------------------------------------
@jax.jit
def decoder_forward(tok, hidden, context, p):
    h0, c0 = hidden                                   # each (1, B, H)
    b = tok.shape[0]
    # tanh(context) is step-invariant across an autoregressive decode -> hoisted
    # out of the per-step kernel (compute once per sequence).
    ctx_t = jnp.tanh(context)

    n_v = pl.cdiv(V, TV)
    grid_spec = pltpu.PrefetchScalarGridSpec(
        num_scalar_prefetch=1,                        # tok -> SMEM
        grid=(n_v,),
        in_specs=[
            pl.BlockSpec((b, H), lambda j, tok_s: (0, 0)),          # h0 (resident)
            pl.BlockSpec((b, H), lambda j, tok_s: (0, 0)),          # c0 (resident)
            pl.BlockSpec((b, S, H), lambda j, tok_s: (0, 0, 0)),    # tanh(context)
            pl.BlockSpec(memory_space=pl.ANY),                      # emb table in HBM
            pl.BlockSpec((E + H, 4 * H), lambda j, tok_s: (0, 0)),  # w_lstm (resident)
            pl.BlockSpec((1, 4 * H), lambda j, tok_s: (0, 0)),      # b_lstm
            pl.BlockSpec((H, H), lambda j, tok_s: (0, 0)),          # w_att
            pl.BlockSpec((1, H), lambda j, tok_s: (0, 0)),          # b_att
            pl.BlockSpec((E + H, TV), lambda j, tok_s: (0, j)),     # w_out tile (streamed)
            pl.BlockSpec((1, TV), lambda j, tok_s: (0, j)),         # b_out tile
        ],
        out_specs=(
            pl.BlockSpec((b, TV), lambda j, tok_s: (0, j)),         # pred tile (lane-dense)
            pl.BlockSpec((b, H), lambda j, tok_s: (0, 0)),          # h1 (resident)
            pl.BlockSpec((b, H), lambda j, tok_s: (0, 0)),          # c1 (resident)
        ),
        scratch_shapes=[
            pltpu.VMEM((b, E), jnp.float32),          # gathered embedding rows
            pltpu.VMEM((b, E + H), jnp.float32),      # [emb | attended context]
            pltpu.SemaphoreType.DMA((b,)),            # row-gather semaphores
        ],
    )
    pred, h1, c1 = pl.pallas_call(
        decoder_step_kernel,
        out_shape=(jax.ShapeDtypeStruct((b, V), jnp.float32),
                   jax.ShapeDtypeStruct((b, H), jnp.float32),
                   jax.ShapeDtypeStruct((b, H), jnp.float32)),
        grid_spec=grid_spec,
        compiler_params=pltpu.CompilerParams(
            # The V axis carries the resident LSTM/attention state -> 'arbitrary'.
            # (Splitting V across v7x's two TCs would need per-core recompute of
            # that state; left as a follow-up.)
            dimension_semantics=("arbitrary",),
            vmem_limit_bytes=32 * 1024 * 1024),
    )(tok.astype(jnp.int32), h0[0], c0[0], ctx_t,
      p['emb'], p['w_lstm'], p['b_lstm'],
      p['w_att'], p['b_att'], p['w_out'], p['b_out'])
    return pred, (h1[None], c1[None])


# pure-JAX reference (f32 math on the same packed params) for a sanity check
def decoder_reference(tok, hidden, context, p):
    f32 = lambda a: a.astype(jnp.float32)
    h0, c0 = hidden[0][0], hidden[1][0]
    emb = f32(p['emb'])[tok]
    gates = jnp.concatenate([emb, h0], axis=1) @ f32(p['w_lstm']) + p['b_lstm']
    i = jax.nn.sigmoid(gates[:, :H])
    f = jax.nn.sigmoid(gates[:, H:2 * H])
    g = jnp.tanh(gates[:, 2 * H:3 * H])
    o = jax.nn.sigmoid(gates[:, 3 * H:])
    c1 = f * c0 + i * g
    h1 = o * jnp.tanh(c1)
    ctx = jnp.tanh(context)
    h_att = jax.nn.relu(h1 @ f32(p['w_att']) + p['b_att'])
    attn = jax.nn.softmax(jnp.einsum('bsh,bh->bs', ctx, h_att), axis=-1)
    w = jnp.einsum('bs,bsh->bh', attn, ctx)
    pred = jnp.concatenate([emb, w], axis=1) @ f32(p['w_out']) + p['b_out']
    return pred, (h1[None], c1[None])


if __name__ == "__main__":
    key = jax.random.PRNGKey(0)
    k_p, k_tok, k_h, k_c, k_ctx = jax.random.split(key, 5)

    params = pack_params(init_torch_params(k_p))

    tok = jax.random.randint(k_tok, (B,), 0, V, dtype=jnp.int32)       # input
    h0 = jax.random.normal(k_h, (1, B, H), jnp.float32) * 0.5          # hidden[0]
    c0 = jax.random.normal(k_c, (1, B, H), jnp.float32) * 0.5          # hidden[1]
    context = jax.random.normal(k_ctx, (B, S, H), jnp.float32) * 0.5   # context

    pred, (h1, c1) = decoder_forward(tok, (h0, c0), context, params)
    pred = jax.block_until_ready(pred)

    assert pred.shape == (B, V)
    assert h1.shape == (1, B, H) and c1.shape == (1, B, H)

    # correctness vs pure-JAX f32 reference (tolerance covers bf16 weight storage,
    # bf16 MXU activation casts and the approx reciprocal in softmax)
    pred_ref, (h1_ref, c1_ref) = decoder_reference(tok, (h0, c0), context, params)
    assert jnp.allclose(pred, pred_ref, atol=3e-2, rtol=3e-2), \
        f"pred max err {float(jnp.max(jnp.abs(pred - pred_ref)))}"
    assert jnp.allclose(h1, h1_ref, atol=3e-2, rtol=3e-2)
    assert jnp.allclose(c1, c1_ref, atol=3e-2, rtol=3e-2)

    print("KERNEL_OK")
</pallas_src>

<mosaic_0001>
module attributes {stable_mosaic.version = 11 : i64} {
  func.func @decoder_step_kernel(%arg0: i32, %arg1: memref<8xi32, #tpu.memory_space<smem>>, %arg2: memref<8x256xf32, #tpu.memory_space<vmem>>, %arg3: memref<8x256xf32, #tpu.memory_space<vmem>>, %arg4: memref<8x16x256xf32, #tpu.memory_space<vmem>>, %arg5: memref<512x128xf32, #tpu.memory_space<any>>, %arg6: memref<384x1024xbf16, #tpu.memory_space<vmem>>, %arg7: memref<1x1024xf32, #tpu.memory_space<vmem>>, %arg8: memref<256x256xbf16, #tpu.memory_space<vmem>>, %arg9: memref<1x256xf32, #tpu.memory_space<vmem>>, %arg10: memref<384x256xbf16, #tpu.memory_space<vmem>>, %arg11: memref<1x256xf32, #tpu.memory_space<vmem>>, %arg12: memref<8x256xf32, #tpu.memory_space<vmem>>, %arg13: memref<8x256xf32, #tpu.memory_space<vmem>>, %arg14: memref<8x256xf32, #tpu.memory_space<vmem>>, %arg15: memref<8x128xf32, #tpu.memory_space<vmem>>, %arg16: memref<8x384xf32, #tpu.memory_space<vmem>>, %arg17: memref<8x!tpu.dma_semaphore, #tpu.memory_space<semaphore_mem>>) attributes {dimension_semantics = [#tpu.dimension_semantics<arbitrary>], iteration_bounds = array<i64: 2>, scalar_prefetch = 1 : i64, scratch_operands = 3 : i64, tpu.core_type = #tpu.core_type<tc>, window_params = [{pipeline_mode = #tpu.pipeline_mode<synchronous>, transform_indices = @transform_0, window_bounds = array<i64: 8, 256>}, {pipeline_mode = #tpu.pipeline_mode<synchronous>, transform_indices = @transform_1, window_bounds = array<i64: 8, 256>}, {pipeline_mode = #tpu.pipeline_mode<synchronous>, transform_indices = @transform_2, window_bounds = array<i64: 8, 16, 256>}, {}, {pipeline_mode = #tpu.pipeline_mode<synchronous>, transform_indices = @transform_4, window_bounds = array<i64: 384, 1024>}, {pipeline_mode = #tpu.pipeline_mode<synchronous>, transform_indices = @transform_5, window_bounds = array<i64: 1, 1024>}, {pipeline_mode = #tpu.pipeline_mode<synchronous>, transform_indices = @transform_6, window_bounds = array<i64: 256, 256>}, {pipeline_mode = #tpu.pipeline_mode<synchronous>, transform_indices = @transform_7, window_bounds = array<i64: 1, 256>}, {transform_indices = @transform_8, window_bounds = array<i64: 384, 256>}, {transform_indices = @transform_9, window_bounds = array<i64: 1, 256>}, {transform_indices = @transform_10, window_bounds = array<i64: 8, 256>}, {pipeline_mode = #tpu.pipeline_mode<synchronous>, transform_indices = @transform_11, window_bounds = array<i64: 8, 256>}, {pipeline_mode = #tpu.pipeline_mode<synchronous>, transform_indices = @transform_12, window_bounds = array<i64: 8, 256>}]} {
    %c0_i32 = arith.constant 0 : i32
    %0 = arith.cmpi eq, %arg0, %c0_i32 : i32
    %1 = arith.extui %0 : i1 to i32
    %c0_i32_0 = arith.constant 0 : i32
    %2 = arith.cmpi ne, %1, %c0_i32_0 : i32
    scf.if %2 {
      %c0_8 = arith.constant 0 : index
      %11 = memref.load %arg1[%c0_8] : memref<8xi32, #tpu.memory_space<smem>>
      %c0_i32_9 = arith.constant 0 : i32
      %c0_i32_10 = arith.constant 0 : i32
      %12 = tpu.memref_slice %arg5[%11, %c0_i32_10] : memref<512x128xf32, #tpu.memory_space<any>> -> memref<1x128xf32, #tpu.memory_space<any>>
      %c0_i32_11 = arith.constant 0 : i32
      %c0_i32_12 = arith.constant 0 : i32
      %13 = tpu.memref_slice %arg15[%c0_i32_11, %c0_i32_12] : memref<8x128xf32, #tpu.memory_space<vmem>> -> memref<1x128xf32, #tpu.memory_space<vmem>>
      %14 = tpu.memref_slice %arg17[%c0_i32_9] : memref<8x!tpu.dma_semaphore, #tpu.memory_space<semaphore_mem>> -> memref<1x!tpu.dma_semaphore, #tpu.memory_space<semaphore_mem>>
      %15 = tpu.memref_squeeze %14 : memref<1x!tpu.dma_semaphore, #tpu.memory_space<semaphore_mem>> -> memref<!tpu.dma_semaphore, #tpu.memory_space<semaphore_mem>>
      tpu.enqueue_dma source(%12 : memref<1x128xf32, #tpu.memory_space<any>>) target(%13 : memref<1x128xf32, #tpu.memory_space<vmem>>) target_semaphore(%15 : memref<!tpu.dma_semaphore, #tpu.memory_space<semaphore_mem>>)
      %c1 = arith.constant 1 : index
      %16 = memref.load %arg1[%c1] : memref<8xi32, #tpu.memory_space<smem>>
      %c1_i32 = arith.constant 1 : i32
      %c0_i32_13 = arith.constant 0 : i32
      %17 = tpu.memref_slice %arg5[%16, %c0_i32_13] : memref<512x128xf32, #tpu.memory_space<any>> -> memref<1x128xf32, #tpu.memory_space<any>>
      %c1_i32_14 = arith.constant 1 : i32
      %c0_i32_15 = arith.constant 0 : i32
      %18 = tpu.memref_slice %arg15[%c1_i32_14, %c0_i32_15] : memref<8x128xf32, #tpu.memory_space<vmem>> -> memref<1x128xf32, #tpu.memory_space<vmem>>
      %19 = tpu.memref_slice %arg17[%c1_i32] : memref<8x!tpu.dma_semaphore, #tpu.memory_space<semaphore_mem>> -> memref<1x!tpu.dma_semaphore, #tpu.memory_space<semaphore_mem>>
      %20 = tpu.memref_squeeze %19 : memref<1x!tpu.dma_semaphore, #tpu.memory_space<semaphore_mem>> -> memref<!tpu.dma_semaphore, #tpu.memory_space<semaphore_mem>>
      tpu.enqueue_dma source(%17 : memref<1x128xf32, #tpu.memory_space<any>>) target(%18 : memref<1x128xf32, #tpu.memory_space<vmem>>) target_semaphore(%20 : memref<!tpu.dma_semaphore, #tpu.memory_space<semaphore_mem>>)
      %c2 = arith.constant 2 : index
      %21 = memref.load %arg1[%c2] : memref<8xi32, #tpu.memory_space<smem>>
      %c2_i32 = arith.constant 2 : i32
      %c0_i32_16 = arith.constant 0 : i32
      %22 = tpu.memref_slice %arg5[%21, %c0_i32_16] : memref<512x128xf32, #tpu.memory_space<any>> -> memref<1x128xf32, #tpu.memory_space<any>>
      %c2_i32_17 = arith.constant 2 : i32
      %c0_i32_18 = arith.constant 0 : i32
      %23 = tpu.memref_slice %arg15[%c2_i32_17, %c0_i32_18] : memref<8x128xf32, #tpu.memory_space<vmem>> -> memref<1x128xf32, #tpu.memory_space<vmem>>
      %24 = tpu.memref_slice %arg17[%c2_i32] : memref<8x!tpu.dma_semaphore, #tpu.memory_space<semaphore_mem>> -> memref<1x!tpu.dma_semaphore, #tpu.memory_space<semaphore_mem>>
      %25 = tpu.memref_squeeze %24 : memref<1x!tpu.dma_semaphore, #tpu.memory_space<semaphore_mem>> -> memref<!tpu.dma_semaphore, #tpu.memory_space<semaphore_mem>>
      tpu.enqueue_dma source(%22 : memref<1x128xf32, #tpu.memory_space<any>>) target(%23 : memref<1x128xf32, #tpu.memory_space<vmem>>) target_semaphore(%25 : memref<!tpu.dma_semaphore, #tpu.memory_space<semaphore_mem>>)
      %c3 = arith.constant 3 : index
      %26 = memref.load %arg1[%c3] : memref<8xi32, #tpu.memory_space<smem>>
      %c3_i32 = arith.constant 3 : i32
      %c0_i32_19 = arith.constant 0 : i32
      %27 = tpu.memref_slice %arg5[%26, %c0_i32_19] : memref<512x128xf32, #tpu.memory_space<any>> -> memref<1x128xf32, #tpu.memory_space<any>>
      %c3_i32_20 = arith.constant 3 : i32
      %c0_i32_21 = arith.constant 0 : i32
      %28 = tpu.memref_slice %arg15[%c3_i32_20, %c0_i32_21] : memref<8x128xf32, #tpu.memory_space<vmem>> -> memref<1x128xf32, #tpu.memory_space<vmem>>
      %29 = tpu.memref_slice %arg17[%c3_i32] : memref<8x!tpu.dma_semaphore, #tpu.memory_space<semaphore_mem>> -> memref<1x!tpu.dma_semaphore, #tpu.memory_space<semaphore_mem>>
      %30 = tpu.memref_squeeze %29 : memref<1x!tpu.dma_semaphore, #tpu.memory_space<semaphore_mem>> -> memref<!tpu.dma_semaphore, #tpu.memory_space<semaphore_mem>>
      tpu.enqueue_dma source(%27 : memref<1x128xf32, #tpu.memory_space<any>>) target(%28 : memref<1x128xf32, #tpu.memory_space<vmem>>) target_semaphore(%30 : memref<!tpu.dma_semaphore, #tpu.memory_space<semaphore_mem>>)
      %c4 = arith.constant 4 : index
      %31 = memref.load %arg1[%c4] : memref<8xi32, #tpu.memory_space<smem>>
      %c4_i32 = arith.constant 4 : i32
      %c0_i32_22 = arith.constant 0 : i32
      %32 = tpu.memref_slice %arg5[%31, %c0_i32_22] : memref<512x128xf32, #tpu.memory_space<any>> -> memref<1x128xf32, #tpu.memory_space<any>>
      %c4_i32_23 = arith.constant 4 : i32
      %c0_i32_24 = arith.constant 0 : i32
      %33 = tpu.memref_slice %arg15[%c4_i32_23, %c0_i32_24] : memref<8x128xf32, #tpu.memory_space<vmem>> -> memref<1x128xf32, #tpu.memory_space<vmem>>
      %34 = tpu.memref_slice %arg17[%c4_i32] : memref<8x!tpu.dma_semaphore, #tpu.memory_space<semaphore_mem>> -> memref<1x!tpu.dma_semaphore, #tpu.memory_space<semaphore_mem>>
      %35 = tpu.memref_squeeze %34 : memref<1x!tpu.dma_semaphore, #tpu.memory_space<semaphore_mem>> -> memref<!tpu.dma_semaphore, #tpu.memory_space<semaphore_mem>>
      tpu.enqueue_dma source(%32 : memref<1x128xf32, #tpu.memory_space<any>>) target(%33 : memref<1x128xf32, #tpu.memory_space<vmem>>) target_semaphore(%35 : memref<!tpu.dma_semaphore, #tpu.memory_space<semaphore_mem>>)
      %c5 = arith.constant 5 : index
      %36 = memref.load %arg1[%c5] : memref<8xi32, #tpu.memory_space<smem>>
      %c5_i32 = arith.constant 5 : i32
      %c0_i32_25 = arith.constant 0 : i32
      %37 = tpu.memref_slice %arg5[%36, %c0_i32_25] : memref<512x128xf32, #tpu.memory_space<any>> -> memref<1x128xf32, #tpu.memory_space<any>>
      %c5_i32_26 = arith.constant 5 : i32
      %c0_i32_27 = arith.constant 0 : i32
      %38 = tpu.memref_slice %arg15[%c5_i32_26, %c0_i32_27] : memref<8x128xf32, #tpu.memory_space<vmem>> -> memref<1x128xf32, #tpu.memory_space<vmem>>
      %39 = tpu.memref_slice %arg17[%c5_i32] : memref<8x!tpu.dma_semaphore, #tpu.memory_space<semaphore_mem>> -> memref<1x!tpu.dma_semaphore, #tpu.memory_space<semaphore_mem>>
      %40 = tpu.memref_squeeze %39 : memref<1x!tpu.dma_semaphore, #tpu.memory_space<semaphore_mem>> -> memref<!tpu.dma_semaphore, #tpu.memory_space<semaphore_mem>>
      tpu.enqueue_dma source(%37 : memref<1x128xf32, #tpu.memory_space<any>>) target(%38 : memref<1x128xf32, #tpu.memory_space<vmem>>) target_semaphore(%40 : memref<!tpu.dma_semaphore, #tpu.memory_space<semaphore_mem>>)
      %c6 = arith.constant 6 : index
      %41 = memref.load %arg1[%c6] : memref<8xi32, #tpu.memory_space<smem>>
      %c6_i32 = arith.constant 6 : i32
      %c0_i32_28 = arith.constant 0 : i32
      %42 = tpu.memref_slice %arg5[%41, %c0_i32_28] : memref<512x128xf32, #tpu.memory_space<any>> -> memref<1x128xf32, #tpu.memory_space<any>>
      %c6_i32_29 = arith.constant 6 : i32
      %c0_i32_30 = arith.constant 0 : i32
      %43 = tpu.memref_slice %arg15[%c6_i32_29, %c0_i32_30] : memref<8x128xf32, #tpu.memory_space<vmem>> -> memref<1x128xf32, #tpu.memory_space<vmem>>
      %44 = tpu.memref_slice %arg17[%c6_i32] : memref<8x!tpu.dma_semaphore, #tpu.memory_space<semaphore_mem>> -> memref<1x!tpu.dma_semaphore, #tpu.memory_space<semaphore_mem>>
      %45 = tpu.memref_squeeze %44 : memref<1x!tpu.dma_semaphore, #tpu.memory_space<semaphore_mem>> -> memref<!tpu.dma_semaphore, #tpu.memory_space<semaphore_mem>>
      tpu.enqueue_dma source(%42 : memref<1x128xf32, #tpu.memory_space<any>>) target(%43 : memref<1x128xf32, #tpu.memory_space<vmem>>) target_semaphore(%45 : memref<!tpu.dma_semaphore, #tpu.memory_space<semaphore_mem>>)
      %c7 = arith.constant 7 : index
      %46 = memref.load %arg1[%c7] : memref<8xi32, #tpu.memory_space<smem>>
      %c7_i32 = arith.constant 7 : i32
      %c0_i32_31 = arith.constant 0 : i32
      %47 = tpu.memref_slice %arg5[%46, %c0_i32_31] : memref<512x128xf32, #tpu.memory_space<any>> -> memref<1x128xf32, #tpu.memory_space<any>>
      %c7_i32_32 = arith.constant 7 : i32
      %c0_i32_33 = arith.constant 0 : i32
      %48 = tpu.memref_slice %arg15[%c7_i32_32, %c0_i32_33] : memref<8x128xf32, #tpu.memory_space<vmem>> -> memref<1x128xf32, #tpu.memory_space<vmem>>
      %49 = tpu.memref_slice %arg17[%c7_i32] : memref<8x!tpu.dma_semaphore, #tpu.memory_space<semaphore_mem>> -> memref<1x!tpu.dma_semaphore, #tpu.memory_space<semaphore_mem>>
      %50 = tpu.memref_squeeze %49 : memref<1x!tpu.dma_semaphore, #tpu.memory_space<semaphore_mem>> -> memref<!tpu.dma_semaphore, #tpu.memory_space<semaphore_mem>>
      tpu.enqueue_dma source(%47 : memref<1x128xf32, #tpu.memory_space<any>>) target(%48 : memref<1x128xf32, #tpu.memory_space<vmem>>) target_semaphore(%50 : memref<!tpu.dma_semaphore, #tpu.memory_space<semaphore_mem>>)
      %c0_i32_34 = arith.constant 0 : i32
      %c0_i32_35 = arith.constant 0 : i32
      %51 = tpu.memref_slice %arg5[%11, %c0_i32_35] : memref<512x128xf32, #tpu.memory_space<any>> -> memref<1x128xf32, #tpu.memory_space<any>>
      %c0_i32_36 = arith.constant 0 : i32
      %c0_i32_37 = arith.constant 0 : i32
      %52 = tpu.memref_slice %arg15[%c0_i32_36, %c0_i32_37] : memref<8x128xf32, #tpu.memory_space<vmem>> -> memref<1x128xf32, #tpu.memory_space<vmem>>
      %53 = tpu.memref_slice %arg17[%c0_i32_34] : memref<8x!tpu.dma_semaphore, #tpu.memory_space<semaphore_mem>> -> memref<1x!tpu.dma_semaphore, #tpu.memory_space<semaphore_mem>>
      %54 = tpu.memref_squeeze %53 : memref<1x!tpu.dma_semaphore, #tpu.memory_space<semaphore_mem>> -> memref<!tpu.dma_semaphore, #tpu.memory_space<semaphore_mem>>
      tpu.wait_dma2 semaphore(%54 : memref<!tpu.dma_semaphore, #tpu.memory_space<semaphore_mem>>) src(%51 : memref<1x128xf32, #tpu.memory_space<any>>) dst(%52 : memref<1x128xf32, #tpu.memory_space<vmem>>)
      %c1_i32_38 = arith.constant 1 : i32
      %c0_i32_39 = arith.constant 0 : i32
      %55 = tpu.memref_slice %arg5[%16, %c0_i32_39] : memref<512x128xf32, #tpu.memory_space<any>> -> memref<1x128xf32, #tpu.memory_space<any>>
      %c1_i32_40 = arith.constant 1 : i32
      %c0_i32_41 = arith.constant 0 : i32
      %56 = tpu.memref_slice %arg15[%c1_i32_40, %c0_i32_41] : memref<8x128xf32, #tpu.memory_space<vmem>> -> memref<1x128xf32, #tpu.memory_space<vmem>>
      %57 = tpu.memref_slice %arg17[%c1_i32_38] : memref<8x!tpu.dma_semaphore, #tpu.memory_space<semaphore_mem>> -> memref<1x!tpu.dma_semaphore, #tpu.memory_space<semaphore_mem>>
      %58 = tpu.memref_squeeze %57 : memref<1x!tpu.dma_semaphore, #tpu.memory_space<semaphore_mem>> -> memref<!tpu.dma_semaphore, #tpu.memory_space<semaphore_mem>>
      tpu.wait_dma2 semaphore(%58 : memref<!tpu.dma_semaphore, #tpu.memory_space<semaphore_mem>>) src(%55 : memref<1x128xf32, #tpu.memory_space<any>>) dst(%56 : memref<1x128xf32, #tpu.memory_space<vmem>>)
      %c2_i32_42 = arith.constant 2 : i32
      %c0_i32_43 = arith.constant 0 : i32
      %59 = tpu.memref_slice %arg5[%21, %c0_i32_43] : memref<512x128xf32, #tpu.memory_space<any>> -> memref<1x128xf32, #tpu.memory_space<any>>
      %c2_i32_44 = arith.constant 2 : i32
      %c0_i32_45 = arith.constant 0 : i32
      %60 = tpu.memref_slice %arg15[%c2_i32_44, %c0_i32_45] : memref<8x128xf32, #tpu.memory_space<vmem>> -> memref<1x128xf32, #tpu.memory_space<vmem>>
      %61 = tpu.memref_slice %arg17[%c2_i32_42] : memref<8x!tpu.dma_semaphore, #tpu.memory_space<semaphore_mem>> -> memref<1x!tpu.dma_semaphore, #tpu.memory_space<semaphore_mem>>
      %62 = tpu.memref_squeeze %61 : memref<1x!tpu.dma_semaphore, #tpu.memory_space<semaphore_mem>> -> memref<!tpu.dma_semaphore, #tpu.memory_space<semaphore_mem>>
      tpu.wait_dma2 semaphore(%62 : memref<!tpu.dma_semaphore, #tpu.memory_space<semaphore_mem>>) src(%59 : memref<1x128xf32, #tpu.memory_space<any>>) dst(%60 : memref<1x128xf32, #tpu.memory_space<vmem>>)
      %c3_i32_46 = arith.constant 3 : i32
      %c0_i32_47 = arith.constant 0 : i32
      %63 = tpu.memref_slice %arg5[%26, %c0_i32_47] : memref<512x128xf32, #tpu.memory_space<any>> -> memref<1x128xf32, #tpu.memory_space<any>>
      %c3_i32_48 = arith.constant 3 : i32
      %c0_i32_49 = arith.constant 0 : i32
      %64 = tpu.memref_slice %arg15[%c3_i32_48, %c0_i32_49] : memref<8x128xf32, #tpu.memory_space<vmem>> -> memref<1x128xf32, #tpu.memory_space<vmem>>
      %65 = tpu.memref_slice %arg17[%c3_i32_46] : memref<8x!tpu.dma_semaphore, #tpu.memory_space<semaphore_mem>> -> memref<1x!tpu.dma_semaphore, #tpu.memory_space<semaphore_mem>>
      %66 = tpu.memref_squeeze %65 : memref<1x!tpu.dma_semaphore, #tpu.memory_space<semaphore_mem>> -> memref<!tpu.dma_semaphore, #tpu.memory_space<semaphore_mem>>
      tpu.wait_dma2 semaphore(%66 : memref<!tpu.dma_semaphore, #tpu.memory_space<semaphore_mem>>) src(%63 : memref<1x128xf32, #tpu.memory_space<any>>) dst(%64 : memref<1x128xf32, #tpu.memory_space<vmem>>)
      %c4_i32_50 = arith.constant 4 : i32
      %c0_i32_51 = arith.constant 0 : i32
      %67 = tpu.memref_slice %arg5[%31, %c0_i32_51] : memref<512x128xf32, #tpu.memory_space<any>> -> memref<1x128xf32, #tpu.memory_space<any>>
      %c4_i32_52 = arith.constant 4 : i32
      %c0_i32_53 = arith.constant 0 : i32
      %68 = tpu.memref_slice %arg15[%c4_i32_52, %c0_i32_53] : memref<8x128xf32, #tpu.memory_space<vmem>> -> memref<1x128xf32, #tpu.memory_space<vmem>>
      %69 = tpu.memref_slice %arg17[%c4_i32_50] : memref<8x!tpu.dma_semaphore, #tpu.memory_space<semaphore_mem>> -> memref<1x!tpu.dma_semaphore, #tpu.memory_space<semaphore_mem>>
      %70 = tpu.memref_squeeze %69 : memref<1x!tpu.dma_semaphore, #tpu.memory_space<semaphore_mem>> -> memref<!tpu.dma_semaphore, #tpu.memory_space<semaphore_mem>>
      tpu.wait_dma2 semaphore(%70 : memref<!tpu.dma_semaphore, #tpu.memory_space<semaphore_mem>>) src(%67 : memref<1x128xf32, #tpu.memory_space<any>>) dst(%68 : memref<1x128xf32, #tpu.memory_space<vmem>>)
      %c5_i32_54 = arith.constant 5 : i32
      %c0_i32_55 = arith.constant 0 : i32
      %71 = tpu.memref_slice %arg5[%36, %c0_i32_55] : memref<512x128xf32, #tpu.memory_space<any>> -> memref<1x128xf32, #tpu.memory_space<any>>
      %c5_i32_56 = arith.constant 5 : i32
      %c0_i32_57 = arith.constant 0 : i32
      %72 = tpu.memref_slice %arg15[%c5_i32_56, %c0_i32_57] : memref<8x128xf32, #tpu.memory_space<vmem>> -> memref<1x128xf32, #tpu.memory_space<vmem>>
      %73 = tpu.memref_slice %arg17[%c5_i32_54] : memref<8x!tpu.dma_semaphore, #tpu.memory_space<semaphore_mem>> -> memref<1x!tpu.dma_semaphore, #tpu.memory_space<semaphore_mem>>
      %74 = tpu.memref_squeeze %73 : memref<1x!tpu.dma_semaphore, #tpu.memory_space<semaphore_mem>> -> memref<!tpu.dma_semaphore, #tpu.memory_space<semaphore_mem>>
      tpu.wait_dma2 semaphore(%74 : memref<!tpu.dma_semaphore, #tpu.memory_space<semaphore_mem>>) src(%71 : memref<1x128xf32, #tpu.memory_space<any>>) dst(%72 : memref<1x128xf32, #tpu.memory_space<vmem>>)
      %c6_i32_58 = arith.constant 6 : i32
      %c0_i32_59 = arith.constant 0 : i32
      %75 = tpu.memref_slice %arg5[%41, %c0_i32_59] : memref<512x128xf32, #tpu.memory_space<any>> -> memref<1x128xf32, #tpu.memory_space<any>>
      %c6_i32_60 = arith.constant 6 : i32
      %c0_i32_61 = arith.constant 0 : i32
      %76 = tpu.memref_slice %arg15[%c6_i32_60, %c0_i32_61] : memref<8x128xf32, #tpu.memory_space<vmem>> -> memref<1x128xf32, #tpu.memory_space<vmem>>
      %77 = tpu.memref_slice %arg17[%c6_i32_58] : memref<8x!tpu.dma_semaphore, #tpu.memory_space<semaphore_mem>> -> memref<1x!tpu.dma_semaphore, #tpu.memory_space<semaphore_mem>>
      %78 = tpu.memref_squeeze %77 : memref<1x!tpu.dma_semaphore, #tpu.memory_space<semaphore_mem>> -> memref<!tpu.dma_semaphore, #tpu.memory_space<semaphore_mem>>
      tpu.wait_dma2 semaphore(%78 : memref<!tpu.dma_semaphore, #tpu.memory_space<semaphore_mem>>) src(%75 : memref<1x128xf32, #tpu.memory_space<any>>) dst(%76 : memref<1x128xf32, #tpu.memory_space<vmem>>)
      %c7_i32_62 = arith.constant 7 : i32
      %c0_i32_63 = arith.constant 0 : i32
      %79 = tpu.memref_slice %arg5[%46, %c0_i32_63] : memref<512x128xf32, #tpu.memory_space<any>> -> memref<1x128xf32, #tpu.memory_space<any>>
      %c7_i32_64 = arith.constant 7 : i32
      %c0_i32_65 = arith.constant 0 : i32
      %80 = tpu.memref_slice %arg15[%c7_i32_64, %c0_i32_65] : memref<8x128xf32, #tpu.memory_space<vmem>> -> memref<1x128xf32, #tpu.memory_space<vmem>>
      %81 = tpu.memref_slice %arg17[%c7_i32_62] : memref<8x!tpu.dma_semaphore, #tpu.memory_space<semaphore_mem>> -> memref<1x!tpu.dma_semaphore, #tpu.memory_space<semaphore_mem>>
      %82 = tpu.memref_squeeze %81 : memref<1x!tpu.dma_semaphore, #tpu.memory_space<semaphore_mem>> -> memref<!tpu.dma_semaphore, #tpu.memory_space<semaphore_mem>>
      tpu.wait_dma2 semaphore(%82 : memref<!tpu.dma_semaphore, #tpu.memory_space<semaphore_mem>>) src(%79 : memref<1x128xf32, #tpu.memory_space<any>>) dst(%80 : memref<1x128xf32, #tpu.memory_space<vmem>>)
      %c0_66 = arith.constant 0 : index
      %c0_67 = arith.constant 0 : index
      %83 = vector.load %arg15[%c0_66, %c0_67] : memref<8x128xf32, #tpu.memory_space<vmem>>, vector<8x128xf32>
      %c0_68 = arith.constant 0 : index
      %c0_69 = arith.constant 0 : index
      %84 = vector.load %arg2[%c0_68, %c0_69] : memref<8x256xf32, #tpu.memory_space<vmem>>, vector<8x256xf32>
      %c0_70 = arith.constant 0 : index
      %c0_71 = arith.constant 0 : index
      %85 = vector.load %arg3[%c0_70, %c0_71] : memref<8x256xf32, #tpu.memory_space<vmem>>, vector<8x256xf32>
      %86 = tpu.concatenate %83, %84 in 1 : vector<8x128xf32>, vector<8x256xf32> -> vector<8x384xf32>
      %87 = arith.truncf %86 : vector<8x384xf32> to vector<8x384xbf16>
      %c0_72 = arith.constant 0 : index
      %c0_73 = arith.constant 0 : index
      %88 = vector.load %arg6[%c0_72, %c0_73] : memref<384x1024xbf16, #tpu.memory_space<vmem>>, vector<384x1024xbf16>
      %cst_74 = arith.constant dense<0.000000e+00> : vector<8x1024xf32>
      %89 = tpu.matmul %87, %88, %cst_74 {dimension_numbers = #tpu.dot_dimension_numbers<[1], [0], [0], [1], [0, 0, 1, 1], [], []>} : vector<8x384xbf16>, vector<384x1024xbf16>, vector<8x1024xf32> -> vector<8x1024xf32>
      %c0_75 = arith.constant 0 : index
      %c0_76 = arith.constant 0 : index
      %90 = vector.load %arg7[%c0_75, %c0_76] : memref<1x1024xf32, #tpu.memory_space<vmem>>, vector<1x1024xf32>
      %91 = vector.broadcast %90 : vector<1x1024xf32> to vector<8x1024xf32>
      %92 = arith.addf %89, %91 : vector<8x1024xf32>
      %93 = vector.extract_strided_slice %92 {offsets = [0, 0], sizes = [8, 256], strides = [1, 1]} : vector<8x1024xf32> to vector<8x256xf32>
      %94 = arith.negf %93 : vector<8x256xf32>
      %95 = math.exp %94 : vector<8x256xf32>
      %cst_77 = arith.constant 1.000000e+00 : f32
      %96 = vector.broadcast %cst_77 : f32 to vector<8x256xf32>
      %97 = arith.addf %96, %95 : vector<8x256xf32>
      %98 = arith.divf %96, %97 : vector<8x256xf32>
      %99 = vector.extract_strided_slice %92 {offsets = [0, 256], sizes = [8, 256], strides = [1, 1]} : vector<8x1024xf32> to vector<8x256xf32>
      %100 = arith.negf %99 : vector<8x256xf32>
      %101 = math.exp %100 : vector<8x256xf32>
      %cst_78 = arith.constant 1.000000e+00 : f32
      %102 = vector.broadcast %cst_78 : f32 to vector<8x256xf32>
      %103 = arith.addf %102, %101 : vector<8x256xf32>
      %104 = arith.divf %102, %103 : vector<8x256xf32>
      %105 = vector.extract_strided_slice %92 {offsets = [0, 512], sizes = [8, 256], strides = [1, 1]} : vector<8x1024xf32> to vector<8x256xf32>
      %106 = math.tanh %105 : vector<8x256xf32>
      %107 = vector.extract_strided_slice %92 {offsets = [0, 768], sizes = [8, 256], strides = [1, 1]} : vector<8x1024xf32> to vector<8x256xf32>
      %108 = arith.negf %107 : vector<8x256xf32>
      %109 = math.exp %108 : vector<8x256xf32>
      %cst_79 = arith.constant 1.000000e+00 : f32
      %110 = vector.broadcast %cst_79 : f32 to vector<8x256xf32>
      %111 = arith.addf %110, %109 : vector<8x256xf32>
      %112 = arith.divf %110, %111 : vector<8x256xf32>
      %113 = arith.mulf %104, %85 : vector<8x256xf32>
      %114 = arith.mulf %98, %106 : vector<8x256xf32>
      %115 = arith.addf %113, %114 : vector<8x256xf32>
      %116 = math.tanh %115 : vector<8x256xf32>
      %117 = arith.mulf %112, %116 : vector<8x256xf32>
      %c0_80 = arith.constant 0 : index
      %c0_81 = arith.constant 0 : index
      %118 = vector.load %arg13[%c0_80, %c0_81] : memref<8x256xf32, #tpu.memory_space<vmem>>, vector<8x256xf32>
      tpu.vector_store %arg13[%c0_80, %c0_81], %117 {strides = array<i32>} : memref<8x256xf32, #tpu.memory_space<vmem>>, vector<8x256xf32>,
      %c0_82 = arith.constant 0 : index
      %c0_83 = arith.constant 0 : index
      %119 = vector.load %arg14[%c0_82, %c0_83] : memref<8x256xf32, #tpu.memory_space<vmem>>, vector<8x256xf32>
      tpu.vector_store %arg14[%c0_82, %c0_83], %115 {strides = array<i32>} : memref<8x256xf32, #tpu.memory_space<vmem>>, vector<8x256xf32>,
      %c0_84 = arith.constant 0 : index
      %c0_85 = arith.constant 0 : index
      %c0_86 = arith.constant 0 : index
      %120 = vector.load %arg4[%c0_84, %c0_85, %c0_86] : memref<8x16x256xf32, #tpu.memory_space<vmem>>, vector<8x16x256xf32>
      %121 = arith.truncf %117 : vector<8x256xf32> to vector<8x256xbf16>
      %c0_87 = arith.constant 0 : index
      %c0_88 = arith.constant 0 : index
      %122 = vector.load %arg8[%c0_87, %c0_88] : memref<256x256xbf16, #tpu.memory_space<vmem>>, vector<256x256xbf16>
      %cst_89 = arith.constant dense<0.000000e+00> : vector<8x256xf32>
      %123 = tpu.matmul %121, %122, %cst_89 {dimension_numbers = #tpu.dot_dimension_numbers<[1], [0], [0], [1], [0, 0, 1, 1], [], []>} : vector<8x256xbf16>, vector<256x256xbf16>, vector<8x256xf32> -> vector<8x256xf32>
      %c0_90 = arith.constant 0 : index
      %c0_91 = arith.constant 0 : index
      %124 = vector.load %arg9[%c0_90, %c0_91] : memref<1x256xf32, #tpu.memory_space<vmem>>, vector<1x256xf32>
      %125 = vector.broadcast %124 : vector<1x256xf32> to vector<8x256xf32>
      %126 = arith.addf %123, %125 : vector<8x256xf32>
      %cst_92 = arith.constant 0.000000e+00 : f32
      %127 = vector.broadcast %cst_92 : f32 to vector<8x256xf32>
      %128 = arith.maximumf %126, %127 : vector<8x256xf32>
      %129 = vector.shape_cast %128 : vector<8x256xf32> to vector<8x1x256xf32>
      %130 = vector.broadcast %129 : vector<8x1x256xf32> to vector<8x16x256xf32>
      %131 = arith.mulf %130, %120 : vector<8x16x256xf32>
      %cst_93 = arith.constant dense<0.000000e+00> : vector<8x16xf32>
      %132 = vector.multi_reduction <add>, %131, %cst_93 [2] : vector<8x16x256xf32> to vector<8x16xf32>
      %cst_94 = arith.constant dense<0xFF800000> : vector<8xf32>
      %133 = vector.multi_reduction <maximumf>, %132, %cst_94 [1] : vector<8x16xf32> to vector<8xf32>
      %134 = vector.shape_cast %133 : vector<8xf32> to vector<8x1xf32>
      %135 = vector.broadcast %134 : vector<8x1xf32> to vector<8x16xf32>
      %136 = arith.subf %132, %135 : vector<8x16xf32>
      %137 = math.exp %136 : vector<8x16xf32>
      %cst_95 = arith.constant dense<0.000000e+00> : vector<8xf32>
      %138 = vector.multi_reduction <add>, %137, %cst_95 [1] : vector<8x16xf32> to vector<8xf32>
      %139 = vector.shape_cast %138 : vector<8xf32> to vector<8x1xf32>
      %140 = tpu.reciprocal %139 {approx = true} : vector<8x1xf32> -> vector<8x1xf32>
      %141 = vector.broadcast %140 : vector<8x1xf32> to vector<8x16xf32>
      %142 = arith.mulf %137, %141 : vector<8x16xf32>
      %143 = vector.shape_cast %142 : vector<8x16xf32> to vector<8x16x1xf32>
      %144 = vector.broadcast %143 : vector<8x16x1xf32> to vector<8x16x256xf32>
      %145 = arith.mulf %144, %120 : vector<8x16x256xf32>
      %cst_96 = arith.constant dense<0.000000e+00> : vector<8x256xf32>
      %146 = vector.multi_reduction <add>, %145, %cst_96 [1] : vector<8x16x256xf32> to vector<8x256xf32>
      %147 = tpu.concatenate %83, %146 in 1 : vector<8x128xf32>, vector<8x256xf32> -> vector<8x384xf32>
      %c0_97 = arith.constant 0 : index
      %c0_98 = arith.constant 0 : index
      %148 = vector.load %arg16[%c0_97, %c0_98] : memref<8x384xf32, #tpu.memory_space<vmem>>, vector<8x384xf32>
      tpu.vector_store %arg16[%c0_97, %c0_98], %147 {strides = array<i32>} : memref<8x384xf32, #tpu.memory_space<vmem>>, vector<8x384xf32>,
    } else {
    }
    %c0 = arith.constant 0 : index
    %c0_1 = arith.constant 0 : index
    %3 = vector.load %arg16[%c0, %c0_1] : memref<8x384xf32, #tpu.memory_space<vmem>>, vector<8x384xf32>
    %4 = arith.truncf %3 : vector<8x384xf32> to vector<8x384xbf16>
    %c0_2 = arith.constant 0 : index
    %c0_3 = arith.constant 0 : index
    %5 = vector.load %arg10[%c0_2, %c0_3] : memref<384x256xbf16, #tpu.memory_space<vmem>>, vector<384x256xbf16>
    %cst = arith.constant dense<0.000000e+00> : vector<8x256xf32>
    %6 = tpu.matmul %4, %5, %cst {dimension_numbers = #tpu.dot_dimension_numbers<[1], [0], [0], [1], [0, 0, 1, 1], [], []>} : vector<8x384xbf16>, vector<384x256xbf16>, vector<8x256xf32> -> vector<8x256xf32>
    %c0_4 = arith.constant 0 : index
    %c0_5 = arith.constant 0 : index
    %7 = vector.load %arg11[%c0_4, %c0_5] : memref<1x256xf32, #tpu.memory_space<vmem>>, vector<1x256xf32>
    %8 = vector.broadcast %7 : vector<1x256xf32> to vector<8x256xf32>
    %9 = arith.addf %6, %8 : vector<8x256xf32>
    %c0_6 = arith.constant 0 : index
    %c0_7 = arith.constant 0 : index
    %10 = vector.load %arg12[%c0_6, %c0_7] : memref<8x256xf32, #tpu.memory_space<vmem>>, vector<8x256xf32>
    tpu.vector_store %arg12[%c0_6, %c0_7], %9 {strides = array<i32>} : memref<8x256xf32, #tpu.memory_space<vmem>>, vector<8x256xf32>,
    return
  }
  func.func @transform_0(%arg0: i32, %arg1: memref<8xi32, #tpu.memory_space<smem>>) -> (i32, i32) {
    %c0_i32 = arith.constant 0 : i32
    %c0_i32_0 = arith.constant 0 : i32
    %c0_i32_1 = arith.constant 0 : i32
    return %c0_i32, %c0_i32_0 : i32, i32
  }
  func.func @transform_1(%arg0: i32, %arg1: memref<8xi32, #tpu.memory_space<smem>>) -> (i32, i32) {
    %c0_i32 = arith.constant 0 : i32
    %c0_i32_0 = arith.constant 0 : i32
    %c0_i32_1 = arith.constant 0 : i32
    return %c0_i32, %c0_i32_0 : i32, i32
  }
  func.func @transform_2(%arg0: i32, %arg1: memref<8xi32, #tpu.memory_space<smem>>) -> (i32, i32, i32) {
    %c0_i32 = arith.constant 0 : i32
    %c0_i32_0 = arith.constant 0 : i32
    %c0_i32_1 = arith.constant 0 : i32
    %c0_i32_2 = arith.constant 0 : i32
    return %c0_i32, %c0_i32_0, %c0_i32_1 : i32, i32, i32
  }
  func.func @transform_4(%arg0: i32, %arg1: memref<8xi32, #tpu.memory_space<smem>>) -> (i32, i32) {
    %c0_i32 = arith.constant 0 : i32
    %c0_i32_0 = arith.constant 0 : i32
    %c0_i32_1 = arith.constant 0 : i32
    return %c0_i32, %c0_i32_0 : i32, i32
  }
  func.func @transform_5(%arg0: i32, %arg1: memref<8xi32, #tpu.memory_space<smem>>) -> (i32, i32) {
    %c0_i32 = arith.constant 0 : i32
    %c0_i32_0 = arith.constant 0 : i32
    %c0_i32_1 = arith.constant 0 : i32
    return %c0_i32, %c0_i32_0 : i32, i32
  }
  func.func @transform_6(%arg0: i32, %arg1: memref<8xi32, #tpu.memory_space<smem>>) -> (i32, i32) {
    %c0_i32 = arith.constant 0 : i32
    %c0_i32_0 = arith.constant 0 : i32
    %c0_i32_1 = arith.constant 0 : i32
    return %c0_i32, %c0_i32_0 : i32, i32
  }
  func.func @transform_7(%arg0: i32, %arg1: memref<8xi32, #tpu.memory_space<smem>>) -> (i32, i32) {
    %c0_i32 = arith.constant 0 : i32
    %c0_i32_0 = arith.constant 0 : i32
    %c0_i32_1 = arith.constant 0 : i32
    return %c0_i32, %c0_i32_0 : i32, i32
  }
  func.func @transform_8(%arg0: i32, %arg1: memref<8xi32, #tpu.memory_space<smem>>) -> (i32, i32) {
    %c0_i32 = arith.constant 0 : i32
    %c0_i32_0 = arith.constant 0 : i32
    return %c0_i32, %arg0 : i32, i32
  }
  func.func @transform_9(%arg0: i32, %arg1: memref<8xi32, #tpu.memory_space<smem>>) -> (i32, i32) {
    %c0_i32 = arith.constant 0 : i32
    %c0_i32_0 = arith.constant 0 : i32
    return %c0_i32, %arg0 : i32, i32
  }
  func.func @transform_10(%arg0: i32, %arg1: memref<8xi32, #tpu.memory_space<smem>>) -> (i32, i32) {
    %c0_i32 = arith.constant 0 : i32
    %c0_i32_0 = arith.constant 0 : i32
    return %c0_i32, %arg0 : i32, i32
  }
  func.func @transform_11(%arg0: i32, %arg1: memref<8xi32, #tpu.memory_space<smem>>) -> (i32, i32) {
    %c0_i32 = arith.constant 0 : i32
    %c0_i32_0 = arith.constant 0 : i32
    %c0_i32_1 = arith.constant 0 : i32
    return %c0_i32, %c0_i32_0 : i32, i32
  }
  func.func @transform_12(%arg0: i32, %arg1: memref<8xi32, #tpu.memory_space<smem>>) -> (i32, i32) {
    %c0_i32 = arith.constant 0 : i32
    %c0_i32_0 = arith.constant 0 : i32
    %c0_i32_1 = arith.constant 0 : i32
    return %c0_i32, %c0_i32_0 : i32, i32
  }
}

</mosaic_0001>

<llo_original>
// kernel: decoder_forward.1
$region0: #{decoder_forward.1}
  #allocation0 [shape = 'u32[]', space=smem, size = 0x4, offset = 0x4, fixed_abs, tag = 'smem constant byte address 0x4 - core index']
  #allocation1 [shape = 'u32[144,128]{1,0:T(1,128)}', space=vmem, size = 0x12000, scoped, tag = 'internal scratch']
  #allocation2 [shape = 'f32[8,128]{1,0:T(8,128)}', space=vmem, size = 0x1000, scoped, tag = 'scratch operand']
  #allocation3 [shape = 'f32[8,384]{1,0:T(8,128)}', space=vmem, size = 0x3000, scoped, tag = 'scratch operand']
  #allocation4 [shape = 's32[8]{0}', space=sflag, size = 0x20, scoped, tag = 'scratch operand']
  #allocation5 [shape = 's32[1]{0}', space=sflag, size = 0x4, scoped, tag = 'scoped memory for decoder_forward.1']
  #allocation6 [shape = 'u8[512]{0}', space=smem, size = 0x200, scoped, tag = 'prefetched SMEM operand 0']
  #allocation20 [shape = 's32[]', space=sflag, size = 0x4, offset = 0, fixed_abs, tag = 'sflag constant byte address 0x0 - dummy sync flag']
  #allocation21 [shape = 's32[]', space=sflag, size = 0x4, offset = 0, fixed_abs, tag = 'sflag constant byte address 0x0 - dummy sync flag']
  #allocation22 [shape = 's32[]', space=sflag, size = 0x4, offset = 0, fixed_abs, tag = 'sflag constant byte address 0x0 - dummy sync flag']
  #allocation23 [shape = 's32[]', space=sflag, size = 0x4, offset = 0, fixed_abs, tag = 'sflag constant byte address 0x0 - dummy sync flag']
  #allocation24 [shape = 's32[]', space=sflag, size = 0x4, offset = 0, fixed_abs, tag = 'sflag constant byte address 0x0 - dummy sync flag']
  #allocation25 [shape = 's32[]', space=sflag, size = 0x4, offset = 0, fixed_abs, tag = 'sflag constant byte address 0x0 - dummy sync flag']
  #allocation26 [shape = 's32[]', space=sflag, size = 0x4, offset = 0, fixed_abs, tag = 'sflag constant byte address 0x0 - dummy sync flag']
  #allocation27 [shape = 's32[]', space=sflag, size = 0x4, offset = 0, fixed_abs, tag = 'sflag constant byte address 0x0 - dummy sync flag']
  %s0 = inlined_call_operand.hbm [shape: s32[8], index: 0, kind: input, shape index: {}]
  %s1 = inlined_call_operand.vmem [shape: f32[8,256], index: 1, kind: input, shape index: {}]
  %s2 = inlined_call_operand.vmem [shape: f32[8,256], index: 2, kind: input, shape index: {}]
  %s3 = inlined_call_operand.vmem [shape: f32[8,16,256], index: 3, kind: input, shape index: {}]
  %s4 = inlined_call_operand.vmem [shape: f32[512,128], index: 4, kind: input, shape index: {}]
  %s5 = inlined_call_operand.hbm [shape: bf16[384,1024], index: 5, kind: input, shape index: {}]
  %s6 = inlined_call_operand.hbm [shape: f32[1,1024], index: 6, kind: input, shape index: {}]
  %s7 = inlined_call_operand.hbm [shape: bf16[256,256], index: 7, kind: input, shape index: {}]
  %s8 = inlined_call_operand.vmem [shape: f32[1,256], index: 8, kind: input, shape index: {}]
  %s9 = inlined_call_operand.hbm [shape: bf16[384,512], index: 9, kind: input, shape index: {}]
  %s10 = inlined_call_operand.hbm [shape: f32[1,512], index: 10, kind: input, shape index: {}]
  %s11 = inlined_call_operand.hbm [shape: f32[8,512], index: 11, kind: output, shape index: {0}]
  %s12 = inlined_call_operand.hbm [shape: f32[8,256], index: 12, kind: output, shape index: {1}]
  %s13 = inlined_call_operand.hbm [shape: f32[8,256], index: 13, kind: output, shape index: {2}]
  %14 = xla_tuple %s11, %s12, %s13
  %s15 = sld [smem:[#allocation0]]
  $region349: #{decoder_forward.1} parent=0
    _
  %s17 = ssub.s32 1, %s15
  %s18 = scalar_select 0, %s17, %s15
  %20 = dma.hbm_to_smem %s0, 16, [#allocation6], [#allocation5]
  %21 = dma.done [#allocation5], 16
  %22 = sfence
  $region1: #{decoder_forward.1} parent=0
    #allocation7 [shape = 'u8[786432]{0}', space=vmem, size = 0xc0000, scoped, tag = 'input window, operand 5, single buffered']
    #allocation8 [shape = 's32[2]{0}', space=sflag, size = 0x8, scoped, tag = 'scoped memory for decoder_forward.1']
    #allocation9 [shape = 's32[2]{0}', space=sflag, size = 0x8, scoped, tag = 'scoped memory for decoder_forward.1']
    #allocation10 [shape = 'u8[4096]{0}', space=vmem, size = 0x1000, scoped, tag = 'input window, operand 6, single buffered']
    #allocation11 [shape = 's32[1]{0}', space=sflag, size = 0x4, scoped, tag = 'scoped memory for decoder_forward.1']
    #allocation12 [shape = 'u8[131072]{0}', space=vmem, size = 0x20000, scoped, tag = 'input window, operand 7, single buffered']
    #allocation13 [shape = 'u8[393216]{0}', space=vmem, size = 0x60000, scoped, tag = 'input window, operand 9']
    #allocation14 [shape = 's32[2]{0}', space=sflag, size = 0x8, scoped, tag = 'scoped memory for decoder_forward.1']
    #allocation15 [shape = 'u8[2048]{0}', space=vmem, size = 0x800, scoped, tag = 'input window, operand 10']
    #allocation16 [shape = 'u8[16384]{0}', space=vmem, size = 0x4000, scoped, tag = 'output window, operand 0']
    #allocation17 [shape = 'u8[8192]{0}', space=vmem, size = 0x2000, scoped, tag = 'output window, operand 1, single buffered']
    #allocation18 [shape = 's32[1]{0}', space=sflag, size = 0x4, scoped, tag = 'scoped memory for decoder_forward.1']
    #allocation19 [shape = 'u8[8192]{0}', space=vmem, size = 0x2000, scoped, tag = 'output window, operand 2, single buffered']
    %23 = vsyncpa [#allocation8], 0
    %24 = vsyncpa [#allocation11], 0
    %25 = vsyncpa [#allocation14], 0
    %s26 = scalar_lea.sflag [#allocation14], 1
    %27 = vsyncpa %s26, 0
    %28 = vsyncpa [#allocation9], 0
    %s29 = scalar_lea.sflag [#allocation9], 1
    %30 = vsyncpa %s29, 0
    %31 = vsyncpa [#allocation18], 0
    loop: start=0, step=1, limit=4
    $region2: #{decoder_forward.1} parent=1 // loop_pre_header
      _
    $region3: #{decoder_forward.1} parent=1 // loop_header
      %s33 = sphi 0, %s37
      %p34 = scmp.ge.s32.totalorder %s33, 4
      %s41 = sphi 0, %s41
      %s43 = sphi 0, %s41
      %s44 = sphi 0, %s43
      %s58 = sphi 0, %s44
      %s62 = sphi 0, %s62
      %s64 = sphi 0, %s62
      %s65 = sphi 0, %s64
      %s79 = sphi 0, %s65
      %s83 = sphi 0, %s83
      %s85 = sphi 0, %s83
      %s86 = sphi 0, %s85
      %s100 = sphi 0, %s86
      %s104 = sphi 0, %s104
      %s106 = sphi 0, %s104
      %s107 = sphi 0, %s106
      %s121 = sphi 0, %s107
      %s125 = sphi 0, %s125
      %s127 = sphi 0, %s125
      %s128 = sphi 0, %s127
      %s142 = sphi 0, %s128
      %s146 = sphi 0, %s146
      %s148 = sphi 0, %s146
      %s149 = sphi 0, %s148
      %s163 = sphi 0, %s149
      %s167 = sphi 0, %s167
      %s169 = sphi 0, %s167
      %s170 = sphi 0, %s169
      %s184 = sphi 0, %s170
      %s190 = sphi 0, %s192
      %s193 = sphi 0, %s190
      %s194 = sphi 0, %s193
      %s210 = sphi 0, %s194
      %s216 = sphi 0, %s218
      %s219 = sphi 0, %s216
      %s220 = sphi 0, %s219
      %s236 = sphi 0, %s220
      %s242 = sphi 0, %s244
      %s245 = sphi 0, %s242
      %s246 = sphi 0, %s245
      %s262 = sphi 0, %s246
      %s266 = sphi 0, %s266
      %s268 = sphi 0, %s266
      %s269 = sphi 0, %s268
      %s283 = sphi 0, %s269
      %s287 = sphi 0, %s287
      %s289 = sphi 0, %s287
      %s290 = sphi 0, %s289
      %s304 = sphi 0, %s290
    $region4: #{decoder_forward.1} parent=1 // loop_header_branch
      %36 = sbr.rel (%p34) target = $region8
    $region5: #{decoder_forward.1} parent=1 // loop_body
      %s38 = ssub.s32 %s33, 1
      %s39 = ssub.s32 %s33, 2
      %s40 = sadd.s32 %s33, 1
      %s42 = sadd.s32 %s41, 1
      %p45 = scmp.eq.s32.totalorder %s33, 1
      %p46 = scmp.ne.s32.totalorder %s41, %s43
      %p47 = scmp.eq.s32.totalorder %s33, 0
      %p48 = por %p46, %p47
      %p49 = scmp.ne.s32.totalorder %s41, %s43
      %p50 = scmp.eq.s32.totalorder %s38, 1
      %p51 = por %p49, %p50
      %p52 = scmp.ne.s32.totalorder %s43, %s44
      %p53 = scmp.eq.s32.totalorder %s38, 0
      %p54 = por %p52, %p53
      %p55 = scmp.ne.s32.totalorder %s43, %s44
      %p56 = scmp.eq.s32.totalorder %s39, 1
      %p57 = por %p55, %p56
      %p59 = scmp.ne.s32.totalorder %s44, %s58
      %p60 = scmp.eq.s32.totalorder %s39, 0
      %p61 = por %p59, %p60
      %s63 = sadd.s32 %s62, 1
      %p66 = scmp.eq.s32.totalorder %s33, 1
      %p67 = scmp.ne.s32.totalorder %s62, %s64
      %p68 = scmp.eq.s32.totalorder %s33, 0
      %p69 = por %p67, %p68
      %p70 = scmp.ne.s32.totalorder %s62, %s64
      %p71 = scmp.eq.s32.totalorder %s38, 1
      %p72 = por %p70, %p71
      %p73 = scmp.ne.s32.totalorder %s64, %s65
      %p74 = scmp.eq.s32.totalorder %s38, 0
      %p75 = por %p73, %p74
      %p76 = scmp.ne.s32.totalorder %s64, %s65
      %p77 = scmp.eq.s32.totalorder %s39, 1
      %p78 = por %p76, %p77
      %p80 = scmp.ne.s32.totalorder %s65, %s79
      %p81 = scmp.eq.s32.totalorder %s39, 0
      %p82 = por %p80, %p81
      %s84 = sadd.s32 %s83, 1
      %p87 = scmp.eq.s32.totalorder %s33, 1
      %p88 = scmp.ne.s32.totalorder %s83, %s85
      %p89 = scmp.eq.s32.totalorder %s33, 0
      %p90 = por %p88, %p89
      %p91 = scmp.ne.s32.totalorder %s83, %s85
      %p92 = scmp.eq.s32.totalorder %s38, 1
      %p93 = por %p91, %p92
      %p94 = scmp.ne.s32.totalorder %s85, %s86
      %p95 = scmp.eq.s32.totalorder %s38, 0
      %p96 = por %p94, %p95
      %p97 = scmp.ne.s32.totalorder %s85, %s86
      %p98 = scmp.eq.s32.totalorder %s39, 1
      %p99 = por %p97, %p98
      %p101 = scmp.ne.s32.totalorder %s86, %s100
      %p102 = scmp.eq.s32.totalorder %s39, 0
      %p103 = por %p101, %p102
      %s105 = sadd.s32 %s104, 1
      %p108 = scmp.eq.s32.totalorder %s33, 1
      %p109 = scmp.ne.s32.totalorder %s104, %s106
      %p110 = scmp.eq.s32.totalorder %s33, 0
      %p111 = por %p109, %p110
      %p112 = scmp.ne.s32.totalorder %s104, %s106
      %p113 = scmp.eq.s32.totalorder %s38, 1
      %p114 = por %p112, %p113
      %p115 = scmp.ne.s32.totalorder %s106, %s107
      %p116 = scmp.eq.s32.totalorder %s38, 0
      %p117 = por %p115, %p116
      %p118 = scmp.ne.s32.totalorder %s106, %s107
      %p119 = scmp.eq.s32.totalorder %s39, 1
      %p120 = por %p118, %p119
      %p122 = scmp.ne.s32.totalorder %s107, %s121
      %p123 = scmp.eq.s32.totalorder %s39, 0
      %p124 = por %p122, %p123
      %s126 = sadd.s32 %s125, 1
      %p129 = scmp.eq.s32.totalorder %s33, 1
      %p130 = scmp.ne.s32.totalorder %s125, %s127
      %p131 = scmp.eq.s32.totalorder %s33, 0
      %p132 = por %p130, %p131
      %p133 = scmp.ne.s32.totalorder %s125, %s127
      %p134 = scmp.eq.s32.totalorder %s38, 1
      %p135 = por %p133, %p134
      %p136 = scmp.ne.s32.totalorder %s127, %s128
      %p137 = scmp.eq.s32.totalorder %s38, 0
      %p138 = por %p136, %p137
      %p139 = scmp.ne.s32.totalorder %s127, %s128
      %p140 = scmp.eq.s32.totalorder %s39, 1
      %p141 = por %p139, %p140
      %p143 = scmp.ne.s32.totalorder %s128, %s142
      %p144 = scmp.eq.s32.totalorder %s39, 0
      %p145 = por %p143, %p144
      %s147 = sadd.s32 %s146, 1
      %p150 = scmp.eq.s32.totalorder %s33, 1
      %p151 = scmp.ne.s32.totalorder %s146, %s148
      %p152 = scmp.eq.s32.totalorder %s33, 0
      %p153 = por %p151, %p152
      %p154 = scmp.ne.s32.totalorder %s146, %s148
      %p155 = scmp.eq.s32.totalorder %s38, 1
      %p156 = por %p154, %p155
      %p157 = scmp.ne.s32.totalorder %s148, %s149
      %p158 = scmp.eq.s32.totalorder %s38, 0
      %p159 = por %p157, %p158
      %p160 = scmp.ne.s32.totalorder %s148, %s149
      %p161 = scmp.eq.s32.totalorder %s39, 1
      %p162 = por %p160, %p161
      %p164 = scmp.ne.s32.totalorder %s149, %s163
      %p165 = scmp.eq.s32.totalorder %s39, 0
      %p166 = por %p164, %p165
      %s168 = sadd.s32 %s167, 1
      %p171 = scmp.eq.s32.totalorder %s33, 1
      %p172 = scmp.ne.s32.totalorder %s167, %s169
      %p173 = scmp.eq.s32.totalorder %s33, 0
      %p174 = por %p172, %p173
      %p175 = scmp.ne.s32.totalorder %s167, %s169
      %p176 = scmp.eq.s32.totalorder %s38, 1
      %p177 = por %p175, %p176
      %p178 = scmp.ne.s32.totalorder %s169, %s170
      %p179 = scmp.eq.s32.totalorder %s38, 0
      %p180 = por %p178, %p179
      %p181 = scmp.ne.s32.totalorder %s169, %s170
      %p182 = scmp.eq.s32.totalorder %s39, 1
      %p183 = por %p181, %p182
      %p185 = scmp.ne.s32.totalorder %s170, %s184
      %p186 = scmp.eq.s32.totalorder %s39, 0
      %p187 = por %p185, %p186
      %s188 = ssub.s32 %s33, %s40
      %p189 = scmp.eq.s32.totalorder %s188, 0
      %s191 = sadd.s32 %s190, 1
      %s192 = scalar_select %p189, %s190, %s191
      %p195 = pneg %p189
      %p196 = scmp.eq.s32.totalorder %s33, 1
      %p197 = por %p195, %p196
      %p198 = scmp.ne.s32.totalorder %s190, %s193
      %p199 = scmp.eq.s32.totalorder %s33, 0
      %p200 = por %p198, %p199
      %p201 = scmp.ne.s32.totalorder %s190, %s193
      %p202 = scmp.eq.s32.totalorder %s38, 1
      %p203 = por %p201, %p202
      %p204 = scmp.ne.s32.totalorder %s193, %s194
      %p205 = scmp.eq.s32.totalorder %s38, 0
      %p206 = por %p204, %p205
      %p207 = scmp.ne.s32.totalorder %s193, %s194
      %p208 = scmp.eq.s32.totalorder %s39, 1
      %p209 = por %p207, %p208
      %p211 = scmp.ne.s32.totalorder %s194, %s210
      %p212 = scmp.eq.s32.totalorder %s39, 0
      %p213 = por %p211, %p212
      %s214 = ssub.s32 %s33, %s40
      %p215 = scmp.eq.s32.totalorder %s214, 0
      %s217 = sadd.s32 %s216, 1
      %s218 = scalar_select %p215, %s216, %s217
      %p221 = pneg %p215
      %p222 = scmp.eq.s32.totalorder %s33, 1
      %p223 = por %p221, %p222
      %p224 = scmp.ne.s32.totalorder %s216, %s219
      %p225 = scmp.eq.s32.totalorder %s33, 0
      %p226 = por %p224, %p225
      %p227 = scmp.ne.s32.totalorder %s216, %s219
      %p228 = scmp.eq.s32.totalorder %s38, 1
      %p229 = por %p227, %p228
      %p230 = scmp.ne.s32.totalorder %s219, %s220
      %p231 = scmp.eq.s32.totalorder %s38, 0
      %p232 = por %p230, %p231
      %p233 = scmp.ne.s32.totalorder %s219, %s220
      %p234 = scmp.eq.s32.totalorder %s39, 1
      %p235 = por %p233, %p234
      %p237 = scmp.ne.s32.totalorder %s220, %s236
      %p238 = scmp.eq.s32.totalorder %s39, 0
      %p239 = por %p237, %p238
      %s240 = ssub.s32 %s33, %s40
      %p241 = scmp.eq.s32.totalorder %s240, 0
      %s243 = sadd.s32 %s242, 1
      %s244 = scalar_select %p241, %s242, %s243
      %p247 = pneg %p241
      %p248 = scmp.eq.s32.totalorder %s33, 1
      %p249 = por %p247, %p248
      %p250 = scmp.ne.s32.totalorder %s242, %s245
      %p251 = scmp.eq.s32.totalorder %s33, 0
      %p252 = por %p250, %p251
      %p253 = scmp.ne.s32.totalorder %s242, %s245
      %p254 = scmp.eq.s32.totalorder %s38, 1
      %p255 = por %p253, %p254
      %p256 = scmp.ne.s32.totalorder %s245, %s246
      %p257 = scmp.eq.s32.totalorder %s38, 0
      %p258 = por %p256, %p257
      %p259 = scmp.ne.s32.totalorder %s245, %s246
      %p260 = scmp.eq.s32.totalorder %s39, 1
      %p261 = por %p259, %p260
      %p263 = scmp.ne.s32.totalorder %s246, %s262
      %p264 = scmp.eq.s32.totalorder %s39, 0
      %p265 = por %p263, %p264
      %s267 = sadd.s32 %s266, 1
      %p270 = scmp.eq.s32.totalorder %s33, 1
      %p271 = scmp.ne.s32.totalorder %s266, %s268
      %p272 = scmp.eq.s32.totalorder %s33, 0
      %p273 = por %p271, %p272
      %p274 = scmp.ne.s32.totalorder %s266, %s268
      %p275 = scmp.eq.s32.totalorder %s38, 1
      %p276 = por %p274, %p275
      %p277 = scmp.ne.s32.totalorder %s268, %s269
      %p278 = scmp.eq.s32.totalorder %s38, 0
      %p279 = por %p277, %p278
      %p280 = scmp.ne.s32.totalorder %s268, %s269
      %p281 = scmp.eq.s32.totalorder %s39, 1
      %p282 = por %p280, %p281
      %p284 = scmp.ne.s32.totalorder %s269, %s283
      %p285 = scmp.eq.s32.totalorder %s39, 0
      %p286 = por %p284, %p285
      %s288 = sadd.s32 %s287, 1
      %p291 = scmp.eq.s32.totalorder %s33, 1
      %p292 = scmp.ne.s32.totalorder %s287, %s289
      %p293 = scmp.eq.s32.totalorder %s33, 0
      %p294 = por %p292, %p293
      %p295 = scmp.ne.s32.totalorder %s287, %s289
      %p296 = scmp.eq.s32.totalorder %s38, 1
      %p297 = por %p295, %p296
      %p298 = scmp.ne.s32.totalorder %s289, %s290
      %p299 = scmp.eq.s32.totalorder %s38, 0
      %p300 = por %p298, %p299
      %p301 = scmp.ne.s32.totalorder %s289, %s290
      %p302 = scmp.eq.s32.totalorder %s39, 1
      %p303 = por %p301, %p302
      %p305 = scmp.ne.s32.totalorder %s290, %s304
      %p306 = scmp.eq.s32.totalorder %s39, 0
      %p307 = por %p305, %p306
      %p308 = scmp.le.s32.totalorder 1, %s33
      %p309 = scmp.lt.s32.totalorder %s33, 3
      %p310 = pnand %p308, %p309
      %p311 = pneg %p310
      // Predicated region
      $region9: #{decoder_forward.1} parent=5 // pred_check
        _
      $region10: #{decoder_forward.1} parent=5 // pred_check_branch
        %313 = sbr.rel (%p310) target = $region12
      $region11: #{decoder_forward.1} parent=5 // pred_region
        %s314 = ssub.s32 %s33, 1
        // Predicated region
        $region13: #{decoder_forward.1} parent=11 // pred_check
          %p315 = pneg %p54
        $region14: #{decoder_forward.1} parent=11 // pred_check_branch
          %317 = sbr.rel (%p315) target = $region16
        $region15: #{decoder_forward.1} parent=11 // pred_region
          _
        $region16: #{decoder_forward.1} parent=11 // pred_fallthru
          _
        // Predicated region
        $region17: #{decoder_forward.1} parent=11 // pred_check
          %p318 = pneg %p75
        $region18: #{decoder_forward.1} parent=11 // pred_check_branch
          %320 = sbr.rel (%p318) target = $region20
        $region19: #{decoder_forward.1} parent=11 // pred_region
          _
        $region20: #{decoder_forward.1} parent=11 // pred_fallthru
          _
        // Predicated region
        $region21: #{decoder_forward.1} parent=11 // pred_check
          %p321 = pneg %p96
        $region22: #{decoder_forward.1} parent=11 // pred_check_branch
          %323 = sbr.rel (%p321) target = $region24
        $region23: #{decoder_forward.1} parent=11 // pred_region
          _
        $region24: #{decoder_forward.1} parent=11 // pred_fallthru
          _
        // Predicated region
        $region25: #{decoder_forward.1} parent=11 // pred_check
          %p324 = pneg %p117
        $region26: #{decoder_forward.1} parent=11 // pred_check_branch
          %326 = sbr.rel (%p324) target = $region28
        $region27: #{decoder_forward.1} parent=11 // pred_region
          %s328 = ssub.s32 24576, 24576
          %329 = vsyncadd [#allocation8], %s328
          %s330 = sshll.u32 [#allocation7], 4
          %s331 = int_to_ptr.vmem [resolvable:$true] %s330
          %336 = dma.hbm_to_vmem [thread:$0]  %s5, 24576, %s331, [#allocation8], 512, 512, 32
        $region28: #{decoder_forward.1} parent=11 // pred_fallthru
          _
        // Predicated region
        $region29: #{decoder_forward.1} parent=11 // pred_check
          %p337 = pneg %p138
        $region30: #{decoder_forward.1} parent=11 // pred_check_branch
          %339 = sbr.rel (%p337) target = $region32
        $region31: #{decoder_forward.1} parent=11 // pred_region
          %s341 = ssub.s32 128, 128
          %342 = vsyncadd [#allocation11], %s341
          %s344 = sshll.u32 [#allocation10], 4
          %s345 = int_to_ptr.vmem [resolvable:$true] %s344
          %347 = dma.hbm_to_vmem [thread:$0]  %s6, 128, %s345, [#allocation11]
        $region32: #{decoder_forward.1} parent=11 // pred_fallthru
          _
        // Predicated region
        $region33: #{decoder_forward.1} parent=11 // pred_check
          %p348 = pneg %p159
        $region34: #{decoder_forward.1} parent=11 // pred_check_branch
          %350 = sbr.rel (%p348) target = $region36
        $region35: #{decoder_forward.1} parent=11 // pred_region
          %s352 = ssub.s32 4096, 4096
          %353 = vsyncadd [#allocation11], %s352
          %s354 = sshll.u32 [#allocation12], 4
          %s355 = int_to_ptr.vmem [resolvable:$true] %s354
          %360 = dma.hbm_to_vmem [thread:$0]  %s7, 4096, %s355, [#allocation11], 128, 128, 8
        $region36: #{decoder_forward.1} parent=11 // pred_fallthru
          _
        // Predicated region
        $region37: #{decoder_forward.1} parent=11 // pred_check
          %p361 = pneg %p180
        $region38: #{decoder_forward.1} parent=11 // pred_check_branch
          %363 = sbr.rel (%p361) target = $region40
        $region39: #{decoder_forward.1} parent=11 // pred_region
          _
        $region40: #{decoder_forward.1} parent=11 // pred_fallthru
          _
      $region12: #{decoder_forward.1} parent=5 // pred_fallthru
        _
      %p364 = scmp.lt.s32.totalorder %s33, 2
      // Predicated region
      $region41: #{decoder_forward.1} parent=5 // pred_check
        %p365 = pneg %p364
      $region42: #{decoder_forward.1} parent=5 // pred_check_branch
        %367 = sbr.rel (%p365) target = $region44
      $region43: #{decoder_forward.1} parent=5 // pred_region
        // Predicated region
        $region45: #{decoder_forward.1} parent=43 // pred_check
          %p368 = pneg %p200
        $region46: #{decoder_forward.1} parent=43 // pred_check_branch
          %370 = sbr.rel (%p368) target = $region48
        $region47: #{decoder_forward.1} parent=43 // pred_region
          %s371 = sand.u32 %s33, 1
          %s372 = scalar_lea.sflag [#allocation14], %s371
          %s373 = sand.u32 %s190, 1
          %s374 = smul.addr %s373, 384
          %s375 = scalar_lea.vmem [#allocation13], %s374
          %s376 = smul.u32 2, %s33
          %s378 = ssub.s32 6144, 6144
          %379 = vsyncadd %s372, %s378
          %s380 = smul.addr %s376, 64
          %s381 = scalar_lea.hbm %s9, %s380
          %s382 = sshll.u32 %s375, 4
          %s383 = int_to_ptr.vmem [resolvable:$true] %s382
          %388 = dma.hbm_to_vmem [thread:$0]  %s381, 6144, %s383, %s372, 256, 128, 8
        $region48: #{decoder_forward.1} parent=43 // pred_fallthru
          _
        // Predicated region
        $region49: #{decoder_forward.1} parent=43 // pred_check
          %p389 = pneg %p226
        $region50: #{decoder_forward.1} parent=43 // pred_check_branch
          %391 = sbr.rel (%p389) target = $region52
        $region51: #{decoder_forward.1} parent=43 // pred_region
          %s392 = sand.u32 %s33, 1
          %s393 = scalar_lea.sflag [#allocation14], %s392
          %s394 = sand.u32 %s216, 1
          %s395 = smul.addr %s394, 2
          %s396 = scalar_lea.vmem [#allocation15], %s395
          %s397 = smul.u32 2, %s33
          %s399 = ssub.s32 32, 32
          %400 = vsyncadd %s393, %s399
          %s401 = smul.addr %s397, 16
          %s402 = scalar_lea.hbm %s10, %s401
          %s404 = sshll.u32 %s396, 4
          %s405 = int_to_ptr.vmem [resolvable:$true] %s404
          %407 = dma.hbm_to_vmem [thread:$0]  %s402, 32, %s405, %s393
        $region52: #{decoder_forward.1} parent=43 // pred_fallthru
          _
      $region44: #{decoder_forward.1} parent=5 // pred_fallthru
        _
      %p408 = scmp.le.s32.totalorder 1, %s33
      %p409 = scmp.lt.s32.totalorder %s33, 3
      %p410 = pnand %p408, %p409
      %p411 = pneg %p410
      // Predicated region
      $region53: #{decoder_forward.1} parent=5 // pred_check
        _
      $region54: #{decoder_forward.1} parent=5 // pred_check_branch
        %413 = sbr.rel (%p410) target = $region56
      $region55: #{decoder_forward.1} parent=5 // pred_region
        %s414 = ssub.s32 %s33, 1
        // Predicated region
        $region57: #{decoder_forward.1} parent=55 // pred_check
          %p415 = pneg %p117
        $region58: #{decoder_forward.1} parent=55 // pred_check_branch
          %417 = sbr.rel (%p415) target = $region60
        $region59: #{decoder_forward.1} parent=55 // pred_region
          %418 = dma.done [#allocation8], 24576
        $region60: #{decoder_forward.1} parent=55 // pred_fallthru
          _
        // Predicated region
        $region61: #{decoder_forward.1} parent=55 // pred_check
          %p419 = pneg %p138
        $region62: #{decoder_forward.1} parent=55 // pred_check_branch
          %421 = sbr.rel (%p419) target = $region64
        $region63: #{decoder_forward.1} parent=55 // pred_region
          %422 = dma.done [#allocation11], 128
        $region64: #{decoder_forward.1} parent=55 // pred_fallthru
          _
        // Predicated region
        $region65: #{decoder_forward.1} parent=55 // pred_check
          %p423 = pneg %p159
        $region66: #{decoder_forward.1} parent=55 // pred_check_branch
          %425 = sbr.rel (%p423) target = $region68
        $region67: #{decoder_forward.1} parent=55 // pred_region
          %426 = dma.done [#allocation11], 4096
        $region68: #{decoder_forward.1} parent=55 // pred_fallthru
          _
        %s427 = sand.u32 %s38, 1
        %s428 = scalar_lea.sflag [#allocation14], %s427
        %s429 = sand.u32 %s193, 1
        %s430 = smul.addr %s429, 384
        %s431 = scalar_lea.vmem [#allocation13], %s430
        // Predicated region
        $region69: #{decoder_forward.1} parent=55 // pred_check
          %p432 = pneg %p206
        $region70: #{decoder_forward.1} parent=55 // pred_check_branch
          %434 = sbr.rel (%p432) target = $region72
        $region71: #{decoder_forward.1} parent=55 // pred_region
          %435 = dma.done %s428, 6144
        $region72: #{decoder_forward.1} parent=55 // pred_fallthru
          _
        %s436 = sand.u32 %s38, 1
        %s437 = scalar_lea.sflag [#allocation14], %s436
        %s438 = sand.u32 %s219, 1
        %s439 = smul.addr %s438, 2
        %s440 = scalar_lea.vmem [#allocation15], %s439
        // Predicated region
        $region73: #{decoder_forward.1} parent=55 // pred_check
          %p441 = pneg %p232
        $region74: #{decoder_forward.1} parent=55 // pred_check_branch
          %443 = sbr.rel (%p441) target = $region76
        $region75: #{decoder_forward.1} parent=55 // pred_region
          %444 = dma.done %s437, 32
        $region76: #{decoder_forward.1} parent=55 // pred_fallthru
          _
        %p445 = pneg %p54
        %p446 = pneg %p51
        %p447 = pneg %p75
        %p448 = pneg %p72
        %p449 = pneg %p96
        %p450 = pneg %p93
        %p451 = pneg %p117
        %p452 = pneg %p114
        %p453 = pneg %p138
        %p454 = pneg %p135
        %p455 = pneg %p159
        %p456 = pneg %p156
        %p457 = pneg %p180
        %p458 = pneg %p177
        %s459 = sand.u32 %s38, 1
        %s460 = scalar_lea.sflag [#allocation14], %s459
        %s461 = sand.u32 %s193, 1
        %s462 = smul.addr %s461, 384
        %s463 = scalar_lea.vmem [#allocation13], %s462
        %p464 = pneg %p206
        %p465 = pneg %p203
        %s466 = sand.u32 %s38, 1
        %s467 = scalar_lea.sflag [#allocation14], %s466
        %s468 = sand.u32 %s219, 1
        %s469 = smul.addr %s468, 2
        %s470 = scalar_lea.vmem [#allocation15], %s469
        %p471 = pneg %p232
        %p472 = pneg %p229
        %p473 = pneg %p258
        %p474 = pneg %p255
        %s475 = sand.u32 %s245, 1
        %s476 = scalar_lea.sflag [#allocation9], %s475
        %s477 = sand.u32 %s245, 1
        %s478 = smul.addr %s477, 16
        %s479 = scalar_lea.vmem [#allocation16], %s478
        %p480 = pneg %p279
        %p481 = pneg %p276
        %p482 = pneg %p300
        %p483 = pneg %p297
        %s484 = smul.u32 2, %s38
        %s485 = smul.u32 2, %s38
        %s486 = smul.u32 2, %s38
        %p488 = scmp.eq.s32.totalorder %s38, 0
        // Predicated region
        $region77: #{decoder_forward.1} parent=55 // pred_check
          %p489 = pneg %p488
        $region78: #{decoder_forward.1} parent=55 // pred_check_branch
          %491 = sbr.rel (%p489) target = $region80
        $region79: #{decoder_forward.1} parent=55 // pred_region
          %s492 = sld [smem:[#allocation6]]
          %s493 = scalar_lea.vmem %s4, %s492
          %p495 = scmp.lt.u32.totalorder 1, 8
          %p496 = pneg %p495
          // Predicated region
          $region81: #{decoder_forward.1} parent=79 // pred_check
            _
          $region82: #{decoder_forward.1} parent=79 // pred_check_branch
            %498 = sbr.rel (%p495) target = $region84
          $region83: #{decoder_forward.1} parent=79 // pred_region
            %s513 = sand.u32 1, 7
            %p514 = scmp.eq.s32.totalorder %s513, 0
            %p515 = pneg %p514
            // Predicated region
            $region96: #{decoder_forward.1} parent=83 // pred_check
              _
            $region97: #{decoder_forward.1} parent=83 // pred_check_branch
              %517 = sbr.rel (%p514) target = $region99
            $region98: #{decoder_forward.1} parent=83 // pred_region
              %s518 = sand.u32 1, 7
              %s519 = ssub.s32 1, %s518
              %s520 = scalar_lea.vmem %s493, %s519
              %s521 = ssub.s32 1, %s518
              %s522 = scalar_lea.vmem [#allocation2], %s521
              %s523 = sshllo.u32 0, %s518
              loop: start=0, step=1, limit=1
              $region100: #{decoder_forward.1} parent=98 // loop_pre_header
                _
              $region101: #{decoder_forward.1} parent=98 // loop_header
                %s525 = sphi 0, %s529
                %p526 = scmp.ge.s32.totalorder %s525, 1
                %s530 = sphi %s520, %s520
                %s531 = sphi %s522, %s522
              $region102: #{decoder_forward.1} parent=98 // loop_header_branch
                %528 = sbr.rel (%p526) target = $region106
              $region103: #{decoder_forward.1} parent=98 // loop_body
                %v532 = vld [vmem:[%s530] sm:%s523]
                %533 = vst [vmem:[%s531] sm:%s523] %v532
              $region104: #{decoder_forward.1} parent=98 // loop_footer
                %s529 = sadd.s32 1, %s525
              $region105: #{decoder_forward.1} parent=98 // loop_footer_branch
                %524 = sbr.rel target = $region101
              $region106: #{decoder_forward.1} parent=98 // loop_exit
                _
            $region99: #{decoder_forward.1} parent=83 // pred_fallthru
              _
          $region84: #{decoder_forward.1} parent=79 // pred_fallthru
            _
          // Predicated region
          $region85: #{decoder_forward.1} parent=79 // pred_check
            %p499 = pneg %p495
          $region86: #{decoder_forward.1} parent=79 // pred_check_branch
            %501 = sbr.rel (%p499) target = $region88
          $region87: #{decoder_forward.1} parent=79 // pred_region
            %s502 = sshllo.u32 0, 1
            loop: start=0, step=1, limit=1
            $region89: #{decoder_forward.1} parent=87 // loop_pre_header
              _
            $region90: #{decoder_forward.1} parent=87 // loop_header
              %s504 = sphi 0, %s508
              %p505 = scmp.ge.s32.totalorder %s504, 1
              %s509 = sphi %s493, %s493
              %s510 = sphi [#allocation2], [#allocation2]
            $region91: #{decoder_forward.1} parent=87 // loop_header_branch
              %507 = sbr.rel (%p505) target = $region95
            $region92: #{decoder_forward.1} parent=87 // loop_body
              %v511 = vld [vmem:[%s509] sm:%s502]
              %512 = vst [vmem:[%s510] sm:%s502] %v511
            $region93: #{decoder_forward.1} parent=87 // loop_footer
              %s508 = sadd.s32 1, %s504
            $region94: #{decoder_forward.1} parent=87 // loop_footer_branch
              %503 = sbr.rel target = $region90
            $region95: #{decoder_forward.1} parent=87 // loop_exit
              _
          $region88: #{decoder_forward.1} parent=79 // pred_fallthru
            _
          // Predicated region
          $region107: #{decoder_forward.1} parent=79 // pred_check
            _
          $region108: #{decoder_forward.1} parent=79 // pred_check_branch
            %536 = sbr.rel (0) target = $region110
          $region109: #{decoder_forward.1} parent=79 // pred_region
            %537 = vsyncadd [#allocation4], 16
          $region110: #{decoder_forward.1} parent=79 // pred_fallthru
            _
          %s538 = sld [smem:[#allocation6 + $0x1]]
          %s539 = scalar_lea.vmem %s4, %s538
          %s540 = scalar_lea.vmem [#allocation2], 1
          %s541 = scalar_lea.sflag [#allocation4], 1
          %p543 = scmp.lt.u32.totalorder 1, 8
          %p544 = pneg %p543
          // Predicated region
          $region111: #{decoder_forward.1} parent=79 // pred_check
            _
          $region112: #{decoder_forward.1} parent=79 // pred_check_branch
            %546 = sbr.rel (%p543) target = $region114
          $region113: #{decoder_forward.1} parent=79 // pred_region
            %s561 = sand.u32 1, 7
            %p562 = scmp.eq.s32.totalorder %s561, 0
            %p563 = pneg %p562
            // Predicated region
            $region126: #{decoder_forward.1} parent=113 // pred_check
              _
            $region127: #{decoder_forward.1} parent=113 // pred_check_branch
              %565 = sbr.rel (%p562) target = $region129
            $region128: #{decoder_forward.1} parent=113 // pred_region
              %s566 = sand.u32 1, 7
              %s567 = ssub.s32 1, %s566
              %s568 = scalar_lea.vmem %s539, %s567
              %s569 = ssub.s32 1, %s566
              %s570 = scalar_lea.vmem %s540, %s569 [#allocation2]
              %s571 = sshllo.u32 0, %s566
              loop: start=0, step=1, limit=1
              $region130: #{decoder_forward.1} parent=128 // loop_pre_header
                _
              $region131: #{decoder_forward.1} parent=128 // loop_header
                %s573 = sphi 0, %s577
                %p574 = scmp.ge.s32.totalorder %s573, 1
                %s578 = sphi %s568, %s568
                %s579 = sphi %s570, %s570
              $region132: #{decoder_forward.1} parent=128 // loop_header_branch
                %576 = sbr.rel (%p574) target = $region136
              $region133: #{decoder_forward.1} parent=128 // loop_body
                %v580 = vld [vmem:[%s578] sm:%s571]
                %581 = vst [vmem:[%s579] sm:%s571] %v580
              $region134: #{decoder_forward.1} parent=128 // loop_footer
                %s577 = sadd.s32 1, %s573
              $region135: #{decoder_forward.1} parent=128 // loop_footer_branch
                %572 = sbr.rel target = $region131
              $region136: #{decoder_forward.1} parent=128 // loop_exit
                _
            $region129: #{decoder_forward.1} parent=113 // pred_fallthru
              _
          $region114: #{decoder_forward.1} parent=79 // pred_fallthru
            _
          // Predicated region
          $region115: #{decoder_forward.1} parent=79 // pred_check
            %p547 = pneg %p543
          $region116: #{decoder_forward.1} parent=79 // pred_check_branch
            %549 = sbr.rel (%p547) target = $region118
          $region117: #{decoder_forward.1} parent=79 // pred_region
            %s550 = sshllo.u32 0, 1
            loop: start=0, step=1, limit=1
            $region119: #{decoder_forward.1} parent=117 // loop_pre_header
              _
            $region120: #{decoder_forward.1} parent=117 // loop_header
              %s552 = sphi 0, %s556
              %p553 = scmp.ge.s32.totalorder %s552, 1
              %s557 = sphi %s539, %s539
              %s558 = sphi %s540, %s540
            $region121: #{decoder_forward.1} parent=117 // loop_header_branch
              %555 = sbr.rel (%p553) target = $region125
            $region122: #{decoder_forward.1} parent=117 // loop_body
              %v559 = vld [vmem:[%s557] sm:%s550]
              %560 = vst [vmem:[%s558] sm:%s550] %v559
            $region123: #{decoder_forward.1} parent=117 // loop_footer
              %s556 = sadd.s32 1, %s552
            $region124: #{decoder_forward.1} parent=117 // loop_footer_branch
              %551 = sbr.rel target = $region120
            $region125: #{decoder_forward.1} parent=117 // loop_exit
              _
          $region118: #{decoder_forward.1} parent=79 // pred_fallthru
            _
          // Predicated region
          $region137: #{decoder_forward.1} parent=79 // pred_check
            _
          $region138: #{decoder_forward.1} parent=79 // pred_check_branch
            %584 = sbr.rel (0) target = $region140
          $region139: #{decoder_forward.1} parent=79 // pred_region
            %585 = vsyncadd %s541, 16
          $region140: #{decoder_forward.1} parent=79 // pred_fallthru
            _
          %s586 = sld [smem:[#allocation6 + $0x2]]
          %s587 = scalar_lea.vmem %s4, %s586
          %s588 = scalar_lea.vmem [#allocation2], 2
          %s589 = scalar_lea.sflag [#allocation4], 2
          %p591 = scmp.lt.u32.totalorder 1, 8
          %p592 = pneg %p591
          // Predicated region
          $region141: #{decoder_forward.1} parent=79 // pred_check
            _
          $region142: #{decoder_forward.1} parent=79 // pred_check_branch
            %594 = sbr.rel (%p591) target = $region144
          $region143: #{decoder_forward.1} parent=79 // pred_region
            %s609 = sand.u32 1, 7
            %p610 = scmp.eq.s32.totalorder %s609, 0
            %p611 = pneg %p610
            // Predicated region
            $region156: #{decoder_forward.1} parent=143 // pred_check
              _
            $region157: #{decoder_forward.1} parent=143 // pred_check_branch
              %613 = sbr.rel (%p610) target = $region159
            $region158: #{decoder_forward.1} parent=143 // pred_region
              %s614 = sand.u32 1, 7
              %s615 = ssub.s32 1, %s614
              %s616 = scalar_lea.vmem %s587, %s615
              %s617 = ssub.s32 1, %s614
              %s618 = scalar_lea.vmem %s588, %s617 [#allocation2]
              %s619 = sshllo.u32 0, %s614
              loop: start=0, step=1, limit=1
              $region160: #{decoder_forward.1} parent=158 // loop_pre_header
                _
              $region161: #{decoder_forward.1} parent=158 // loop_header
                %s621 = sphi 0, %s625
                %p622 = scmp.ge.s32.totalorder %s621, 1
                %s626 = sphi %s616, %s616
                %s627 = sphi %s618, %s618
              $region162: #{decoder_forward.1} parent=158 // loop_header_branch
                %624 = sbr.rel (%p622) target = $region166
              $region163: #{decoder_forward.1} parent=158 // loop_body
                %v628 = vld [vmem:[%s626] sm:%s619]
                %629 = vst [vmem:[%s627] sm:%s619] %v628
              $region164: #{decoder_forward.1} parent=158 // loop_footer
                %s625 = sadd.s32 1, %s621
              $region165: #{decoder_forward.1} parent=158 // loop_footer_branch
                %620 = sbr.rel target = $region161
              $region166: #{decoder_forward.1} parent=158 // loop_exit
                _
            $region159: #{decoder_forward.1} parent=143 // pred_fallthru
              _
          $region144: #{decoder_forward.1} parent=79 // pred_fallthru
            _
          // Predicated region
          $region145: #{decoder_forward.1} parent=79 // pred_check
            %p595 = pneg %p591
          $region146: #{decoder_forward.1} parent=79 // pred_check_branch
            %597 = sbr.rel (%p595) target = $region148
          $region147: #{decoder_forward.1} parent=79 // pred_region
            %s598 = sshllo.u32 0, 1
            loop: start=0, step=1, limit=1
            $region149: #{decoder_forward.1} parent=147 // loop_pre_header
              _
            $region150: #{decoder_forward.1} parent=147 // loop_header
              %s600 = sphi 0, %s604
              %p601 = scmp.ge.s32.totalorder %s600, 1
              %s605 = sphi %s587, %s587
              %s606 = sphi %s588, %s588
            $region151: #{decoder_forward.1} parent=147 // loop_header_branch
              %603 = sbr.rel (%p601) target = $region155
            $region152: #{decoder_forward.1} parent=147 // loop_body
              %v607 = vld [vmem:[%s605] sm:%s598]
              %608 = vst [vmem:[%s606] sm:%s598] %v607
            $region153: #{decoder_forward.1} parent=147 // loop_footer
              %s604 = sadd.s32 1, %s600
            $region154: #{decoder_forward.1} parent=147 // loop_footer_branch
              %599 = sbr.rel target = $region150
            $region155: #{decoder_forward.1} parent=147 // loop_exit
              _
          $region148: #{decoder_forward.1} parent=79 // pred_fallthru
            _
          // Predicated region
          $region167: #{decoder_forward.1} parent=79 // pred_check
            _
          $region168: #{decoder_forward.1} parent=79 // pred_check_branch
            %632 = sbr.rel (0) target = $region170
          $region169: #{decoder_forward.1} parent=79 // pred_region
            %633 = vsyncadd %s589, 16
          $region170: #{decoder_forward.1} parent=79 // pred_fallthru
            _
          %s634 = sld [smem:[#allocation6 + $0x3]]
          %s635 = scalar_lea.vmem %s4, %s634
          %s636 = scalar_lea.vmem [#allocation2], 3
          %s637 = scalar_lea.sflag [#allocation4], 3
          %p639 = scmp.lt.u32.totalorder 1, 8
          %p640 = pneg %p639
          // Predicated region
          $region171: #{decoder_forward.1} parent=79 // pred_check
            _
          $region172: #{decoder_forward.1} parent=79 // pred_check_branch
            %642 = sbr.rel (%p639) target = $region174
          $region173: #{decoder_forward.1} parent=79 // pred_region
            %s657 = sand.u32 1, 7
            %p658 = scmp.eq.s32.totalorder %s657, 0
            %p659 = pneg %p658
            // Predicated region
            $region186: #{decoder_forward.1} parent=173 // pred_check
              _
            $region187: #{decoder_forward.1} parent=173 // pred_check_branch
              %661 = sbr.rel (%p658) target = $region189
            $region188: #{decoder_forward.1} parent=173 // pred_region
              %s662 = sand.u32 1, 7
              %s663 = ssub.s32 1, %s662
              %s664 = scalar_lea.vmem %s635, %s663
              %s665 = ssub.s32 1, %s662
              %s666 = scalar_lea.vmem %s636, %s665 [#allocation2]
              %s667 = sshllo.u32 0, %s662
              loop: start=0, step=1, limit=1
              $region190: #{decoder_forward.1} parent=188 // loop_pre_header
                _
              $region191: #{decoder_forward.1} parent=188 // loop_header
                %s669 = sphi 0, %s673
                %p670 = scmp.ge.s32.totalorder %s669, 1
                %s674 = sphi %s664, %s664
                %s675 = sphi %s666, %s666
              $region192: #{decoder_forward.1} parent=188 // loop_header_branch
                %672 = sbr.rel (%p670) target = $region196
              $region193: #{decoder_forward.1} parent=188 // loop_body
                %v676 = vld [vmem:[%s674] sm:%s667]
                %677 = vst [vmem:[%s675] sm:%s667] %v676
              $region194: #{decoder_forward.1} parent=188 // loop_footer
                %s673 = sadd.s32 1, %s669
              $region195: #{decoder_forward.1} parent=188 // loop_footer_branch
                %668 = sbr.rel target = $region191
              $region196: #{decoder_forward.1} parent=188 // loop_exit
                _
            $region189: #{decoder_forward.1} parent=173 // pred_fallthru
              _
          $region174: #{decoder_forward.1} parent=79 // pred_fallthru
            _
          // Predicated region
          $region175: #{decoder_forward.1} parent=79 // pred_check
            %p643 = pneg %p639
          $region176: #{decoder_forward.1} parent=79 // pred_check_branch
            %645 = sbr.rel (%p643) target = $region178
          $region177: #{decoder_forward.1} parent=79 // pred_region
            %s646 = sshllo.u32 0, 1
            loop: start=0, step=1, limit=1
            $region179: #{decoder_forward.1} parent=177 // loop_pre_header
              _
            $region180: #{decoder_forward.1} parent=177 // loop_header
              %s648 = sphi 0, %s652
              %p649 = scmp.ge.s32.totalorder %s648, 1
              %s653 = sphi %s635, %s635
              %s654 = sphi %s636, %s636
            $region181: #{decoder_forward.1} parent=177 // loop_header_branch
              %651 = sbr.rel (%p649) target = $region185
            $region182: #{decoder_forward.1} parent=177 // loop_body
              %v655 = vld [vmem:[%s653] sm:%s646]
              %656 = vst [vmem:[%s654] sm:%s646] %v655
            $region183: #{decoder_forward.1} parent=177 // loop_footer
              %s652 = sadd.s32 1, %s648
            $region184: #{decoder_forward.1} parent=177 // loop_footer_branch
              %647 = sbr.rel target = $region180
            $region185: #{decoder_forward.1} parent=177 // loop_exit
              _
          $region178: #{decoder_forward.1} parent=79 // pred_fallthru
            _
          // Predicated region
          $region197: #{decoder_forward.1} parent=79 // pred_check
            _
          $region198: #{decoder_forward.1} parent=79 // pred_check_branch
            %680 = sbr.rel (0) target = $region200
          $region199: #{decoder_forward.1} parent=79 // pred_region
            %681 = vsyncadd %s637, 16
          $region200: #{decoder_forward.1} parent=79 // pred_fallthru
            _
          %s682 = sld [smem:[#allocation6 + $0x4]]
          %s683 = scalar_lea.vmem %s4, %s682
          %s684 = scalar_lea.vmem [#allocation2], 4
          %s685 = scalar_lea.sflag [#allocation4], 4
          %p687 = scmp.lt.u32.totalorder 1, 8
          %p688 = pneg %p687
          // Predicated region
          $region201: #{decoder_forward.1} parent=79 // pred_check
            _
          $region202: #{decoder_forward.1} parent=79 // pred_check_branch
            %690 = sbr.rel (%p687) target = $region204
          $region203: #{decoder_forward.1} parent=79 // pred_region
            %s705 = sand.u32 1, 7
            %p706 = scmp.eq.s32.totalorder %s705, 0
            %p707 = pneg %p706
            // Predicated region
            $region216: #{decoder_forward.1} parent=203 // pred_check
              _
            $region217: #{decoder_forward.1} parent=203 // pred_check_branch
              %709 = sbr.rel (%p706) target = $region219
            $region218: #{decoder_forward.1} parent=203 // pred_region
              %s710 = sand.u32 1, 7
              %s711 = ssub.s32 1, %s710
              %s712 = scalar_lea.vmem %s683, %s711
              %s713 = ssub.s32 1, %s710
              %s714 = scalar_lea.vmem %s684, %s713 [#allocation2]
              %s715 = sshllo.u32 0, %s710
              loop: start=0, step=1, limit=1
              $region220: #{decoder_forward.1} parent=218 // loop_pre_header
                _
              $region221: #{decoder_forward.1} parent=218 // loop_header
                %s717 = sphi 0, %s721
                %p718 = scmp.ge.s32.totalorder %s717, 1
                %s722 = sphi %s712, %s712
                %s723 = sphi %s714, %s714
              $region222: #{decoder_forward.1} parent=218 // loop_header_branch
                %720 = sbr.rel (%p718) target = $region226
              $region223: #{decoder_forward.1} parent=218 // loop_body
                %v724 = vld [vmem:[%s722] sm:%s715]
                %725 = vst [vmem:[%s723] sm:%s715] %v724
              $region224: #{decoder_forward.1} parent=218 // loop_footer
                %s721 = sadd.s32 1, %s717
              $region225: #{decoder_forward.1} parent=218 // loop_footer_branch
                %716 = sbr.rel target = $region221
              $region226: #{decoder_forward.1} parent=218 // loop_exit
                _
            $region219: #{decoder_forward.1} parent=203 // pred_fallthru
              _
          $region204: #{decoder_forward.1} parent=79 // pred_fallthru
            _
          // Predicated region
          $region205: #{decoder_forward.1} parent=79 // pred_check
            %p691 = pneg %p687
          $region206: #{decoder_forward.1} parent=79 // pred_check_branch
            %693 = sbr.rel (%p691) target = $region208
          $region207: #{decoder_forward.1} parent=79 // pred_region
            %s694 = sshllo.u32 0, 1
            loop: start=0, step=1, limit=1
            $region209: #{decoder_forward.1} parent=207 // loop_pre_header
              _
            $region210: #{decoder_forward.1} parent=207 // loop_header
              %s696 = sphi 0, %s700
              %p697 = scmp.ge.s32.totalorder %s696, 1
              %s701 = sphi %s683, %s683
              %s702 = sphi %s684, %s684
            $region211: #{decoder_forward.1} parent=207 // loop_header_branch
              %699 = sbr.rel (%p697) target = $region215
            $region212: #{decoder_forward.1} parent=207 // loop_body
              %v703 = vld [vmem:[%s701] sm:%s694]
              %704 = vst [vmem:[%s702] sm:%s694] %v703
            $region213: #{decoder_forward.1} parent=207 // loop_footer
              %s700 = sadd.s32 1, %s696
            $region214: #{decoder_forward.1} parent=207 // loop_footer_branch
              %695 = sbr.rel target = $region210
            $region215: #{decoder_forward.1} parent=207 // loop_exit
              _
          $region208: #{decoder_forward.1} parent=79 // pred_fallthru
            _
          // Predicated region
          $region227: #{decoder_forward.1} parent=79 // pred_check
            _
          $region228: #{decoder_forward.1} parent=79 // pred_check_branch
            %728 = sbr.rel (0) target = $region230
          $region229: #{decoder_forward.1} parent=79 // pred_region
            %729 = vsyncadd %s685, 16
          $region230: #{decoder_forward.1} parent=79 // pred_fallthru
            _
          %s730 = sld [smem:[#allocation6 + $0x5]]
          %s731 = scalar_lea.vmem %s4, %s730
          %s732 = scalar_lea.vmem [#allocation2], 5
          %s733 = scalar_lea.sflag [#allocation4], 5
          %p735 = scmp.lt.u32.totalorder 1, 8
          %p736 = pneg %p735
          // Predicated region
          $region231: #{decoder_forward.1} parent=79 // pred_check
            _
          $region232: #{decoder_forward.1} parent=79 // pred_check_branch
            %738 = sbr.rel (%p735) target = $region234
          $region233: #{decoder_forward.1} parent=79 // pred_region
            %s753 = sand.u32 1, 7
            %p754 = scmp.eq.s32.totalorder %s753, 0
            %p755 = pneg %p754
            // Predicated region
            $region246: #{decoder_forward.1} parent=233 // pred_check
              _
            $region247: #{decoder_forward.1} parent=233 // pred_check_branch
              %757 = sbr.rel (%p754) target = $region249
            $region248: #{decoder_forward.1} parent=233 // pred_region
              %s758 = sand.u32 1, 7
              %s759 = ssub.s32 1, %s758
              %s760 = scalar_lea.vmem %s731, %s759
              %s761 = ssub.s32 1, %s758
              %s762 = scalar_lea.vmem %s732, %s761 [#allocation2]
              %s763 = sshllo.u32 0, %s758
              loop: start=0, step=1, limit=1
              $region250: #{decoder_forward.1} parent=248 // loop_pre_header
                _
              $region251: #{decoder_forward.1} parent=248 // loop_header
                %s765 = sphi 0, %s769
                %p766 = scmp.ge.s32.totalorder %s765, 1
                %s770 = sphi %s760, %s760
                %s771 = sphi %s762, %s762
              $region252: #{decoder_forward.1} parent=248 // loop_header_branch
                %768 = sbr.rel (%p766) target = $region256
              $region253: #{decoder_forward.1} parent=248 // loop_body
                %v772 = vld [vmem:[%s770] sm:%s763]
                %773 = vst [vmem:[%s771] sm:%s763] %v772
              $region254: #{decoder_forward.1} parent=248 // loop_footer
                %s769 = sadd.s32 1, %s765
              $region255: #{decoder_forward.1} parent=248 // loop_footer_branch
                %764 = sbr.rel target = $region251
              $region256: #{decoder_forward.1} parent=248 // loop_exit
                _
            $region249: #{decoder_forward.1} parent=233 // pred_fallthru
              _
          $region234: #{decoder_forward.1} parent=79 // pred_fallthru
            _
          // Predicated region
          $region235: #{decoder_forward.1} parent=79 // pred_check
            %p739 = pneg %p735
          $region236: #{decoder_forward.1} parent=79 // pred_check_branch
            %741 = sbr.rel (%p739) target = $region238
          $region237: #{decoder_forward.1} parent=79 // pred_region
            %s742 = sshllo.u32 0, 1
            loop: start=0, step=1, limit=1
            $region239: #{decoder_forward.1} parent=237 // loop_pre_header
              _
            $region240: #{decoder_forward.1} parent=237 // loop_header
              %s744 = sphi 0, %s748
              %p745 = scmp.ge.s32.totalorder %s744, 1
              %s749 = sphi %s731, %s731
              %s750 = sphi %s732, %s732
            $region241: #{decoder_forward.1} parent=237 // loop_header_branch
              %747 = sbr.rel (%p745) target = $region245
            $region242: #{decoder_forward.1} parent=237 // loop_body
              %v751 = vld [vmem:[%s749] sm:%s742]
              %752 = vst [vmem:[%s750] sm:%s742] %v751
            $region243: #{decoder_forward.1} parent=237 // loop_footer
              %s748 = sadd.s32 1, %s744
            $region244: #{decoder_forward.1} parent=237 // loop_footer_branch
              %743 = sbr.rel target = $region240
            $region245: #{decoder_forward.1} parent=237 // loop_exit
              _
          $region238: #{decoder_forward.1} parent=79 // pred_fallthru
            _
          // Predicated region
          $region257: #{decoder_forward.1} parent=79 // pred_check
            _
          $region258: #{decoder_forward.1} parent=79 // pred_check_branch
            %776 = sbr.rel (0) target = $region260
          $region259: #{decoder_forward.1} parent=79 // pred_region
            %777 = vsyncadd %s733, 16
          $region260: #{decoder_forward.1} parent=79 // pred_fallthru
            _
          %s778 = sld [smem:[#allocation6 + $0x6]]
          %s779 = scalar_lea.vmem %s4, %s778
          %s780 = scalar_lea.vmem [#allocation2], 6
          %s781 = scalar_lea.sflag [#allocation4], 6
          %p783 = scmp.lt.u32.totalorder 1, 8
          %p784 = pneg %p783
          // Predicated region
          $region261: #{decoder_forward.1} parent=79 // pred_check
            _
          $region262: #{decoder_forward.1} parent=79 // pred_check_branch
            %786 = sbr.rel (%p783) target = $region264
          $region263: #{decoder_forward.1} parent=79 // pred_region
            %s801 = sand.u32 1, 7
            %p802 = scmp.eq.s32.totalorder %s801, 0
            %p803 = pneg %p802
            // Predicated region
            $region276: #{decoder_forward.1} parent=263 // pred_check
              _
            $region277: #{decoder_forward.1} parent=263 // pred_check_branch
              %805 = sbr.rel (%p802) target = $region279
            $region278: #{decoder_forward.1} parent=263 // pred_region
              %s806 = sand.u32 1, 7
              %s807 = ssub.s32 1, %s806
              %s808 = scalar_lea.vmem %s779, %s807
              %s809 = ssub.s32 1, %s806
              %s810 = scalar_lea.vmem %s780, %s809 [#allocation2]
              %s811 = sshllo.u32 0, %s806
              loop: start=0, step=1, limit=1
              $region280: #{decoder_forward.1} parent=278 // loop_pre_header
                _
              $region281: #{decoder_forward.1} parent=278 // loop_header
                %s813 = sphi 0, %s817
                %p814 = scmp.ge.s32.totalorder %s813, 1
                %s818 = sphi %s808, %s808
                %s819 = sphi %s810, %s810
              $region282: #{decoder_forward.1} parent=278 // loop_header_branch
                %816 = sbr.rel (%p814) target = $region286
              $region283: #{decoder_forward.1} parent=278 // loop_body
                %v820 = vld [vmem:[%s818] sm:%s811]
                %821 = vst [vmem:[%s819] sm:%s811] %v820
              $region284: #{decoder_forward.1} parent=278 // loop_footer
                %s817 = sadd.s32 1, %s813
              $region285: #{decoder_forward.1} parent=278 // loop_footer_branch
                %812 = sbr.rel target = $region281
              $region286: #{decoder_forward.1} parent=278 // loop_exit
                _
            $region279: #{decoder_forward.1} parent=263 // pred_fallthru
              _
          $region264: #{decoder_forward.1} parent=79 // pred_fallthru
            _
          // Predicated region
          $region265: #{decoder_forward.1} parent=79 // pred_check
            %p787 = pneg %p783
          $region266: #{decoder_forward.1} parent=79 // pred_check_branch
            %789 = sbr.rel (%p787) target = $region268
          $region267: #{decoder_forward.1} parent=79 // pred_region
            %s790 = sshllo.u32 0, 1
            loop: start=0, step=1, limit=1
            $region269: #{decoder_forward.1} parent=267 // loop_pre_header
              _
            $region270: #{decoder_forward.1} parent=267 // loop_header
              %s792 = sphi 0, %s796
              %p793 = scmp.ge.s32.totalorder %s792, 1
              %s797 = sphi %s779, %s779
              %s798 = sphi %s780, %s780
            $region271: #{decoder_forward.1} parent=267 // loop_header_branch
              %795 = sbr.rel (%p793) target = $region275
            $region272: #{decoder_forward.1} parent=267 // loop_body
              %v799 = vld [vmem:[%s797] sm:%s790]
              %800 = vst [vmem:[%s798] sm:%s790] %v799
            $region273: #{decoder_forward.1} parent=267 // loop_footer
              %s796 = sadd.s32 1, %s792
            $region274: #{decoder_forward.1} parent=267 // loop_footer_branch
              %791 = sbr.rel target = $region270
            $region275: #{decoder_forward.1} parent=267 // loop_exit
              _
          $region268: #{decoder_forward.1} parent=79 // pred_fallthru
            _
          // Predicated region
          $region287: #{decoder_forward.1} parent=79 // pred_check
            _
          $region288: #{decoder_forward.1} parent=79 // pred_check_branch
            %824 = sbr.rel (0) target = $region290
          $region289: #{decoder_forward.1} parent=79 // pred_region
            %825 = vsyncadd %s781, 16
          $region290: #{decoder_forward.1} parent=79 // pred_fallthru
            _
          %s826 = sld [smem:[#allocation6 + $0x7]]
          %s827 = scalar_lea.vmem %s4, %s826
          %s828 = scalar_lea.vmem [#allocation2], 7
          %s829 = scalar_lea.sflag [#allocation4], 7
          %p831 = scmp.lt.u32.totalorder 1, 8
          %p832 = pneg %p831
          // Predicated region
          $region291: #{decoder_forward.1} parent=79 // pred_check
            _
          $region292: #{decoder_forward.1} parent=79 // pred_check_branch
            %834 = sbr.rel (%p831) target = $region294
          $region293: #{decoder_forward.1} parent=79 // pred_region
            %s849 = sand.u32 1, 7
            %p850 = scmp.eq.s32.totalorder %s849, 0
            %p851 = pneg %p850
            // Predicated region
            $region306: #{decoder_forward.1} parent=293 // pred_check
              _
            $region307: #{decoder_forward.1} parent=293 // pred_check_branch
              %853 = sbr.rel (%p850) target = $region309
            $region308: #{decoder_forward.1} parent=293 // pred_region
              %s854 = sand.u32 1, 7
              %s855 = ssub.s32 1, %s854
              %s856 = scalar_lea.vmem %s827, %s855
              %s857 = ssub.s32 1, %s854
              %s858 = scalar_lea.vmem %s828, %s857 [#allocation2]
              %s859 = sshllo.u32 0, %s854
              loop: start=0, step=1, limit=1
              $region310: #{decoder_forward.1} parent=308 // loop_pre_header
                _
              $region311: #{decoder_forward.1} parent=308 // loop_header
                %s861 = sphi 0, %s865
                %p862 = scmp.ge.s32.totalorder %s861, 1
                %s866 = sphi %s856, %s856
                %s867 = sphi %s858, %s858
              $region312: #{decoder_forward.1} parent=308 // loop_header_branch
                %864 = sbr.rel (%p862) target = $region316
              $region313: #{decoder_forward.1} parent=308 // loop_body
                %v868 = vld [vmem:[%s866] sm:%s859]
                %869 = vst [vmem:[%s867] sm:%s859] %v868
              $region314: #{decoder_forward.1} parent=308 // loop_footer
                %s865 = sadd.s32 1, %s861
              $region315: #{decoder_forward.1} parent=308 // loop_footer_branch
                %860 = sbr.rel target = $region311
              $region316: #{decoder_forward.1} parent=308 // loop_exit
                _
            $region309: #{decoder_forward.1} parent=293 // pred_fallthru
              _
          $region294: #{decoder_forward.1} parent=79 // pred_fallthru
            _
          // Predicated region
          $region295: #{decoder_forward.1} parent=79 // pred_check
            %p835 = pneg %p831
          $region296: #{decoder_forward.1} parent=79 // pred_check_branch
            %837 = sbr.rel (%p835) target = $region298
          $region297: #{decoder_forward.1} parent=79 // pred_region
            %s838 = sshllo.u32 0, 1
            loop: start=0, step=1, limit=1
            $region299: #{decoder_forward.1} parent=297 // loop_pre_header
              _
            $region300: #{decoder_forward.1} parent=297 // loop_header
              %s840 = sphi 0, %s844
              %p841 = scmp.ge.s32.totalorder %s840, 1
              %s845 = sphi %s827, %s827
              %s846 = sphi %s828, %s828
            $region301: #{decoder_forward.1} parent=297 // loop_header_branch
              %843 = sbr.rel (%p841) target = $region305
            $region302: #{decoder_forward.1} parent=297 // loop_body
              %v847 = vld [vmem:[%s845] sm:%s838]
              %848 = vst [vmem:[%s846] sm:%s838] %v847
            $region303: #{decoder_forward.1} parent=297 // loop_footer
              %s844 = sadd.s32 1, %s840
            $region304: #{decoder_forward.1} parent=297 // loop_footer_branch
              %839 = sbr.rel target = $region300
            $region305: #{decoder_forward.1} parent=297 // loop_exit
              _
          $region298: #{decoder_forward.1} parent=79 // pred_fallthru
            _
          // Predicated region
          $region317: #{decoder_forward.1} parent=79 // pred_check
            _
          $region318: #{decoder_forward.1} parent=79 // pred_check_branch
            %872 = sbr.rel (0) target = $region320
          $region319: #{decoder_forward.1} parent=79 // pred_region
            %873 = vsyncadd %s829, 16
          $region320: #{decoder_forward.1} parent=79 // pred_fallthru
            _
          %s874 = smul.u32 1, 1
          %s875 = sshll.u32 %s874, 4
          %876 = dma.done [#allocation4], %s875
          %s877 = sshll.u32 %s874, 4
          %878 = dma.done %s541, %s877
          %s879 = sshll.u32 %s874, 4
          %880 = dma.done %s589, %s879
          %s881 = sshll.u32 %s874, 4
          %882 = dma.done %s637, %s881
          %s883 = sshll.u32 %s874, 4
          %884 = dma.done %s685, %s883
          %s885 = sshll.u32 %s874, 4
          %886 = dma.done %s733, %s885
          %s887 = sshll.u32 %s874, 4
          %888 = dma.done %s781, %s887
          %s889 = sshll.u32 %s874, 4
          %890 = dma.done %s829, %s889
          %v891 = vld [vmem:[#allocation2] sm:$0xff]
          %v892 = vld [vmem:[%s1] sm:$0xff]
          %v893 = vld [vmem:[%s1 + $0x8] sm:$0xff]
          %v894 = vld [vmem:[%s2] sm:$0xff]
          %v895 = vld [vmem:[%s2 + $0x8] sm:$0xff]
          %v896 = vpack.c.bf16 %v891, %v891
          %v897 = vpack.c.bf16 %v892, %v892
          %v898 = vpack.c.bf16 %v893, %v893
          %v899 = vld [vmem:[#allocation7] sm:$0xff]
          %v900 = vld [vmem:[#allocation7 + $0x8] sm:$0xff]
          %v901 = vld [vmem:[#allocation7 + $0x10] sm:$0xff]
          %v902 = vld [vmem:[#allocation7 + $0x18] sm:$0xff]
          %v903 = vld [vmem:[#allocation7 + $0x20] sm:$0xff]
          %v904 = vld [vmem:[#allocation7 + $0x28] sm:$0xff]
          %v905 = vld [vmem:[#allocation7 + $0x30] sm:$0xff]
          %v906 = vld [vmem:[#allocation7 + $0x38] sm:$0xff]
          %v907 = vld [vmem:[#allocation7 + $0x40] sm:$0xff]
          %v908 = vld [vmem:[#allocation7 + $0x48] sm:$0xff]
          %v909 = vld [vmem:[#allocation7 + $0x50] sm:$0xff]
          %v910 = vld [vmem:[#allocation7 + $0x58] sm:$0xff]
          %v911 = vld [vmem:[#allocation7 + $0x60] sm:$0xff]
          %v912 = vld [vmem:[#allocation7 + $0x68] sm:$0xff]
          %v913 = vld [vmem:[#allocation7 + $0x70] sm:$0xff]
          %v914 = vld [vmem:[#allocation7 + $0x78] sm:$0xff]
          %v915 = vld [vmem:[#allocation7 + $0x80] sm:$0xff]
          %v916 = vld [vmem:[#allocation7 + $0x88] sm:$0xff]
          %v917 = vld [vmem:[#allocation7 + $0x90] sm:$0xff]
          %v918 = vld [vmem:[#allocation7 + $0x98] sm:$0xff]
          %v919 = vld [vmem:[#allocation7 + $0xa0] sm:$0xff]
          %v920 = vld [vmem:[#allocation7 + $0xa8] sm:$0xff]
          %v921 = vld [vmem:[#allocation7 + $0xb0] sm:$0xff]
          %v922 = vld [vmem:[#allocation7 + $0xb8] sm:$0xff]
          %v923 = vld [vmem:[#allocation7 + $0xc0] sm:$0xff]
          %v924 = vld [vmem:[#allocation7 + $0xc8] sm:$0xff]
          %v925 = vld [vmem:[#allocation7 + $0xd0] sm:$0xff]
          %v926 = vld [vmem:[#allocation7 + $0xd8] sm:$0xff]
          %v927 = vld [vmem:[#allocation7 + $0xe0] sm:$0xff]
          %v928 = vld [vmem:[#allocation7 + $0xe8] sm:$0xff]
          %v929 = vld [vmem:[#allocation7 + $0xf0] sm:$0xff]
          %v930 = vld [vmem:[#allocation7 + $0xf8] sm:$0xff]
          %v931 = vld [vmem:[#allocation7 + $0x100] sm:$0xff]
          %v932 = vld [vmem:[#allocation7 + $0x108] sm:$0xff]
          %v933 = vld [vmem:[#allocation7 + $0x110] sm:$0xff]
          %v934 = vld [vmem:[#allocation7 + $0x118] sm:$0xff]
          %v935 = vld [vmem:[#allocation7 + $0x120] sm:$0xff]
          %v936 = vld [vmem:[#allocation7 + $0x128] sm:$0xff]
          %v937 = vld [vmem:[#allocation7 + $0x130] sm:$0xff]
          %v938 = vld [vmem:[#allocation7 + $0x138] sm:$0xff]
          %v939 = vld [vmem:[#allocation7 + $0x140] sm:$0xff]
          %v940 = vld [vmem:[#allocation7 + $0x148] sm:$0xff]
          %v941 = vld [vmem:[#allocation7 + $0x150] sm:$0xff]
          %v942 = vld [vmem:[#allocation7 + $0x158] sm:$0xff]
          %v943 = vld [vmem:[#allocation7 + $0x160] sm:$0xff]
          %v944 = vld [vmem:[#allocation7 + $0x168] sm:$0xff]
          %v945 = vld [vmem:[#allocation7 + $0x170] sm:$0xff]
          %v946 = vld [vmem:[#allocation7 + $0x178] sm:$0xff]
          %v947 = vld [vmem:[#allocation7 + $0x180] sm:$0xff]
          %v948 = vld [vmem:[#allocation7 + $0x188] sm:$0xff]
          %v949 = vld [vmem:[#allocation7 + $0x190] sm:$0xff]
          %v950 = vld [vmem:[#allocation7 + $0x198] sm:$0xff]
          %v951 = vld [vmem:[#allocation7 + $0x1a0] sm:$0xff]
          %v952 = vld [vmem:[#allocation7 + $0x1a8] sm:$0xff]
          %v953 = vld [vmem:[#allocation7 + $0x1b0] sm:$0xff]
          %v954 = vld [vmem:[#allocation7 + $0x1b8] sm:$0xff]
          %v955 = vld [vmem:[#allocation7 + $0x1c0] sm:$0xff]
          %v956 = vld [vmem:[#allocation7 + $0x1c8] sm:$0xff]
          %v957 = vld [vmem:[#allocation7 + $0x1d0] sm:$0xff]
          %v958 = vld [vmem:[#allocation7 + $0x1d8] sm:$0xff]
          %v959 = vld [vmem:[#allocation7 + $0x1e0] sm:$0xff]
          %v960 = vld [vmem:[#allocation7 + $0x1e8] sm:$0xff]
          %v961 = vld [vmem:[#allocation7 + $0x1f0] sm:$0xff]
          %v962 = vld [vmem:[#allocation7 + $0x1f8] sm:$0xff]
          %v963 = vld [vmem:[#allocation7 + $0x200] sm:$0xff]
          %v964 = vld [vmem:[#allocation7 + $0x208] sm:$0xff]
          %v965 = vld [vmem:[#allocation7 + $0x210] sm:$0xff]
          %v966 = vld [vmem:[#allocation7 + $0x218] sm:$0xff]
          %v967 = vld [vmem:[#allocation7 + $0x220] sm:$0xff]
          %v968 = vld [vmem:[#allocation7 + $0x228] sm:$0xff]
          %v969 = vld [vmem:[#allocation7 + $0x230] sm:$0xff]
          %v970 = vld [vmem:[#allocation7 + $0x238] sm:$0xff]
          %v971 = vld [vmem:[#allocation7 + $0x240] sm:$0xff]
          %v972 = vld [vmem:[#allocation7 + $0x248] sm:$0xff]
          %v973 = vld [vmem:[#allocation7 + $0x250] sm:$0xff]
          %v974 = vld [vmem:[#allocation7 + $0x258] sm:$0xff]
          %v975 = vld [vmem:[#allocation7 + $0x260] sm:$0xff]
          %v976 = vld [vmem:[#allocation7 + $0x268] sm:$0xff]
          %v977 = vld [vmem:[#allocation7 + $0x270] sm:$0xff]
          %v978 = vld [vmem:[#allocation7 + $0x278] sm:$0xff]
          %v979 = vld [vmem:[#allocation7 + $0x280] sm:$0xff]
          %v980 = vld [vmem:[#allocation7 + $0x288] sm:$0xff]
          %v981 = vld [vmem:[#allocation7 + $0x290] sm:$0xff]
          %v982 = vld [vmem:[#allocation7 + $0x298] sm:$0xff]
          %v983 = vld [vmem:[#allocation7 + $0x2a0] sm:$0xff]
          %v984 = vld [vmem:[#allocation7 + $0x2a8] sm:$0xff]
          %v985 = vld [vmem:[#allocation7 + $0x2b0] sm:$0xff]
          %v986 = vld [vmem:[#allocation7 + $0x2b8] sm:$0xff]
          %v987 = vld [vmem:[#allocation7 + $0x2c0] sm:$0xff]
          %v988 = vld [vmem:[#allocation7 + $0x2c8] sm:$0xff]
          %v989 = vld [vmem:[#allocation7 + $0x2d0] sm:$0xff]
          %v990 = vld [vmem:[#allocation7 + $0x2d8] sm:$0xff]
          %v991 = vld [vmem:[#allocation7 + $0x2e0] sm:$0xff]
          %v992 = vld [vmem:[#allocation7 + $0x2e8] sm:$0xff]
          %v993 = vld [vmem:[#allocation7 + $0x2f0] sm:$0xff]
          %v994 = vld [vmem:[#allocation7 + $0x2f8] sm:$0xff]
          %v995 = vld [vmem:[#allocation7 + $0x300] sm:$0xff]
          %v996 = vld [vmem:[#allocation7 + $0x308] sm:$0xff]
          %v997 = vld [vmem:[#allocation7 + $0x310] sm:$0xff]
          %v998 = vld [vmem:[#allocation7 + $0x318] sm:$0xff]
          %v999 = vld [vmem:[#allocation7 + $0x320] sm:$0xff]
          %v1000 = vld [vmem:[#allocation7 + $0x328] sm:$0xff]
          %v1001 = vld [vmem:[#allocation7 + $0x330] sm:$0xff]
          %v1002 = vld [vmem:[#allocation7 + $0x338] sm:$0xff]
          %v1003 = vld [vmem:[#allocation7 + $0x340] sm:$0xff]
          %v1004 = vld [vmem:[#allocation7 + $0x348] sm:$0xff]
          %v1005 = vld [vmem:[#allocation7 + $0x350] sm:$0xff]
          %v1006 = vld [vmem:[#allocation7 + $0x358] sm:$0xff]
          %v1007 = vld [vmem:[#allocation7 + $0x360] sm:$0xff]
          %v1008 = vld [vmem:[#allocation7 + $0x368] sm:$0xff]
          %v1009 = vld [vmem:[#allocation7 + $0x370] sm:$0xff]
          %v1010 = vld [vmem:[#allocation7 + $0x378] sm:$0xff]
          %v1011 = vld [vmem:[#allocation7 + $0x380] sm:$0xff]
          %v1012 = vld [vmem:[#allocation7 + $0x388] sm:$0xff]
          %v1013 = vld [vmem:[#allocation7 + $0x390] sm:$0xff]
          %v1014 = vld [vmem:[#allocation7 + $0x398] sm:$0xff]
          %v1015 = vld [vmem:[#allocation7 + $0x3a0] sm:$0xff]
          %v1016 = vld [vmem:[#allocation7 + $0x3a8] sm:$0xff]
          %v1017 = vld [vmem:[#allocation7 + $0x3b0] sm:$0xff]
          %v1018 = vld [vmem:[#allocation7 + $0x3b8] sm:$0xff]
          %v1019 = vld [vmem:[#allocation7 + $0x3c0] sm:$0xff]
          %v1020 = vld [vmem:[#allocation7 + $0x3c8] sm:$0xff]
          %v1021 = vld [vmem:[#allocation7 + $0x3d0] sm:$0xff]
          %v1022 = vld [vmem:[#allocation7 + $0x3d8] sm:$0xff]
          %v1023 = vld [vmem:[#allocation7 + $0x3e0] sm:$0xff]
          %v1024 = vld [vmem:[#allocation7 + $0x3e8] sm:$0xff]
          %v1025 = vld [vmem:[#allocation7 + $0x3f0] sm:$0xff]
          %v1026 = vld [vmem:[#allocation7 + $0x3f8] sm:$0xff]
          %v1027 = vld [vmem:[#allocation7 + $0x400] sm:$0xff]
          %v1028 = vld [vmem:[#allocation7 + $0x408] sm:$0xff]
          %v1029 = vld [vmem:[#allocation7 + $0x410] sm:$0xff]
          %v1030 = vld [vmem:[#allocation7 + $0x418] sm:$0xff]
          %v1031 = vld [vmem:[#allocation7 + $0x420] sm:$0xff]
          %v1032 = vld [vmem:[#allocation7 + $0x428] sm:$0xff]
          %v1033 = vld [vmem:[#allocation7 + $0x430] sm:$0xff]
          %v1034 = vld [vmem:[#allocation7 + $0x438] sm:$0xff]
          %v1035 = vld [vmem:[#allocation7 + $0x440] sm:$0xff]
          %v1036 = vld [vmem:[#allocation7 + $0x448] sm:$0xff]
          %v1037 = vld [vmem:[#allocation7 + $0x450] sm:$0xff]
          %v1038 = vld [vmem:[#allocation7 + $0x458] sm:$0xff]
          %v1039 = vld [vmem:[#allocation7 + $0x460] sm:$0xff]
          %v1040 = vld [vmem:[#allocation7 + $0x468] sm:$0xff]
          %v1041 = vld [vmem:[#allocation7 + $0x470] sm:$0xff]
          %v1042 = vld [vmem:[#allocation7 + $0x478] sm:$0xff]
          %v1043 = vld [vmem:[#allocation7 + $0x480] sm:$0xff]
          %v1044 = vld [vmem:[#allocation7 + $0x488] sm:$0xff]
          %v1045 = vld [vmem:[#allocation7 + $0x490] sm:$0xff]
          %v1046 = vld [vmem:[#allocation7 + $0x498] sm:$0xff]
          %v1047 = vld [vmem:[#allocation7 + $0x4a0] sm:$0xff]
          %v1048 = vld [vmem:[#allocation7 + $0x4a8] sm:$0xff]
          %v1049 = vld [vmem:[#allocation7 + $0x4b0] sm:$0xff]
          %v1050 = vld [vmem:[#allocation7 + $0x4b8] sm:$0xff]
          %v1051 = vld [vmem:[#allocation7 + $0x4c0] sm:$0xff]
          %v1052 = vld [vmem:[#allocation7 + $0x4c8] sm:$0xff]
          %v1053 = vld [vmem:[#allocation7 + $0x4d0] sm:$0xff]
          %v1054 = vld [vmem:[#allocation7 + $0x4d8] sm:$0xff]
          %v1055 = vld [vmem:[#allocation7 + $0x4e0] sm:$0xff]
          %v1056 = vld [vmem:[#allocation7 + $0x4e8] sm:$0xff]
          %v1057 = vld [vmem:[#allocation7 + $0x4f0] sm:$0xff]
          %v1058 = vld [vmem:[#allocation7 + $0x4f8] sm:$0xff]
          %v1059 = vld [vmem:[#allocation7 + $0x500] sm:$0xff]
          %v1060 = vld [vmem:[#allocation7 + $0x508] sm:$0xff]
          %v1061 = vld [vmem:[#allocation7 + $0x510] sm:$0xff]
          %v1062 = vld [vmem:[#allocation7 + $0x518] sm:$0xff]
          %v1063 = vld [vmem:[#allocation7 + $0x520] sm:$0xff]
          %v1064 = vld [vmem:[#allocation7 + $0x528] sm:$0xff]
          %v1065 = vld [vmem:[#allocation7 + $0x530] sm:$0xff]
          %v1066 = vld [vmem:[#allocation7 + $0x538] sm:$0xff]
          %v1067 = vld [vmem:[#allocation7 + $0x540] sm:$0xff]
          %v1068 = vld [vmem:[#allocation7 + $0x548] sm:$0xff]
          %v1069 = vld [vmem:[#allocation7 + $0x550] sm:$0xff]
          %v1070 = vld [vmem:[#allocation7 + $0x558] sm:$0xff]
          %v1071 = vld [vmem:[#allocation7 + $0x560] sm:$0xff]
          %v1072 = vld [vmem:[#allocation7 + $0x568] sm:$0xff]
          %v1073 = vld [vmem:[#allocation7 + $0x570] sm:$0xff]
          %v1074 = vld [vmem:[#allocation7 + $0x578] sm:$0xff]
          %v1075 = vld [vmem:[#allocation7 + $0x580] sm:$0xff]
          %v1076 = vld [vmem:[#allocation7 + $0x588] sm:$0xff]
          %v1077 = vld [vmem:[#allocation7 + $0x590] sm:$0xff]
          %v1078 = vld [vmem:[#allocation7 + $0x598] sm:$0xff]
          %v1079 = vld [vmem:[#allocation7 + $0x5a0] sm:$0xff]
          %v1080 = vld [vmem:[#allocation7 + $0x5a8] sm:$0xff]
          %v1081 = vld [vmem:[#allocation7 + $0x5b0] sm:$0xff]
          %v1082 = vld [vmem:[#allocation7 + $0x5b8] sm:$0xff]
          %v1083 = vld [vmem:[#allocation7 + $0x5c0] sm:$0xff]
          %v1084 = vld [vmem:[#allocation7 + $0x5c8] sm:$0xff]
          %v1085 = vld [vmem:[#allocation7 + $0x5d0] sm:$0xff]
          %v1086 = vld [vmem:[#allocation7 + $0x5d8] sm:$0xff]
          %v1087 = vld [vmem:[#allocation7 + $0x5e0] sm:$0xff]
          %v1088 = vld [vmem:[#allocation7 + $0x5e8] sm:$0xff]
          %v1089 = vld [vmem:[#allocation7 + $0x5f0] sm:$0xff]
          %v1090 = vld [vmem:[#allocation7 + $0x5f8] sm:$0xff]
          %v1091 = vld [vmem:[#allocation10] sm:$0xff]
          %v1093 = vlaneseq
          %v1094 = vshrl.u32 %v1093, 7
          %v1095 = vsub.s32 0, %v1094
          %v1096 = vrot.slane %v1091, %v1095
          %v1097 = vlaneseq
          %v1098 = vshrl.u32 %v1097, 7
          %v1099 = vsub.s32 1, %v1098
          %v1100 = vrot.slane %v1091, %v1099
          %v1101 = vlaneseq
          %v1102 = vshrl.u32 %v1101, 7
          %v1103 = vsub.s32 2, %v1102
          %v1104 = vrot.slane %v1091, %v1103
          %v1105 = vlaneseq
          %v1106 = vshrl.u32 %v1105, 7
          %v1107 = vsub.s32 3, %v1106
          %v1108 = vrot.slane %v1091, %v1107
          %v1109 = vlaneseq
          %v1110 = vshrl.u32 %v1109, 7
          %v1111 = vsub.s32 4, %v1110
          %v1112 = vrot.slane %v1091, %v1111
          %v1113 = vlaneseq
          %v1114 = vshrl.u32 %v1113, 7
          %v1115 = vsub.s32 5, %v1114
          %v1116 = vrot.slane %v1091, %v1115
          %v1117 = vlaneseq
          %v1118 = vshrl.u32 %v1117, 7
          %v1119 = vsub.s32 6, %v1118
          %v1120 = vrot.slane %v1091, %v1119
          %v1121 = vlaneseq
          %v1122 = vshrl.u32 %v1121, 7
          %v1123 = vsub.s32 7, %v1122
          %v1124 = vrot.slane %v1091, %v1123
          %v1325 = vunpack.c.l.b16 %v899
          %v1326 = vunpack.c.h.b16 %v899
          %v1327 = vunpack.c.l.b16 %v900
          %v1328 = vunpack.c.h.b16 %v900
          %v1329 = vunpack.c.l.b16 %v901
          %v1330 = vunpack.c.h.b16 %v901
          %v1331 = vunpack.c.l.b16 %v902
          %v1332 = vunpack.c.h.b16 %v902
          %v1333 = vunpack.c.l.b16 %v903
          %v1334 = vunpack.c.h.b16 %v903
          %v1335 = vunpack.c.l.b16 %v904
          %v1336 = vunpack.c.h.b16 %v904
          %v1337 = vunpack.c.l.b16 %v905
          %v1338 = vunpack.c.h.b16 %v905
          %v1339 = vunpack.c.l.b16 %v906
          %v1340 = vunpack.c.h.b16 %v906
          %v1341 = vunpack.c.l.b16 %v907
          %v1342 = vunpack.c.h.b16 %v907
          %v1343 = vunpack.c.l.b16 %v908
          %v1344 = vunpack.c.h.b16 %v908
          %v1345 = vunpack.c.l.b16 %v909
          %v1346 = vunpack.c.h.b16 %v909
          %v1347 = vunpack.c.l.b16 %v910
          %v1348 = vunpack.c.h.b16 %v910
          %v1349 = vunpack.c.l.b16 %v911
          %v1350 = vunpack.c.h.b16 %v911
          %v1351 = vunpack.c.l.b16 %v912
          %v1352 = vunpack.c.h.b16 %v912
          %v1353 = vunpack.c.l.b16 %v913
          %v1354 = vunpack.c.h.b16 %v913
          %v1355 = vunpack.c.l.b16 %v914
          %v1356 = vunpack.c.h.b16 %v914
          %v1357 = vunpack.c.l.b16 %v915
          %v1358 = vunpack.c.h.b16 %v915
          %v1359 = vunpack.c.l.b16 %v916
          %v1360 = vunpack.c.h.b16 %v916
          %v1361 = vunpack.c.l.b16 %v917
          %v1362 = vunpack.c.h.b16 %v917
          %v1363 = vunpack.c.l.b16 %v918
          %v1364 = vunpack.c.h.b16 %v918
          %v1365 = vunpack.c.l.b16 %v919
          %v1366 = vunpack.c.h.b16 %v919
          %v1367 = vunpack.c.l.b16 %v920
          %v1368 = vunpack.c.h.b16 %v920
          %v1369 = vunpack.c.l.b16 %v921
          %v1370 = vunpack.c.h.b16 %v921
          %v1371 = vunpack.c.l.b16 %v922
          %v1372 = vunpack.c.h.b16 %v922
          %v1373 = vunpack.c.l.b16 %v923
          %v1374 = vunpack.c.h.b16 %v923
          %v1375 = vunpack.c.l.b16 %v924
          %v1376 = vunpack.c.h.b16 %v924
          %v1377 = vunpack.c.l.b16 %v925
          %v1378 = vunpack.c.h.b16 %v925
          %v1379 = vunpack.c.l.b16 %v926
          %v1380 = vunpack.c.h.b16 %v926
          %v1381 = vunpack.c.l.b16 %v927
          %v1382 = vunpack.c.h.b16 %v927
          %v1383 = vunpack.c.l.b16 %v928
          %v1384 = vunpack.c.h.b16 %v928
          %v1385 = vunpack.c.l.b16 %v929
          %v1386 = vunpack.c.h.b16 %v929
          %v1387 = vunpack.c.l.b16 %v930
          %v1388 = vunpack.c.h.b16 %v930
          %v1389 = vunpack.c.l.b16 %v931
          %v1390 = vunpack.c.h.b16 %v931
          %v1391 = vunpack.c.l.b16 %v932
          %v1392 = vunpack.c.h.b16 %v932
          %v1393 = vunpack.c.l.b16 %v933
          %v1394 = vunpack.c.h.b16 %v933
          %v1395 = vunpack.c.l.b16 %v934
          %v1396 = vunpack.c.h.b16 %v934
          %v1397 = vunpack.c.l.b16 %v935
          %v1398 = vunpack.c.h.b16 %v935
          %v1399 = vunpack.c.l.b16 %v936
          %v1400 = vunpack.c.h.b16 %v936
          %v1401 = vunpack.c.l.b16 %v937
          %v1402 = vunpack.c.h.b16 %v937
          %v1403 = vunpack.c.l.b16 %v938
          %v1404 = vunpack.c.h.b16 %v938
          %v1405 = vunpack.c.l.b16 %v939
          %v1406 = vunpack.c.h.b16 %v939
          %v1407 = vunpack.c.l.b16 %v940
          %v1408 = vunpack.c.h.b16 %v940
          %v1409 = vunpack.c.l.b16 %v941
          %v1410 = vunpack.c.h.b16 %v941
          %v1411 = vunpack.c.l.b16 %v942
          %v1412 = vunpack.c.h.b16 %v942
          %v1413 = vunpack.c.l.b16 %v943
          %v1414 = vunpack.c.h.b16 %v943
          %v1415 = vunpack.c.l.b16 %v944
          %v1416 = vunpack.c.h.b16 %v944
          %v1417 = vunpack.c.l.b16 %v945
          %v1418 = vunpack.c.h.b16 %v945
          %v1419 = vunpack.c.l.b16 %v946
          %v1420 = vunpack.c.h.b16 %v946
          %v1421 = vunpack.c.l.b16 %v947
          %v1422 = vunpack.c.h.b16 %v947
          %v1423 = vunpack.c.l.b16 %v948
          %v1424 = vunpack.c.h.b16 %v948
          %v1425 = vunpack.c.l.b16 %v949
          %v1426 = vunpack.c.h.b16 %v949
          %v1427 = vunpack.c.l.b16 %v950
          %v1428 = vunpack.c.h.b16 %v950
          %v1429 = vunpack.c.l.b16 %v951
          %v1430 = vunpack.c.h.b16 %v951
          %v1431 = vunpack.c.l.b16 %v952
          %v1432 = vunpack.c.h.b16 %v952
          %v1433 = vunpack.c.l.b16 %v953
          %v1434 = vunpack.c.h.b16 %v953
          %v1435 = vunpack.c.l.b16 %v954
          %v1436 = vunpack.c.h.b16 %v954
          %v1437 = vunpack.c.l.b16 %v955
          %v1438 = vunpack.c.h.b16 %v955
          %v1439 = vunpack.c.l.b16 %v956
          %v1440 = vunpack.c.h.b16 %v956
          %v1441 = vunpack.c.l.b16 %v957
          %v1442 = vunpack.c.h.b16 %v957
          %v1443 = vunpack.c.l.b16 %v958
          %v1444 = vunpack.c.h.b16 %v958
          %v1445 = vunpack.c.l.b16 %v959
          %v1446 = vunpack.c.h.b16 %v959
          %v1447 = vunpack.c.l.b16 %v960
          %v1448 = vunpack.c.h.b16 %v960
          %v1449 = vunpack.c.l.b16 %v961
          %v1450 = vunpack.c.h.b16 %v961
          %v1451 = vunpack.c.l.b16 %v962
          %v1452 = vunpack.c.h.b16 %v962
          %v1453 = vunpack.c.l.b16 %v963
          %v1454 = vunpack.c.h.b16 %v963
          %v1455 = vunpack.c.l.b16 %v964
          %v1456 = vunpack.c.h.b16 %v964
          %v1457 = vunpack.c.l.b16 %v965
          %v1458 = vunpack.c.h.b16 %v965
          %v1459 = vunpack.c.l.b16 %v966
          %v1460 = vunpack.c.h.b16 %v966
          %v1461 = vunpack.c.l.b16 %v967
          %v1462 = vunpack.c.h.b16 %v967
          %v1463 = vunpack.c.l.b16 %v968
          %v1464 = vunpack.c.h.b16 %v968
          %v1465 = vunpack.c.l.b16 %v969
          %v1466 = vunpack.c.h.b16 %v969
          %v1467 = vunpack.c.l.b16 %v970
          %v1468 = vunpack.c.h.b16 %v970
          %v1469 = vunpack.c.l.b16 %v971
          %v1470 = vunpack.c.h.b16 %v971
          %v1471 = vunpack.c.l.b16 %v972
          %v1472 = vunpack.c.h.b16 %v972
          %v1473 = vunpack.c.l.b16 %v973
          %v1474 = vunpack.c.h.b16 %v973
          %v1475 = vunpack.c.l.b16 %v974
          %v1476 = vunpack.c.h.b16 %v974
          %v1477 = vunpack.c.l.b16 %v975
          %v1478 = vunpack.c.h.b16 %v975
          %v1479 = vunpack.c.l.b16 %v976
          %v1480 = vunpack.c.h.b16 %v976
          %v1481 = vunpack.c.l.b16 %v977
          %v1482 = vunpack.c.h.b16 %v977
          %v1483 = vunpack.c.l.b16 %v978
          %v1484 = vunpack.c.h.b16 %v978
          %v1485 = vunpack.c.l.b16 %v979
          %v1486 = vunpack.c.h.b16 %v979
          %v1487 = vunpack.c.l.b16 %v980
          %v1488 = vunpack.c.h.b16 %v980
          %v1489 = vunpack.c.l.b16 %v981
          %v1490 = vunpack.c.h.b16 %v981
          %v1491 = vunpack.c.l.b16 %v982
          %v1492 = vunpack.c.h.b16 %v982
          %v1493 = vunpack.c.l.b16 %v983
          %v1494 = vunpack.c.h.b16 %v983
          %v1495 = vunpack.c.l.b16 %v984
          %v1496 = vunpack.c.h.b16 %v984
          %v1497 = vunpack.c.l.b16 %v985
          %v1498 = vunpack.c.h.b16 %v985
          %v1499 = vunpack.c.l.b16 %v986
          %v1500 = vunpack.c.h.b16 %v986
          %v1501 = vunpack.c.l.b16 %v987
          %v1502 = vunpack.c.h.b16 %v987
          %v1503 = vunpack.c.l.b16 %v988
          %v1504 = vunpack.c.h.b16 %v988
          %v1505 = vunpack.c.l.b16 %v989
          %v1506 = vunpack.c.h.b16 %v989
          %v1507 = vunpack.c.l.b16 %v990
          %v1508 = vunpack.c.h.b16 %v990
          %v1509 = vunpack.c.l.b16 %v991
          %v1510 = vunpack.c.h.b16 %v991
          %v1511 = vunpack.c.l.b16 %v992
          %v1512 = vunpack.c.h.b16 %v992
          %v1513 = vunpack.c.l.b16 %v993
          %v1514 = vunpack.c.h.b16 %v993
          %v1515 = vunpack.c.l.b16 %v994
          %v1516 = vunpack.c.h.b16 %v994
          %v1517 = vunpack.c.l.b16 %v995
          %v1518 = vunpack.c.h.b16 %v995
          %v1519 = vunpack.c.l.b16 %v996
          %v1520 = vunpack.c.h.b16 %v996
          %v1521 = vunpack.c.l.b16 %v997
          %v1522 = vunpack.c.h.b16 %v997
          %v1523 = vunpack.c.l.b16 %v998
          %v1524 = vunpack.c.h.b16 %v998
          %v1525 = vunpack.c.l.b16 %v999
          %v1526 = vunpack.c.h.b16 %v999
          %v1527 = vunpack.c.l.b16 %v1000
          %v1528 = vunpack.c.h.b16 %v1000
          %v1529 = vunpack.c.l.b16 %v1001
          %v1530 = vunpack.c.h.b16 %v1001
          %v1531 = vunpack.c.l.b16 %v1002
          %v1532 = vunpack.c.h.b16 %v1002
          %v1533 = vunpack.c.l.b16 %v1003
          %v1534 = vunpack.c.h.b16 %v1003
          %v1535 = vunpack.c.l.b16 %v1004
          %v1536 = vunpack.c.h.b16 %v1004
          %v1537 = vunpack.c.l.b16 %v1005
          %v1538 = vunpack.c.h.b16 %v1005
          %v1539 = vunpack.c.l.b16 %v1006
          %v1540 = vunpack.c.h.b16 %v1006
          %v1541 = vunpack.c.l.b16 %v1007
          %v1542 = vunpack.c.h.b16 %v1007
          %v1543 = vunpack.c.l.b16 %v1008
          %v1544 = vunpack.c.h.b16 %v1008
          %v1545 = vunpack.c.l.b16 %v1009
          %v1546 = vunpack.c.h.b16 %v1009
          %v1547 = vunpack.c.l.b16 %v1010
          %v1548 = vunpack.c.h.b16 %v1010
          %v1549 = vunpack.c.l.b16 %v1011
          %v1550 = vunpack.c.h.b16 %v1011
          %v1551 = vunpack.c.l.b16 %v1012
          %v1552 = vunpack.c.h.b16 %v1012
          %v1553 = vunpack.c.l.b16 %v1013
          %v1554 = vunpack.c.h.b16 %v1013
          %v1555 = vunpack.c.l.b16 %v1014
          %v1556 = vunpack.c.h.b16 %v1014
          %v1557 = vunpack.c.l.b16 %v1015
          %v1558 = vunpack.c.h.b16 %v1015
          %v1559 = vunpack.c.l.b16 %v1016
          %v1560 = vunpack.c.h.b16 %v1016
          %v1561 = vunpack.c.l.b16 %v1017
          %v1562 = vunpack.c.h.b16 %v1017
          %v1563 = vunpack.c.l.b16 %v1018
          %v1564 = vunpack.c.h.b16 %v1018
          %v1565 = vunpack.c.l.b16 %v1019
          %v1566 = vunpack.c.h.b16 %v1019
          %v1567 = vunpack.c.l.b16 %v1020
          %v1568 = vunpack.c.h.b16 %v1020
          %v1569 = vunpack.c.l.b16 %v1021
          %v1570 = vunpack.c.h.b16 %v1021
          %v1571 = vunpack.c.l.b16 %v1022
          %v1572 = vunpack.c.h.b16 %v1022
          %v1573 = vunpack.c.l.b16 %v1023
          %v1574 = vunpack.c.h.b16 %v1023
          %v1575 = vunpack.c.l.b16 %v1024
          %v1576 = vunpack.c.h.b16 %v1024
          %v1577 = vunpack.c.l.b16 %v1025
          %v1578 = vunpack.c.h.b16 %v1025
          %v1579 = vunpack.c.l.b16 %v1026
          %v1580 = vunpack.c.h.b16 %v1026
          %v1581 = vunpack.c.l.b16 %v1027
          %v1582 = vunpack.c.h.b16 %v1027
          %v1583 = vunpack.c.l.b16 %v1028
          %v1584 = vunpack.c.h.b16 %v1028
          %v1585 = vunpack.c.l.b16 %v1029
          %v1586 = vunpack.c.h.b16 %v1029
          %v1587 = vunpack.c.l.b16 %v1030
          %v1588 = vunpack.c.h.b16 %v1030
          %v1589 = vunpack.c.l.b16 %v1031
          %v1590 = vunpack.c.h.b16 %v1031
          %v1591 = vunpack.c.l.b16 %v1032
          %v1592 = vunpack.c.h.b16 %v1032
          %v1593 = vunpack.c.l.b16 %v1033
          %v1594 = vunpack.c.h.b16 %v1033
          %v1595 = vunpack.c.l.b16 %v1034
          %v1596 = vunpack.c.h.b16 %v1034
          %v1597 = vunpack.c.l.b16 %v1035
          %v1598 = vunpack.c.h.b16 %v1035
          %v1599 = vunpack.c.l.b16 %v1036
          %v1600 = vunpack.c.h.b16 %v1036
          %v1601 = vunpack.c.l.b16 %v1037
          %v1602 = vunpack.c.h.b16 %v1037
          %v1603 = vunpack.c.l.b16 %v1038
          %v1604 = vunpack.c.h.b16 %v1038
          %v1605 = vunpack.c.l.b16 %v1039
          %v1606 = vunpack.c.h.b16 %v1039
          %v1607 = vunpack.c.l.b16 %v1040
          %v1608 = vunpack.c.h.b16 %v1040
          %v1609 = vunpack.c.l.b16 %v1041
          %v1610 = vunpack.c.h.b16 %v1041
          %v1611 = vunpack.c.l.b16 %v1042
          %v1612 = vunpack.c.h.b16 %v1042
          %v1613 = vunpack.c.l.b16 %v1043
          %v1614 = vunpack.c.h.b16 %v1043
          %v1615 = vunpack.c.l.b16 %v1044
          %v1616 = vunpack.c.h.b16 %v1044
          %v1617 = vunpack.c.l.b16 %v1045
          %v1618 = vunpack.c.h.b16 %v1045
          %v1619 = vunpack.c.l.b16 %v1046
          %v1620 = vunpack.c.h.b16 %v1046
          %v1621 = vunpack.c.l.b16 %v1047
          %v1622 = vunpack.c.h.b16 %v1047
          %v1623 = vunpack.c.l.b16 %v1048
          %v1624 = vunpack.c.h.b16 %v1048
          %v1625 = vunpack.c.l.b16 %v1049
          %v1626 = vunpack.c.h.b16 %v1049
          %v1627 = vunpack.c.l.b16 %v1050
          %v1628 = vunpack.c.h.b16 %v1050
          %v1629 = vunpack.c.l.b16 %v1051
          %v1630 = vunpack.c.h.b16 %v1051
          %v1631 = vunpack.c.l.b16 %v1052
          %v1632 = vunpack.c.h.b16 %v1052
          %v1633 = vunpack.c.l.b16 %v1053
          %v1634 = vunpack.c.h.b16 %v1053
          %v1635 = vunpack.c.l.b16 %v1054
          %v1636 = vunpack.c.h.b16 %v1054
          %v1637 = vunpack.c.l.b16 %v1055
          %v1638 = vunpack.c.h.b16 %v1055
          %v1639 = vunpack.c.l.b16 %v1056
          %v1640 = vunpack.c.h.b16 %v1056
          %v1641 = vunpack.c.l.b16 %v1057
          %v1642 = vunpack.c.h.b16 %v1057
          %v1643 = vunpack.c.l.b16 %v1058
          %v1644 = vunpack.c.h.b16 %v1058
          %v1645 = vunpack.c.l.b16 %v1059
          %v1646 = vunpack.c.h.b16 %v1059
          %v1647 = vunpack.c.l.b16 %v1060
          %v1648 = vunpack.c.h.b16 %v1060
          %v1649 = vunpack.c.l.b16 %v1061
          %v1650 = vunpack.c.h.b16 %v1061
          %v1651 = vunpack.c.l.b16 %v1062
          %v1652 = vunpack.c.h.b16 %v1062
          %v1653 = vunpack.c.l.b16 %v1063
          %v1654 = vunpack.c.h.b16 %v1063
          %v1655 = vunpack.c.l.b16 %v1064
          %v1656 = vunpack.c.h.b16 %v1064
          %v1657 = vunpack.c.l.b16 %v1065
          %v1658 = vunpack.c.h.b16 %v1065
          %v1659 = vunpack.c.l.b16 %v1066
          %v1660 = vunpack.c.h.b16 %v1066
          %v1661 = vunpack.c.l.b16 %v1067
          %v1662 = vunpack.c.h.b16 %v1067
          %v1663 = vunpack.c.l.b16 %v1068
          %v1664 = vunpack.c.h.b16 %v1068
          %v1665 = vunpack.c.l.b16 %v1069
          %v1666 = vunpack.c.h.b16 %v1069
          %v1667 = vunpack.c.l.b16 %v1070
          %v1668 = vunpack.c.h.b16 %v1070
          %v1669 = vunpack.c.l.b16 %v1071
          %v1670 = vunpack.c.h.b16 %v1071
          %v1671 = vunpack.c.l.b16 %v1072
          %v1672 = vunpack.c.h.b16 %v1072
          %v1673 = vunpack.c.l.b16 %v1073
          %v1674 = vunpack.c.h.b16 %v1073
          %v1675 = vunpack.c.l.b16 %v1074
          %v1676 = vunpack.c.h.b16 %v1074
          %v1677 = vunpack.c.l.b16 %v1075
          %v1678 = vunpack.c.h.b16 %v1075
          %v1679 = vunpack.c.l.b16 %v1076
          %v1680 = vunpack.c.h.b16 %v1076
          %v1681 = vunpack.c.l.b16 %v1077
          %v1682 = vunpack.c.h.b16 %v1077
          %v1683 = vunpack.c.l.b16 %v1078
          %v1684 = vunpack.c.h.b16 %v1078
          %v1685 = vunpack.c.l.b16 %v1079
          %v1686 = vunpack.c.h.b16 %v1079
          %v1687 = vunpack.c.l.b16 %v1080
          %v1688 = vunpack.c.h.b16 %v1080
          %v1689 = vunpack.c.l.b16 %v1081
          %v1690 = vunpack.c.h.b16 %v1081
          %v1691 = vunpack.c.l.b16 %v1082
          %v1692 = vunpack.c.h.b16 %v1082
          %v1693 = vunpack.c.l.b16 %v1083
          %v1694 = vunpack.c.h.b16 %v1083
          %v1695 = vunpack.c.l.b16 %v1084
          %v1696 = vunpack.c.h.b16 %v1084
          %v1697 = vunpack.c.l.b16 %v1085
          %v1698 = vunpack.c.h.b16 %v1085
          %v1699 = vunpack.c.l.b16 %v1086
          %v1700 = vunpack.c.h.b16 %v1086
          %v1701 = vunpack.c.l.b16 %v1087
          %v1702 = vunpack.c.h.b16 %v1087
          %v1703 = vunpack.c.l.b16 %v1088
          %v1704 = vunpack.c.h.b16 %v1088
          %v1705 = vunpack.c.l.b16 %v1089
          %v1706 = vunpack.c.h.b16 %v1089
          %v1707 = vunpack.c.l.b16 %v1090
          %v1708 = vunpack.c.h.b16 %v1090
          %v1709 = vpack.c.b16 %v1333, %v1325
          %v1710 = vpack.c.b16 %v1334, %v1326
          %v1711 = vpack.c.b16 %v1335, %v1327
          %v1712 = vpack.c.b16 %v1336, %v1328
          %v1713 = vpack.c.b16 %v1337, %v1329
          %v1714 = vpack.c.b16 %v1338, %v1330
          %v1715 = vpack.c.b16 %v1339, %v1331
          %v1716 = vpack.c.b16 %v1340, %v1332
          %v1717 = vpack.c.b16 %v1349, %v1341
          %v1718 = vpack.c.b16 %v1350, %v1342
          %v1719 = vpack.c.b16 %v1351, %v1343
          %v1720 = vpack.c.b16 %v1352, %v1344
          %v1721 = vpack.c.b16 %v1353, %v1345
          %v1722 = vpack.c.b16 %v1354, %v1346
          %v1723 = vpack.c.b16 %v1355, %v1347
          %v1724 = vpack.c.b16 %v1356, %v1348
          %v1725 = vpack.c.b16 %v1365, %v1357
          %v1726 = vpack.c.b16 %v1366, %v1358
          %v1727 = vpack.c.b16 %v1367, %v1359
          %v1728 = vpack.c.b16 %v1368, %v1360
          %v1729 = vpack.c.b16 %v1369, %v1361
          %v1730 = vpack.c.b16 %v1370, %v1362
          %v1731 = vpack.c.b16 %v1371, %v1363
          %v1732 = vpack.c.b16 %v1372, %v1364
          %v1733 = vpack.c.b16 %v1381, %v1373
          %v1734 = vpack.c.b16 %v1382, %v1374
          %v1735 = vpack.c.b16 %v1383, %v1375
          %v1736 = vpack.c.b16 %v1384, %v1376
          %v1737 = vpack.c.b16 %v1385, %v1377
          %v1738 = vpack.c.b16 %v1386, %v1378
          %v1739 = vpack.c.b16 %v1387, %v1379
          %v1740 = vpack.c.b16 %v1388, %v1380
          %v1741 = vpack.c.b16 %v1397, %v1389
          %v1742 = vpack.c.b16 %v1398, %v1390
          %v1743 = vpack.c.b16 %v1399, %v1391
          %v1744 = vpack.c.b16 %v1400, %v1392
          %v1745 = vpack.c.b16 %v1401, %v1393
          %v1746 = vpack.c.b16 %v1402, %v1394
          %v1747 = vpack.c.b16 %v1403, %v1395
          %v1748 = vpack.c.b16 %v1404, %v1396
          %v1749 = vpack.c.b16 %v1413, %v1405
          %v1750 = vpack.c.b16 %v1414, %v1406
          %v1751 = vpack.c.b16 %v1415, %v1407
          %v1752 = vpack.c.b16 %v1416, %v1408
          %v1753 = vpack.c.b16 %v1417, %v1409
          %v1754 = vpack.c.b16 %v1418, %v1410
          %v1755 = vpack.c.b16 %v1419, %v1411
          %v1756 = vpack.c.b16 %v1420, %v1412
          %v1757 = vpack.c.b16 %v1429, %v1421
          %v1758 = vpack.c.b16 %v1430, %v1422
          %v1759 = vpack.c.b16 %v1431, %v1423
          %v1760 = vpack.c.b16 %v1432, %v1424
          %v1761 = vpack.c.b16 %v1433, %v1425
          %v1762 = vpack.c.b16 %v1434, %v1426
          %v1763 = vpack.c.b16 %v1435, %v1427
          %v1764 = vpack.c.b16 %v1436, %v1428
          %v1765 = vpack.c.b16 %v1445, %v1437
          %v1766 = vpack.c.b16 %v1446, %v1438
          %v1767 = vpack.c.b16 %v1447, %v1439
          %v1768 = vpack.c.b16 %v1448, %v1440
          %v1769 = vpack.c.b16 %v1449, %v1441
          %v1770 = vpack.c.b16 %v1450, %v1442
          %v1771 = vpack.c.b16 %v1451, %v1443
          %v1772 = vpack.c.b16 %v1452, %v1444
          %v1773 = vpack.c.b16 %v1461, %v1453
          %v1774 = vpack.c.b16 %v1462, %v1454
          %v1775 = vpack.c.b16 %v1463, %v1455
          %v1776 = vpack.c.b16 %v1464, %v1456
          %v1777 = vpack.c.b16 %v1465, %v1457
          %v1778 = vpack.c.b16 %v1466, %v1458
          %v1779 = vpack.c.b16 %v1467, %v1459
          %v1780 = vpack.c.b16 %v1468, %v1460
          %v1781 = vpack.c.b16 %v1477, %v1469
          %v1782 = vpack.c.b16 %v1478, %v1470
          %v1783 = vpack.c.b16 %v1479, %v1471
          %v1784 = vpack.c.b16 %v1480, %v1472
          %v1785 = vpack.c.b16 %v1481, %v1473
          %v1786 = vpack.c.b16 %v1482, %v1474
          %v1787 = vpack.c.b16 %v1483, %v1475
          %v1788 = vpack.c.b16 %v1484, %v1476
          %v1789 = vpack.c.b16 %v1493, %v1485
          %v1790 = vpack.c.b16 %v1494, %v1486
          %v1791 = vpack.c.b16 %v1495, %v1487
          %v1792 = vpack.c.b16 %v1496, %v1488
          %v1793 = vpack.c.b16 %v1497, %v1489
          %v1794 = vpack.c.b16 %v1498, %v1490
          %v1795 = vpack.c.b16 %v1499, %v1491
          %v1796 = vpack.c.b16 %v1500, %v1492
          %v1797 = vpack.c.b16 %v1509, %v1501
          %v1798 = vpack.c.b16 %v1510, %v1502
          %v1799 = vpack.c.b16 %v1511, %v1503
          %v1800 = vpack.c.b16 %v1512, %v1504
          %v1801 = vpack.c.b16 %v1513, %v1505
          %v1802 = vpack.c.b16 %v1514, %v1506
          %v1803 = vpack.c.b16 %v1515, %v1507
          %v1804 = vpack.c.b16 %v1516, %v1508
          %v1805 = vpack.c.b16 %v1525, %v1517
          %v1806 = vpack.c.b16 %v1526, %v1518
          %v1807 = vpack.c.b16 %v1527, %v1519
          %v1808 = vpack.c.b16 %v1528, %v1520
          %v1809 = vpack.c.b16 %v1529, %v1521
          %v1810 = vpack.c.b16 %v1530, %v1522
          %v1811 = vpack.c.b16 %v1531, %v1523
          %v1812 = vpack.c.b16 %v1532, %v1524
          %v1813 = vpack.c.b16 %v1541, %v1533
          %v1814 = vpack.c.b16 %v1542, %v1534
          %v1815 = vpack.c.b16 %v1543, %v1535
          %v1816 = vpack.c.b16 %v1544, %v1536
          %v1817 = vpack.c.b16 %v1545, %v1537
          %v1818 = vpack.c.b16 %v1546, %v1538
          %v1819 = vpack.c.b16 %v1547, %v1539
          %v1820 = vpack.c.b16 %v1548, %v1540
          %v1821 = vpack.c.b16 %v1557, %v1549
          %v1822 = vpack.c.b16 %v1558, %v1550
          %v1823 = vpack.c.b16 %v1559, %v1551
          %v1824 = vpack.c.b16 %v1560, %v1552
          %v1825 = vpack.c.b16 %v1561, %v1553
          %v1826 = vpack.c.b16 %v1562, %v1554
          %v1827 = vpack.c.b16 %v1563, %v1555
          %v1828 = vpack.c.b16 %v1564, %v1556
          %v1829 = vpack.c.b16 %v1573, %v1565
          %v1830 = vpack.c.b16 %v1574, %v1566
          %v1831 = vpack.c.b16 %v1575, %v1567
          %v1832 = vpack.c.b16 %v1576, %v1568
          %v1833 = vpack.c.b16 %v1577, %v1569
          %v1834 = vpack.c.b16 %v1578, %v1570
          %v1835 = vpack.c.b16 %v1579, %v1571
          %v1836 = vpack.c.b16 %v1580, %v1572
          %v1837 = vpack.c.b16 %v1589, %v1581
          %v1838 = vpack.c.b16 %v1590, %v1582
          %v1839 = vpack.c.b16 %v1591, %v1583
          %v1840 = vpack.c.b16 %v1592, %v1584
          %v1841 = vpack.c.b16 %v1593, %v1585
          %v1842 = vpack.c.b16 %v1594, %v1586
          %v1843 = vpack.c.b16 %v1595, %v1587
          %v1844 = vpack.c.b16 %v1596, %v1588
          %v1845 = vpack.c.b16 %v1605, %v1597
          %v1846 = vpack.c.b16 %v1606, %v1598
          %v1847 = vpack.c.b16 %v1607, %v1599
          %v1848 = vpack.c.b16 %v1608, %v1600
          %v1849 = vpack.c.b16 %v1609, %v1601
          %v1850 = vpack.c.b16 %v1610, %v1602
          %v1851 = vpack.c.b16 %v1611, %v1603
          %v1852 = vpack.c.b16 %v1612, %v1604
          %v1853 = vpack.c.b16 %v1621, %v1613
          %v1854 = vpack.c.b16 %v1622, %v1614
          %v1855 = vpack.c.b16 %v1623, %v1615
          %v1856 = vpack.c.b16 %v1624, %v1616
          %v1857 = vpack.c.b16 %v1625, %v1617
          %v1858 = vpack.c.b16 %v1626, %v1618
          %v1859 = vpack.c.b16 %v1627, %v1619
          %v1860 = vpack.c.b16 %v1628, %v1620
          %v1861 = vpack.c.b16 %v1637, %v1629
          %v1862 = vpack.c.b16 %v1638, %v1630
          %v1863 = vpack.c.b16 %v1639, %v1631
          %v1864 = vpack.c.b16 %v1640, %v1632
          %v1865 = vpack.c.b16 %v1641, %v1633
          %v1866 = vpack.c.b16 %v1642, %v1634
          %v1867 = vpack.c.b16 %v1643, %v1635
          %v1868 = vpack.c.b16 %v1644, %v1636
          %v1869 = vpack.c.b16 %v1653, %v1645
          %v1870 = vpack.c.b16 %v1654, %v1646
          %v1871 = vpack.c.b16 %v1655, %v1647
          %v1872 = vpack.c.b16 %v1656, %v1648
          %v1873 = vpack.c.b16 %v1657, %v1649
          %v1874 = vpack.c.b16 %v1658, %v1650
          %v1875 = vpack.c.b16 %v1659, %v1651
          %v1876 = vpack.c.b16 %v1660, %v1652
          %v1877 = vpack.c.b16 %v1669, %v1661
          %v1878 = vpack.c.b16 %v1670, %v1662
          %v1879 = vpack.c.b16 %v1671, %v1663
          %v1880 = vpack.c.b16 %v1672, %v1664
          %v1881 = vpack.c.b16 %v1673, %v1665
          %v1882 = vpack.c.b16 %v1674, %v1666
          %v1883 = vpack.c.b16 %v1675, %v1667
          %v1884 = vpack.c.b16 %v1676, %v1668
          %v1885 = vpack.c.b16 %v1685, %v1677
          %v1886 = vpack.c.b16 %v1686, %v1678
          %v1887 = vpack.c.b16 %v1687, %v1679
          %v1888 = vpack.c.b16 %v1688, %v1680
          %v1889 = vpack.c.b16 %v1689, %v1681
          %v1890 = vpack.c.b16 %v1690, %v1682
          %v1891 = vpack.c.b16 %v1691, %v1683
          %v1892 = vpack.c.b16 %v1692, %v1684
          %v1893 = vpack.c.b16 %v1701, %v1693
          %v1894 = vpack.c.b16 %v1702, %v1694
          %v1895 = vpack.c.b16 %v1703, %v1695
          %v1896 = vpack.c.b16 %v1704, %v1696
          %v1897 = vpack.c.b16 %v1705, %v1697
          %v1898 = vpack.c.b16 %v1706, %v1698
          %v1899 = vpack.c.b16 %v1707, %v1699
          %v1900 = vpack.c.b16 %v1708, %v1700
          %2093 = vmatprep.subr.bf16.mxu0 %v1710
          %2094 = vmatpush1.bf16.msra.mxu0 %v1709
          %2095 = vmatprep.subr.bf16.mxu0 %v1718
          %2096 = vmatpush1.bf16.msra.mxu0 %v1717
          %2097 = vmatprep.subr.bf16.mxu0 %v1726
          %2098 = vmatpush1.bf16.msra.mxu0 %v1725
          %2099 = vmatprep.subr.bf16.mxu0 %v1734
          %2100 = vmatpush1.bf16.msra.mxu0 %v1733
          %2101 = vmatprep.subr.bf16.mxu0 %v1742
          %2102 = vmatpush1.bf16.msra.mxu0 %v1741
          %2103 = vmatprep.subr.bf16.mxu0 %v1750
          %2104 = vmatpush1.bf16.msra.mxu0 %v1749
          %2105 = vmatprep.subr.bf16.mxu0 %v1758
          %2106 = vmatpush1.bf16.msra.mxu0 %v1757
          %2107 = vmatprep.subr.bf16.mxu0 %v1766
          %2108 = vmatpush1.bf16.msra.mxu0 %v1765
          %2109 = vmatprep.subr.bf16.mxu0 %v1774
          %2110 = vmatpush1.bf16.msra.mxu0 %v1773
          %2111 = vmatprep.subr.bf16.mxu0 %v1782
          %2112 = vmatpush1.bf16.msra.mxu0 %v1781
          %2113 = vmatprep.subr.bf16.mxu0 %v1790
          %2114 = vmatpush1.bf16.msra.mxu0 %v1789
          %2115 = vmatprep.subr.bf16.mxu0 %v1798
          %2116 = vmatpush1.bf16.msra.mxu0 %v1797
          %2117 = vmatprep.subr.bf16.mxu0 %v1806
          %2118 = vmatpush1.bf16.msra.mxu0 %v1805
          %2119 = vmatprep.subr.bf16.mxu0 %v1814
          %2120 = vmatpush1.bf16.msra.mxu0 %v1813
          %2121 = vmatprep.subr.bf16.mxu0 %v1822
          %2122 = vmatpush1.bf16.msra.mxu0 %v1821
          %2123 = vmatprep.subr.bf16.mxu0 %v1830
          %2124 = vmatpush1.bf16.msra.mxu0 %v1829
          %2125 = vmatprep.mubr.bf16.mxu0 %v897
          %2126 = vmatmul.mubr.bf16.gmra.mrb[0].mxu0 %v896
          %v2127 = vpop.f32.mrb[0].mxu0
          %v2128 = vadd.f32 %v1096, %v2127
          %v2129 = vpop.f32.mrb[0].mxu0
          %v2130 = vadd.f32 %v1100, %v2129
          %v2131 = vpop.f32.mrb[0].mxu0
          %v2132 = vpop.f32.mrb[0].mxu0
          %2133 = vdwg.mxu0
          %2134 = vmatprep.subr.bf16.mxu0 %v1838
          %2135 = vmatpush1.bf16.msra.mxu0 %v1837
          %2136 = vmatprep.subr.bf16.mxu0 %v1846
          %2137 = vmatpush1.bf16.msra.mxu0 %v1845
          %2138 = vmatprep.subr.bf16.mxu0 %v1854
          %2139 = vmatpush1.bf16.msra.mxu0 %v1853
          %2140 = vmatprep.subr.bf16.mxu0 %v1862
          %2141 = vmatpush1.bf16.msra.mxu0 %v1861
          %2142 = vmatprep.subr.bf16.mxu0 %v1870
          %2143 = vmatpush1.bf16.msra.mxu0 %v1869
          %2144 = vmatprep.subr.bf16.mxu0 %v1878
          %2145 = vmatpush1.bf16.msra.mxu0 %v1877
          %2146 = vmatprep.subr.bf16.mxu0 %v1886
          %2147 = vmatpush1.bf16.msra.mxu0 %v1885
          %2148 = vmatprep.subr.bf16.mxu0 %v1894
          %2149 = vmatpush1.bf16.msra.mxu0 %v1893
          %2150 = vmatprep.subr.bf16.mxu0 0
          %2151 = vmatpush1.bf16.msra.mxu0 0
          %2152 = vmatprep.subr.bf16.mxu0 0
          %2153 = vmatpush1.bf16.msra.mxu0 0
          %2154 = vmatprep.subr.bf16.mxu0 0
          %2155 = vmatpush1.bf16.msra.mxu0 0
          %2156 = vmatprep.subr.bf16.mxu0 0
          %2157 = vmatpush1.bf16.msra.mxu0 0
          %2158 = vmatprep.subr.bf16.mxu0 0
          %2159 = vmatpush1.bf16.msra.mxu0 0
          %2160 = vmatprep.subr.bf16.mxu0 0
          %2161 = vmatpush1.bf16.msra.mxu0 0
          %2162 = vmatprep.subr.bf16.mxu0 0
          %2163 = vmatpush1.bf16.msra.mxu0 0
          %2164 = vmatprep.subr.bf16.mxu0 0
          %2165 = vmatpush1.bf16.msra.mxu0 0
          %2166 = vmatprep.mubr.bf16.mxu0 0
          %2167 = vmatmul.mubr.bf16.gmra.mrb[0].mxu0 %v898
          %v2168 = vpop.f32.mrb[0].mxu0
          %v2169 = vadd.f32 %v2128, %v2168
          %v2170 = vpop.f32.mrb[0].mxu0
          %v2171 = vadd.f32 %v2130, %v2170
          %v2172 = vpop.f32.mrb[0].mxu0
          %v2173 = vpop.f32.mrb[0].mxu0
          %2174 = vdwg.mxu0
          %2175 = vmatprep.subr.bf16.mxu0 %v1712
          %2176 = vmatpush1.bf16.msra.mxu0 %v1711
          %2177 = vmatprep.subr.bf16.mxu0 %v1720
          %2178 = vmatpush1.bf16.msra.mxu0 %v1719
          %2179 = vmatprep.subr.bf16.mxu0 %v1728
          %2180 = vmatpush1.bf16.msra.mxu0 %v1727
          %2181 = vmatprep.subr.bf16.mxu0 %v1736
          %2182 = vmatpush1.bf16.msra.mxu0 %v1735
          %2183 = vmatprep.subr.bf16.mxu0 %v1744
          %2184 = vmatpush1.bf16.msra.mxu0 %v1743
          %2185 = vmatprep.subr.bf16.mxu0 %v1752
          %2186 = vmatpush1.bf16.msra.mxu0 %v1751
          %2187 = vmatprep.subr.bf16.mxu0 %v1760
          %2188 = vmatpush1.bf16.msra.mxu0 %v1759
          %2189 = vmatprep.subr.bf16.mxu0 %v1768
          %2190 = vmatpush1.bf16.msra.mxu0 %v1767
          %2191 = vmatprep.subr.bf16.mxu0 %v1776
          %2192 = vmatpush1.bf16.msra.mxu0 %v1775
          %2193 = vmatprep.subr.bf16.mxu0 %v1784
          %2194 = vmatpush1.bf16.msra.mxu0 %v1783
          %2195 = vmatprep.subr.bf16.mxu0 %v1792
          %2196 = vmatpush1.bf16.msra.mxu0 %v1791
          %2197 = vmatprep.subr.bf16.mxu0 %v1800
          %2198 = vmatpush1.bf16.msra.mxu0 %v1799
          %2199 = vmatprep.subr.bf16.mxu0 %v1808
          %2200 = vmatpush1.bf16.msra.mxu0 %v1807
          %2201 = vmatprep.subr.bf16.mxu0 %v1816
          %2202 = vmatpush1.bf16.msra.mxu0 %v1815
          %2203 = vmatprep.subr.bf16.mxu0 %v1824
          %2204 = vmatpush1.bf16.msra.mxu0 %v1823
          %2205 = vmatprep.subr.bf16.mxu0 %v1832
          %2206 = vmatpush1.bf16.msra.mxu0 %v1831
          %2207 = vmatprep.mubr.bf16.mxu0 %v897
          %2208 = vmatmul.mubr.bf16.gmra.mrb[0].mxu0 %v896
          %v2209 = vpop.f32.mrb[0].mxu0
          %v2210 = vadd.f32 %v1104, %v2209
          %v2211 = vpop.f32.mrb[0].mxu0
          %v2212 = vadd.f32 %v1108, %v2211
          %v2213 = vpop.f32.mrb[0].mxu0
          %v2214 = vpop.f32.mrb[0].mxu0
          %2215 = vdwg.mxu0
          %2216 = vmatprep.subr.bf16.mxu0 %v1840
          %2217 = vmatpush1.bf16.msra.mxu0 %v1839
          %2218 = vmatprep.subr.bf16.mxu0 %v1848
          %2219 = vmatpush1.bf16.msra.mxu0 %v1847
          %2220 = vmatprep.subr.bf16.mxu0 %v1856
          %2221 = vmatpush1.bf16.msra.mxu0 %v1855
          %2222 = vmatprep.subr.bf16.mxu0 %v1864
          %2223 = vmatpush1.bf16.msra.mxu0 %v1863
          %2224 = vmatprep.subr.bf16.mxu0 %v1872
          %2225 = vmatpush1.bf16.msra.mxu0 %v1871
          %2226 = vmatprep.subr.bf16.mxu0 %v1880
          %2227 = vmatpush1.bf16.msra.mxu0 %v1879
          %2228 = vmatprep.subr.bf16.mxu0 %v1888
          %2229 = vmatpush1.bf16.msra.mxu0 %v1887
          %2230 = vmatprep.subr.bf16.mxu0 %v1896
          %2231 = vmatpush1.bf16.msra.mxu0 %v1895
          %2232 = vmatprep.subr.bf16.mxu0 0
          %2233 = vmatpush1.bf16.msra.mxu0 0
          %2234 = vmatprep.subr.bf16.mxu0 0
          %2235 = vmatpush1.bf16.msra.mxu0 0
          %2236 = vmatprep.subr.bf16.mxu0 0
          %2237 = vmatpush1.bf16.msra.mxu0 0
          %2238 = vmatprep.subr.bf16.mxu0 0
          %2239 = vmatpush1.bf16.msra.mxu0 0
          %2240 = vmatprep.subr.bf16.mxu0 0
          %2241 = vmatpush1.bf16.msra.mxu0 0
          %2242 = vmatprep.subr.bf16.mxu0 0
          %2243 = vmatpush1.bf16.msra.mxu0 0
          %2244 = vmatprep.subr.bf16.mxu0 0
          %2245 = vmatpush1.bf16.msra.mxu0 0
          %2246 = vmatprep.subr.bf16.mxu0 0
          %2247 = vmatpush1.bf16.msra.mxu0 0
          %2248 = vmatprep.mubr.bf16.mxu0 0
          %2249 = vmatmul.mubr.bf16.gmra.mrb[0].mxu0 %v898
          %v2250 = vpop.f32.mrb[0].mxu0
          %v2251 = vadd.f32 %v2210, %v2250
          %v2252 = vpop.f32.mrb[0].mxu0
          %v2253 = vadd.f32 %v2212, %v2252
          %v2254 = vpop.f32.mrb[0].mxu0
          %v2255 = vpop.f32.mrb[0].mxu0
          %2256 = vdwg.mxu0
          %2257 = vmatprep.subr.bf16.mxu0 %v1714
          %2258 = vmatpush1.bf16.msra.mxu0 %v1713
          %2259 = vmatprep.subr.bf16.mxu0 %v1722
          %2260 = vmatpush1.bf16.msra.mxu0 %v1721
          %2261 = vmatprep.subr.bf16.mxu0 %v1730
          %2262 = vmatpush1.bf16.msra.mxu0 %v1729
          %2263 = vmatprep.subr.bf16.mxu0 %v1738
          %2264 = vmatpush1.bf16.msra.mxu0 %v1737
          %2265 = vmatprep.subr.bf16.mxu0 %v1746
          %2266 = vmatpush1.bf16.msra.mxu0 %v1745
          %2267 = vmatprep.subr.bf16.mxu0 %v1754
          %2268 = vmatpush1.bf16.msra.mxu0 %v1753
          %2269 = vmatprep.subr.bf16.mxu0 %v1762
          %2270 = vmatpush1.bf16.msra.mxu0 %v1761
          %2271 = vmatprep.subr.bf16.mxu0 %v1770
          %2272 = vmatpush1.bf16.msra.mxu0 %v1769
          %2273 = vmatprep.subr.bf16.mxu0 %v1778
          %2274 = vmatpush1.bf16.msra.mxu0 %v1777
          %2275 = vmatprep.subr.bf16.mxu0 %v1786
          %2276 = vmatpush1.bf16.msra.mxu0 %v1785
          %2277 = vmatprep.subr.bf16.mxu0 %v1794
          %2278 = vmatpush1.bf16.msra.mxu0 %v1793
          %2279 = vmatprep.subr.bf16.mxu0 %v1802
          %2280 = vmatpush1.bf16.msra.mxu0 %v1801
          %2281 = vmatprep.subr.bf16.mxu0 %v1810
          %2282 = vmatpush1.bf16.msra.mxu0 %v1809
          %2283 = vmatprep.subr.bf16.mxu0 %v1818
          %2284 = vmatpush1.bf16.msra.mxu0 %v1817
          %2285 = vmatprep.subr.bf16.mxu0 %v1826
          %2286 = vmatpush1.bf16.msra.mxu0 %v1825
          %2287 = vmatprep.subr.bf16.mxu0 %v1834
          %2288 = vmatpush1.bf16.msra.mxu0 %v1833
          %2289 = vmatprep.mubr.bf16.mxu0 %v897
          %2290 = vmatmul.mubr.bf16.gmra.mrb[0].mxu0 %v896
          %v2291 = vpop.f32.mrb[0].mxu0
          %v2292 = vadd.f32 %v1112, %v2291
          %v2293 = vpop.f32.mrb[0].mxu0
          %v2294 = vadd.f32 %v1116, %v2293
          %v2295 = vpop.f32.mrb[0].mxu0
          %v2296 = vpop.f32.mrb[0].mxu0
          %2297 = vdwg.mxu0
          %2298 = vmatprep.subr.bf16.mxu0 %v1842
          %2299 = vmatpush1.bf16.msra.mxu0 %v1841
          %2300 = vmatprep.subr.bf16.mxu0 %v1850
          %2301 = vmatpush1.bf16.msra.mxu0 %v1849
          %2302 = vmatprep.subr.bf16.mxu0 %v1858
          %2303 = vmatpush1.bf16.msra.mxu0 %v1857
          %2304 = vmatprep.subr.bf16.mxu0 %v1866
          %2305 = vmatpush1.bf16.msra.mxu0 %v1865
          %2306 = vmatprep.subr.bf16.mxu0 %v1874
          %2307 = vmatpush1.bf16.msra.mxu0 %v1873
          %2308 = vmatprep.subr.bf16.mxu0 %v1882
          %2309 = vmatpush1.bf16.msra.mxu0 %v1881
          %2310 = vmatprep.subr.bf16.mxu0 %v1890
          %2311 = vmatpush1.bf16.msra.mxu0 %v1889
          %2312 = vmatprep.subr.bf16.mxu0 %v1898
          %2313 = vmatpush1.bf16.msra.mxu0 %v1897
          %2314 = vmatprep.subr.bf16.mxu0 0
          %2315 = vmatpush1.bf16.msra.mxu0 0
          %2316 = vmatprep.subr.bf16.mxu0 0
          %2317 = vmatpush1.bf16.msra.mxu0 0
          %2318 = vmatprep.subr.bf16.mxu0 0
          %2319 = vmatpush1.bf16.msra.mxu0 0
          %2320 = vmatprep.subr.bf16.mxu0 0
          %2321 = vmatpush1.bf16.msra.mxu0 0
          %2322 = vmatprep.subr.bf16.mxu0 0
          %2323 = vmatpush1.bf16.msra.mxu0 0
          %2324 = vmatprep.subr.bf16.mxu0 0
          %2325 = vmatpush1.bf16.msra.mxu0 0
          %2326 = vmatprep.subr.bf16.mxu0 0
          %2327 = vmatpush1.bf16.msra.mxu0 0
          %2328 = vmatprep.subr.bf16.mxu0 0
          %2329 = vmatpush1.bf16.msra.mxu0 0
          %2330 = vmatprep.mubr.bf16.mxu0 0
          %2331 = vmatmul.mubr.bf16.gmra.mrb[0].mxu0 %v898
          %v2332 = vpop.f32.mrb[0].mxu0
          %v2333 = vadd.f32 %v2292, %v2332
          %v2334 = vpop.f32.mrb[0].mxu0
          %v2335 = vadd.f32 %v2294, %v2334
          %v2336 = vpop.f32.mrb[0].mxu0
          %v2337 = vpop.f32.mrb[0].mxu0
          %2338 = vdwg.mxu0
          %2339 = vmatprep.subr.bf16.mxu0 %v1716
          %2340 = vmatpush1.bf16.msra.mxu0 %v1715
          %2341 = vmatprep.subr.bf16.mxu0 %v1724
          %2342 = vmatpush1.bf16.msra.mxu0 %v1723
          %2343 = vmatprep.subr.bf16.mxu0 %v1732
          %2344 = vmatpush1.bf16.msra.mxu0 %v1731
          %2345 = vmatprep.subr.bf16.mxu0 %v1740
          %2346 = vmatpush1.bf16.msra.mxu0 %v1739
          %2347 = vmatprep.subr.bf16.mxu0 %v1748
          %2348 = vmatpush1.bf16.msra.mxu0 %v1747
          %2349 = vmatprep.subr.bf16.mxu0 %v1756
          %2350 = vmatpush1.bf16.msra.mxu0 %v1755
          %2351 = vmatprep.subr.bf16.mxu0 %v1764
          %2352 = vmatpush1.bf16.msra.mxu0 %v1763
          %2353 = vmatprep.subr.bf16.mxu0 %v1772
          %2354 = vmatpush1.bf16.msra.mxu0 %v1771
          %2355 = vmatprep.subr.bf16.mxu0 %v1780
          %2356 = vmatpush1.bf16.msra.mxu0 %v1779
          %2357 = vmatprep.subr.bf16.mxu0 %v1788
          %2358 = vmatpush1.bf16.msra.mxu0 %v1787
          %2359 = vmatprep.subr.bf16.mxu0 %v1796
          %2360 = vmatpush1.bf16.msra.mxu0 %v1795
          %2361 = vmatprep.subr.bf16.mxu0 %v1804
          %2362 = vmatpush1.bf16.msra.mxu0 %v1803
          %2363 = vmatprep.subr.bf16.mxu0 %v1812
          %2364 = vmatpush1.bf16.msra.mxu0 %v1811
          %2365 = vmatprep.subr.bf16.mxu0 %v1820
          %2366 = vmatpush1.bf16.msra.mxu0 %v1819
          %2367 = vmatprep.subr.bf16.mxu0 %v1828
          %2368 = vmatpush1.bf16.msra.mxu0 %v1827
          %2369 = vmatprep.subr.bf16.mxu0 %v1836
          %2370 = vmatpush1.bf16.msra.mxu0 %v1835
          %2371 = vmatprep.mubr.bf16.mxu0 %v897
          %2372 = vmatmul.mubr.bf16.gmra.mrb[0].mxu0 %v896
          %v2373 = vpop.f32.mrb[0].mxu0
          %v2374 = vadd.f32 %v1120, %v2373
          %v2375 = vpop.f32.mrb[0].mxu0
          %v2376 = vadd.f32 %v1124, %v2375
          %v2377 = vpop.f32.mrb[0].mxu0
          %v2378 = vpop.f32.mrb[0].mxu0
          %2379 = vdwg.mxu0
          %2380 = vmatprep.subr.bf16.mxu0 %v1844
          %2381 = vmatpush1.bf16.msra.mxu0 %v1843
          %2382 = vmatprep.subr.bf16.mxu0 %v1852
          %2383 = vmatpush1.bf16.msra.mxu0 %v1851
          %2384 = vmatprep.subr.bf16.mxu0 %v1860
          %2385 = vmatpush1.bf16.msra.mxu0 %v1859
          %2386 = vmatprep.subr.bf16.mxu0 %v1868
          %2387 = vmatpush1.bf16.msra.mxu0 %v1867
          %2388 = vmatprep.subr.bf16.mxu0 %v1876
          %2389 = vmatpush1.bf16.msra.mxu0 %v1875
          %2390 = vmatprep.subr.bf16.mxu0 %v1884
          %2391 = vmatpush1.bf16.msra.mxu0 %v1883
          %2392 = vmatprep.subr.bf16.mxu0 %v1892
          %2393 = vmatpush1.bf16.msra.mxu0 %v1891
          %2394 = vmatprep.subr.bf16.mxu0 %v1900
          %2395 = vmatpush1.bf16.msra.mxu0 %v1899
          %2396 = vmatprep.subr.bf16.mxu0 0
          %2397 = vmatpush1.bf16.msra.mxu0 0
          %2398 = vmatprep.subr.bf16.mxu0 0
          %2399 = vmatpush1.bf16.msra.mxu0 0
          %2400 = vmatprep.subr.bf16.mxu0 0
          %2401 = vmatpush1.bf16.msra.mxu0 0
          %2402 = vmatprep.subr.bf16.mxu0 0
          %2403 = vmatpush1.bf16.msra.mxu0 0
          %2404 = vmatprep.subr.bf16.mxu0 0
          %2405 = vmatpush1.bf16.msra.mxu0 0
          %2406 = vmatprep.subr.bf16.mxu0 0
          %2407 = vmatpush1.bf16.msra.mxu0 0
          %2408 = vmatprep.subr.bf16.mxu0 0
          %2409 = vmatpush1.bf16.msra.mxu0 0
          %2410 = vmatprep.subr.bf16.mxu0 0
          %2411 = vmatpush1.bf16.msra.mxu0 0
          %2412 = vmatprep.mubr.bf16.mxu0 0
          %2413 = vmatmul.mubr.bf16.gmra.mrb[0].mxu0 %v898
          %v2414 = vpop.f32.mrb[0].mxu0
          %v2415 = vadd.f32 %v2374, %v2414
          %v2416 = vpop.f32.mrb[0].mxu0
          %v2417 = vadd.f32 %v2376, %v2416
          %v2418 = vpop.f32.mrb[0].mxu0
          %v2419 = vpop.f32.mrb[0].mxu0
          %2420 = vdwg.mxu0
          %v2421 = vxor.u32 %v2169, 2147483648
          %v2422 = vxor.u32 %v2171, 2147483648
          %v2423 = vmul.f32 %v2421, 1.442695
          %v2424 = vpow.pop %v2423
          %v2425 = vmul.f32 %v2422, 1.442695
          %v2426 = vpow.pop %v2425
          %v2427 = vadd.f32 %v2424, 1.0
          %v2428 = vadd.f32 %v2426, 1.0
          %v2429 = vrcp.pop %v2427
          %v2430 = vmul.f32 1.0, %v2429
          %v2431 = vrcp.pop %v2428
          %v2432 = vmul.f32 1.0, %v2431
          %v2433 = vxor.u32 %v2251, 2147483648
          %v2434 = vxor.u32 %v2253, 2147483648
          %v2435 = vmul.f32 %v2433, 1.442695
          %v2436 = vpow.pop %v2435
          %v2437 = vmul.f32 %v2434, 1.442695
          %v2438 = vpow.pop %v2437
          %v2439 = vadd.f32 %v2436, 1.0
          %v2440 = vadd.f32 %v2438, 1.0
          %v2441 = vrcp.pop %v2439
          %v2442 = vmul.f32 1.0, %v2441
          %v2443 = vrcp.pop %v2440
          %v2444 = vmul.f32 1.0, %v2443
          %v2445 = vtanh.pop %v2333
          %v2446 = vtanh.pop %v2335
          %v2447 = vxor.u32 %v2415, 2147483648
          %v2448 = vxor.u32 %v2417, 2147483648
          %v2449 = vmul.f32 %v2447, 1.442695
          %v2450 = vpow.pop %v2449
          %v2451 = vmul.f32 %v2448, 1.442695
          %v2452 = vpow.pop %v2451
          %v2453 = vadd.f32 %v2450, 1.0
          %v2454 = vadd.f32 %v2452, 1.0
          %v2455 = vrcp.pop %v2453
          %v2456 = vmul.f32 1.0, %v2455
          %v2457 = vrcp.pop %v2454
          %v2458 = vmul.f32 1.0, %v2457
          %v2459 = vmul.f32 %v2442, %v894
          %v2460 = vmul.f32 %v2444, %v895
          %v2461 = vmul.f32 %v2430, %v2445
          %v2462 = vmul.f32 %v2432, %v2446
          %v2463 = vadd.f32 %v2459, %v2461
          %v2464 = vadd.f32 %v2460, %v2462
          %v2465 = vtanh.pop %v2463
          %v2466 = vtanh.pop %v2464
          %v2467 = vmul.f32 %v2456, %v2465
          %v2468 = vmul.f32 %v2458, %v2466
          %2469 = vst [vmem:[#allocation17] sm:$0xff] %v2467
          %2470 = vst [vmem:[#allocation17 + $0x8] sm:$0xff] %v2468
          %2471 = vst [vmem:[#allocation19] sm:$0xff] %v2463
          %2472 = vst [vmem:[#allocation19 + $0x8] sm:$0xff] %v2464
          %v2473 = vld [vmem:[%s3] sm:$0xff]
          %v2474 = vld [vmem:[%s3 + $0x8] sm:$0xff]
          %v2475 = vld [vmem:[%s3 + $0x10] sm:$0xff]
          %v2476 = vld [vmem:[%s3 + $0x18] sm:$0xff]
          %v2477 = vld [vmem:[%s3 + $0x20] sm:$0xff]
          %v2478 = vld [vmem:[%s3 + $0x28] sm:$0xff]
          %v2479 = vld [vmem:[%s3 + $0x30] sm:$0xff]
          %v2480 = vld [vmem:[%s3 + $0x38] sm:$0xff]
          %v2481 = vld [vmem:[%s3 + $0x40] sm:$0xff]
          %v2482 = vld [vmem:[%s3 + $0x48] sm:$0xff]
          %v2483 = vld [vmem:[%s3 + $0x50] sm:$0xff]
          %v2484 = vld [vmem:[%s3 + $0x58] sm:$0xff]
          %v2485 = vld [vmem:[%s3 + $0x60] sm:$0xff]
          %v2486 = vld [vmem:[%s3 + $0x68] sm:$0xff]
          %v2487 = vld [vmem:[%s3 + $0x70] sm:$0xff]
          %v2488 = vld [vmem:[%s3 + $0x78] sm:$0xff]
          %v2489 = vld [vmem:[%s3 + $0x80] sm:$0xff]
          %v2490 = vld [vmem:[%s3 + $0x88] sm:$0xff]
          %v2491 = vld [vmem:[%s3 + $0x90] sm:$0xff]
          %v2492 = vld [vmem:[%s3 + $0x98] sm:$0xff]
          %v2493 = vld [vmem:[%s3 + $0xa0] sm:$0xff]
          %v2494 = vld [vmem:[%s3 + $0xa8] sm:$0xff]
          %v2495 = vld [vmem:[%s3 + $0xb0] sm:$0xff]
          %v2496 = vld [vmem:[%s3 + $0xb8] sm:$0xff]
          %v2497 = vld [vmem:[%s3 + $0xc0] sm:$0xff]
          %v2498 = vld [vmem:[%s3 + $0xc8] sm:$0xff]
          %v2499 = vld [vmem:[%s3 + $0xd0] sm:$0xff]
          %v2500 = vld [vmem:[%s3 + $0xd8] sm:$0xff]
          %v2501 = vld [vmem:[%s3 + $0xe0] sm:$0xff]
          %v2502 = vld [vmem:[%s3 + $0xe8] sm:$0xff]
          %v2503 = vld [vmem:[%s3 + $0xf0] sm:$0xff]
          %v2504 = vld [vmem:[%s3 + $0xf8] sm:$0xff]
          %v2505 = vpack.c.bf16 %v2467, %v2467
          %v2506 = vpack.c.bf16 %v2468, %v2468
          %v2507 = vld [vmem:[#allocation12] sm:$0xff]
          %v2508 = vld [vmem:[#allocation12 + $0x8] sm:$0xff]
          %v2509 = vld [vmem:[#allocation12 + $0x10] sm:$0xff]
          %v2510 = vld [vmem:[#allocation12 + $0x18] sm:$0xff]
          %v2511 = vld [vmem:[#allocation12 + $0x20] sm:$0xff]
          %v2512 = vld [vmem:[#allocation12 + $0x28] sm:$0xff]
          %v2513 = vld [vmem:[#allocation12 + $0x30] sm:$0xff]
          %v2514 = vld [vmem:[#allocation12 + $0x38] sm:$0xff]
          %v2515 = vld [vmem:[#allocation12 + $0x40] sm:$0xff]
          %v2516 = vld [vmem:[#allocation12 + $0x48] sm:$0xff]
          %v2517 = vld [vmem:[#allocation12 + $0x50] sm:$0xff]
          %v2518 = vld [vmem:[#allocation12 + $0x58] sm:$0xff]
          %v2519 = vld [vmem:[#allocation12 + $0x60] sm:$0xff]
          %v2520 = vld [vmem:[#allocation12 + $0x68] sm:$0xff]
          %v2521 = vld [vmem:[#allocation12 + $0x70] sm:$0xff]
          %v2522 = vld [vmem:[#allocation12 + $0x78] sm:$0xff]
          %v2523 = vld [vmem:[#allocation12 + $0x80] sm:$0xff]
          %v2524 = vld [vmem:[#allocation12 + $0x88] sm:$0xff]
          %v2525 = vld [vmem:[#allocation12 + $0x90] sm:$0xff]
          %v2526 = vld [vmem:[#allocation12 + $0x98] sm:$0xff]
          %v2527 = vld [vmem:[#allocation12 + $0xa0] sm:$0xff]
          %v2528 = vld [vmem:[#allocation12 + $0xa8] sm:$0xff]
          %v2529 = vld [vmem:[#allocation12 + $0xb0] sm:$0xff]
          %v2530 = vld [vmem:[#allocation12 + $0xb8] sm:$0xff]
          %v2531 = vld [vmem:[#allocation12 + $0xc0] sm:$0xff]
          %v2532 = vld [vmem:[#allocation12 + $0xc8] sm:$0xff]
          %v2533 = vld [vmem:[#allocation12 + $0xd0] sm:$0xff]
          %v2534 = vld [vmem:[#allocation12 + $0xd8] sm:$0xff]
          %v2535 = vld [vmem:[#allocation12 + $0xe0] sm:$0xff]
          %v2536 = vld [vmem:[#allocation12 + $0xe8] sm:$0xff]
          %v2537 = vld [vmem:[#allocation12 + $0xf0] sm:$0xff]
          %v2538 = vld [vmem:[#allocation12 + $0xf8] sm:$0xff]
          %v2539 = vld [vmem:[%s8] sm:$0x3]
          %v2541 = vlaneseq
          %v2542 = vshrl.u32 %v2541, 7
          %v2543 = vsub.s32 0, %v2542
          %v2544 = vrot.slane %v2539, %v2543
          %v2545 = vlaneseq
          %v2546 = vshrl.u32 %v2545, 7
          %v2547 = vsub.s32 1, %v2546
          %v2548 = vrot.slane %v2539, %v2547
          %v2583 = vunpack.c.l.b16 %v2507
          %v2584 = vunpack.c.h.b16 %v2507
          %v2585 = vunpack.c.l.b16 %v2508
          %v2586 = vunpack.c.h.b16 %v2508
          %v2587 = vunpack.c.l.b16 %v2509
          %v2588 = vunpack.c.h.b16 %v2509
          %v2589 = vunpack.c.l.b16 %v2510
          %v2590 = vunpack.c.h.b16 %v2510
          %v2591 = vunpack.c.l.b16 %v2511
          %v2592 = vunpack.c.h.b16 %v2511
          %v2593 = vunpack.c.l.b16 %v2512
          %v2594 = vunpack.c.h.b16 %v2512
          %v2595 = vunpack.c.l.b16 %v2513
          %v2596 = vunpack.c.h.b16 %v2513
          %v2597 = vunpack.c.l.b16 %v2514
          %v2598 = vunpack.c.h.b16 %v2514
          %v2599 = vunpack.c.l.b16 %v2515
          %v2600 = vunpack.c.h.b16 %v2515
          %v2601 = vunpack.c.l.b16 %v2516
          %v2602 = vunpack.c.h.b16 %v2516
          %v2603 = vunpack.c.l.b16 %v2517
          %v2604 = vunpack.c.h.b16 %v2517
          %v2605 = vunpack.c.l.b16 %v2518
          %v2606 = vunpack.c.h.b16 %v2518
          %v2607 = vunpack.c.l.b16 %v2519
          %v2608 = vunpack.c.h.b16 %v2519
          %v2609 = vunpack.c.l.b16 %v2520
          %v2610 = vunpack.c.h.b16 %v2520
          %v2611 = vunpack.c.l.b16 %v2521
          %v2612 = vunpack.c.h.b16 %v2521
          %v2613 = vunpack.c.l.b16 %v2522
          %v2614 = vunpack.c.h.b16 %v2522
          %v2615 = vunpack.c.l.b16 %v2523
          %v2616 = vunpack.c.h.b16 %v2523
          %v2617 = vunpack.c.l.b16 %v2524
          %v2618 = vunpack.c.h.b16 %v2524
          %v2619 = vunpack.c.l.b16 %v2525
          %v2620 = vunpack.c.h.b16 %v2525
          %v2621 = vunpack.c.l.b16 %v2526
          %v2622 = vunpack.c.h.b16 %v2526
          %v2623 = vunpack.c.l.b16 %v2527
          %v2624 = vunpack.c.h.b16 %v2527
          %v2625 = vunpack.c.l.b16 %v2528
          %v2626 = vunpack.c.h.b16 %v2528
          %v2627 = vunpack.c.l.b16 %v2529
          %v2628 = vunpack.c.h.b16 %v2529
          %v2629 = vunpack.c.l.b16 %v2530
          %v2630 = vunpack.c.h.b16 %v2530
          %v2631 = vunpack.c.l.b16 %v2531
          %v2632 = vunpack.c.h.b16 %v2531
          %v2633 = vunpack.c.l.b16 %v2532
          %v2634 = vunpack.c.h.b16 %v2532
          %v2635 = vunpack.c.l.b16 %v2533
          %v2636 = vunpack.c.h.b16 %v2533
          %v2637 = vunpack.c.l.b16 %v2534
          %v2638 = vunpack.c.h.b16 %v2534
          %v2639 = vunpack.c.l.b16 %v2535
          %v2640 = vunpack.c.h.b16 %v2535
          %v2641 = vunpack.c.l.b16 %v2536
          %v2642 = vunpack.c.h.b16 %v2536
          %v2643 = vunpack.c.l.b16 %v2537
          %v2644 = vunpack.c.h.b16 %v2537
          %v2645 = vunpack.c.l.b16 %v2538
          %v2646 = vunpack.c.h.b16 %v2538
          %v2647 = vpack.c.b16 %v2585, %v2583
          %v2648 = vpack.c.b16 %v2586, %v2584
          %v2649 = vpack.c.b16 %v2589, %v2587
          %v2650 = vpack.c.b16 %v2590, %v2588
          %v2651 = vpack.c.b16 %v2593, %v2591
          %v2652 = vpack.c.b16 %v2594, %v2592
          %v2653 = vpack.c.b16 %v2597, %v2595
          %v2654 = vpack.c.b16 %v2598, %v2596
          %v2655 = vpack.c.b16 %v2601, %v2599
          %v2656 = vpack.c.b16 %v2602, %v2600
          %v2657 = vpack.c.b16 %v2605, %v2603
          %v2658 = vpack.c.b16 %v2606, %v2604
          %v2659 = vpack.c.b16 %v2609, %v2607
          %v2660 = vpack.c.b16 %v2610, %v2608
          %v2661 = vpack.c.b16 %v2613, %v2611
          %v2662 = vpack.c.b16 %v2614, %v2612
          %v2663 = vpack.c.b16 %v2617, %v2615
          %v2664 = vpack.c.b16 %v2618, %v2616
          %v2665 = vpack.c.b16 %v2621, %v2619
          %v2666 = vpack.c.b16 %v2622, %v2620
          %v2667 = vpack.c.b16 %v2625, %v2623
          %v2668 = vpack.c.b16 %v2626, %v2624
          %v2669 = vpack.c.b16 %v2629, %v2627
          %v2670 = vpack.c.b16 %v2630, %v2628
          %v2671 = vpack.c.b16 %v2633, %v2631
          %v2672 = vpack.c.b16 %v2634, %v2632
          %v2673 = vpack.c.b16 %v2637, %v2635
          %v2674 = vpack.c.b16 %v2638, %v2636
          %v2675 = vpack.c.b16 %v2641, %v2639
          %v2676 = vpack.c.b16 %v2642, %v2640
          %v2677 = vpack.c.b16 %v2645, %v2643
          %v2678 = vpack.c.b16 %v2646, %v2644
          %2711 = vmatprep.subr.bf16.mxu0 %v2648
          %2712 = vmatpush1.bf16.msra.mxu0 %v2647
          %2713 = vmatprep.subr.bf16.mxu0 %v2650
          %2714 = vmatpush1.bf16.msra.mxu0 %v2649
          %2715 = vmatprep.subr.bf16.mxu0 %v2652
          %2716 = vmatpush1.bf16.msra.mxu0 %v2651
          %2717 = vmatprep.subr.bf16.mxu0 %v2654
          %2718 = vmatpush1.bf16.msra.mxu0 %v2653
          %2719 = vmatprep.subr.bf16.mxu0 %v2656
          %2720 = vmatpush1.bf16.msra.mxu0 %v2655
          %2721 = vmatprep.subr.bf16.mxu0 %v2658
          %2722 = vmatpush1.bf16.msra.mxu0 %v2657
          %2723 = vmatprep.subr.bf16.mxu0 %v2660
          %2724 = vmatpush1.bf16.msra.mxu0 %v2659
          %2725 = vmatprep.subr.bf16.mxu0 %v2662
          %2726 = vmatpush1.bf16.msra.mxu0 %v2661
          %2727 = vmatprep.subr.bf16.mxu0 %v2664
          %2728 = vmatpush1.bf16.msra.mxu0 %v2663
          %2729 = vmatprep.subr.bf16.mxu0 %v2666
          %2730 = vmatpush1.bf16.msra.mxu0 %v2665
          %2731 = vmatprep.subr.bf16.mxu0 %v2668
          %2732 = vmatpush1.bf16.msra.mxu0 %v2667
          %2733 = vmatprep.subr.bf16.mxu0 %v2670
          %2734 = vmatpush1.bf16.msra.mxu0 %v2669
          %2735 = vmatprep.subr.bf16.mxu0 %v2672
          %2736 = vmatpush1.bf16.msra.mxu0 %v2671
          %2737 = vmatprep.subr.bf16.mxu0 %v2674
          %2738 = vmatpush1.bf16.msra.mxu0 %v2673
          %2739 = vmatprep.subr.bf16.mxu0 %v2676
          %2740 = vmatpush1.bf16.msra.mxu0 %v2675
          %2741 = vmatprep.subr.bf16.mxu0 %v2678
          %2742 = vmatpush1.bf16.msra.mxu0 %v2677
          %2743 = vmatprep.mubr.bf16.mxu0 %v2506
          %2744 = vmatmul.mubr.bf16.gmra.mrb[0].mxu0 %v2505
          %v2745 = vpop.f32.mrb[0].mxu0
          %v2746 = vadd.f32 %v2544, %v2745
          %v2747 = vpop.f32.mrb[0].mxu0
          %v2748 = vadd.f32 %v2548, %v2747
          %v2749 = vpop.f32.mrb[0].mxu0
          %v2750 = vpop.f32.mrb[0].mxu0
          %2751 = vdwg.mxu0
          %v2752 = vmax.f32 %v2746, 0.0
          %v2753 = vmax.f32 %v2748, 0.0
          %v2756 = vcombine.low %v2752, %v2753
          %v2757 = vcombine.high %v2752, %v2753
          %v2759 = vunpack.c.l.s4 1966171168
          %v2760 = vunpack.c.0.s8 %v2759
          %v2761 = vlaneseq
          %v2762 = vshrl.u32 %v2761, 7
          %v2763 = vsub.s32 %v2760, %v2762
          %v2764 = vrot.slane %v2756, %v2763
          %v2766 = vunpack.c.l.s4 1966171168
          %v2767 = vunpack.c.0.s8 %v2766
          %v2768 = vlaneseq
          %v2769 = vshrl.u32 %v2768, 7
          %v2770 = vsub.s32 %v2767, %v2769
          %v2771 = vrot.slane %v2757, %v2770
          %v2772 = vcombine.high %v2764, %v2764
          %v2773 = vcombine.high %v2771, %v2771
          %v2775 = vunpack.c.l.s4 1966171168
          %v2776 = vunpack.c.0.s8 %v2775
          %v2777 = vlaneseq
          %v2778 = vshrl.u32 %v2777, 7
          %v2779 = vsub.s32 %v2776, %v2778
          %v2780 = vrot.slane %v2764, %v2779
          %v2782 = vunpack.c.l.s4 1966171168
          %v2783 = vunpack.c.0.s8 %v2782
          %v2784 = vlaneseq
          %v2785 = vshrl.u32 %v2784, 7
          %v2786 = vsub.s32 %v2783, %v2785
          %v2787 = vrot.slane %v2771, %v2786
          %v2789 = vunpack.c.l.s4 1966171168
          %v2790 = vunpack.c.0.s8 %v2789
          %v2791 = vlaneseq
          %v2792 = vshrl.u32 %v2791, 7
          %v2793 = vsub.s32 %v2790, %v2792
          %v2794 = vrot.slane %v2772, %v2793
          %v2796 = vunpack.c.l.s4 1966171168
          %v2797 = vunpack.c.0.s8 %v2796
          %v2798 = vlaneseq
          %v2799 = vshrl.u32 %v2798, 7
          %v2800 = vsub.s32 %v2797, %v2799
          %v2801 = vrot.slane %v2773, %v2800
          %v2802 = vcombine.high %v2780, %v2780
          %v2803 = vcombine.high %v2787, %v2787
          %v2804 = vcombine.high %v2794, %v2794
          %v2805 = vcombine.high %v2801, %v2801
          %v2806 = vlaneseq
          %v2807 = vshrl.u32 %v2806, 7
          %v2808 = vsub.s32 0, %v2807
          %v2809 = vrot.slane %v2780, %v2808
          %v2810 = vlaneseq
          %v2811 = vshrl.u32 %v2810, 7
          %v2812 = vsub.s32 1, %v2811
          %v2813 = vrot.slane %v2780, %v2812
          %v2814 = vlaneseq
          %v2815 = vshrl.u32 %v2814, 7
          %v2816 = vsub.s32 0, %v2815
          %v2817 = vrot.slane %v2794, %v2816
          %v2818 = vlaneseq
          %v2819 = vshrl.u32 %v2818, 7
          %v2820 = vsub.s32 1, %v2819
          %v2821 = vrot.slane %v2794, %v2820
          %v2822 = vlaneseq
          %v2823 = vshrl.u32 %v2822, 7
          %v2824 = vsub.s32 0, %v2823
          %v2825 = vrot.slane %v2802, %v2824
          %v2826 = vlaneseq
          %v2827 = vshrl.u32 %v2826, 7
          %v2828 = vsub.s32 1, %v2827
          %v2829 = vrot.slane %v2802, %v2828
          %v2830 = vlaneseq
          %v2831 = vshrl.u32 %v2830, 7
          %v2832 = vsub.s32 0, %v2831
          %v2833 = vrot.slane %v2804, %v2832
          %v2834 = vlaneseq
          %v2835 = vshrl.u32 %v2834, 7
          %v2836 = vsub.s32 1, %v2835
          %v2837 = vrot.slane %v2804, %v2836
          %v2838 = vlaneseq
          %v2839 = vshrl.u32 %v2838, 7
          %v2840 = vsub.s32 0, %v2839
          %v2841 = vrot.slane %v2787, %v2840
          %v2842 = vlaneseq
          %v2843 = vshrl.u32 %v2842, 7
          %v2844 = vsub.s32 1, %v2843
          %v2845 = vrot.slane %v2787, %v2844
          %v2846 = vlaneseq
          %v2847 = vshrl.u32 %v2846, 7
          %v2848 = vsub.s32 0, %v2847
          %v2849 = vrot.slane %v2801, %v2848
          %v2850 = vlaneseq
          %v2851 = vshrl.u32 %v2850, 7
          %v2852 = vsub.s32 1, %v2851
          %v2853 = vrot.slane %v2801, %v2852
          %v2854 = vlaneseq
          %v2855 = vshrl.u32 %v2854, 7
          %v2856 = vsub.s32 0, %v2855
          %v2857 = vrot.slane %v2803, %v2856
          %v2858 = vlaneseq
          %v2859 = vshrl.u32 %v2858, 7
          %v2860 = vsub.s32 1, %v2859
          %v2861 = vrot.slane %v2803, %v2860
          %v2862 = vlaneseq
          %v2863 = vshrl.u32 %v2862, 7
          %v2864 = vsub.s32 0, %v2863
          %v2865 = vrot.slane %v2805, %v2864
          %v2866 = vlaneseq
          %v2867 = vshrl.u32 %v2866, 7
          %v2868 = vsub.s32 1, %v2867
          %v2869 = vrot.slane %v2805, %v2868
          %v2886 = vmul.f32 %v2809, %v2473
          %v2887 = vmul.f32 %v2813, %v2474
          %v2888 = vmul.f32 %v2809, %v2475
          %v2889 = vmul.f32 %v2813, %v2476
          %v2890 = vmul.f32 %v2817, %v2477
          %v2891 = vmul.f32 %v2821, %v2478
          %v2892 = vmul.f32 %v2817, %v2479
          %v2893 = vmul.f32 %v2821, %v2480
          %v2894 = vmul.f32 %v2825, %v2481
          %v2895 = vmul.f32 %v2829, %v2482
          %v2896 = vmul.f32 %v2825, %v2483
          %v2897 = vmul.f32 %v2829, %v2484
          %v2898 = vmul.f32 %v2833, %v2485
          %v2899 = vmul.f32 %v2837, %v2486
          %v2900 = vmul.f32 %v2833, %v2487
          %v2901 = vmul.f32 %v2837, %v2488
          %v2902 = vmul.f32 %v2841, %v2489
          %v2903 = vmul.f32 %v2845, %v2490
          %v2904 = vmul.f32 %v2841, %v2491
          %v2905 = vmul.f32 %v2845, %v2492
          %v2906 = vmul.f32 %v2849, %v2493
          %v2907 = vmul.f32 %v2853, %v2494
          %v2908 = vmul.f32 %v2849, %v2495
          %v2909 = vmul.f32 %v2853, %v2496
          %v2910 = vmul.f32 %v2857, %v2497
          %v2911 = vmul.f32 %v2861, %v2498
          %v2912 = vmul.f32 %v2857, %v2499
          %v2913 = vmul.f32 %v2861, %v2500
          %v2914 = vmul.f32 %v2865, %v2501
          %v2915 = vmul.f32 %v2869, %v2502
          %v2916 = vmul.f32 %v2865, %v2503
          %v2917 = vmul.f32 %v2869, %v2504
          %v2918 = vadd.f32 %v2886, %v2887
          %2919 = vadd.xlane.f32.xlu0 %v2918
          %v2920 = vpop.xlane.xlu0 %2919
          %v2921 = vadd.f32 %v2888, %v2889
          %2922 = vadd.xlane.f32.xlu0 %v2921
          %v2923 = vpop.xlane.xlu0 %2922
          %v2924 = vadd.f32 %v2890, %v2891
          %2925 = vadd.xlane.f32.xlu0 %v2924
          %v2926 = vpop.xlane.xlu0 %2925
          %v2927 = vadd.f32 %v2892, %v2893
          %2928 = vadd.xlane.f32.xlu0 %v2927
          %v2929 = vpop.xlane.xlu0 %2928
          %v2930 = vadd.f32 %v2894, %v2895
          %2931 = vadd.xlane.f32.xlu0 %v2930
          %v2932 = vpop.xlane.xlu0 %2931
          %v2933 = vadd.f32 %v2896, %v2897
          %2934 = vadd.xlane.f32.xlu0 %v2933
          %v2935 = vpop.xlane.xlu0 %2934
          %v2936 = vadd.f32 %v2898, %v2899
          %2937 = vadd.xlane.f32.xlu0 %v2936
          %v2938 = vpop.xlane.xlu0 %2937
          %v2939 = vadd.f32 %v2900, %v2901
          %2940 = vadd.xlane.f32.xlu0 %v2939
          %v2941 = vpop.xlane.xlu0 %2940
          %v2942 = vadd.f32 %v2902, %v2903
          %2943 = vadd.xlane.f32.xlu0 %v2942
          %v2944 = vpop.xlane.xlu0 %2943
          %v2945 = vadd.f32 %v2904, %v2905
          %2946 = vadd.xlane.f32.xlu0 %v2945
          %v2947 = vpop.xlane.xlu0 %2946
          %v2948 = vadd.f32 %v2906, %v2907
          %2949 = vadd.xlane.f32.xlu0 %v2948
          %v2950 = vpop.xlane.xlu0 %2949
          %v2951 = vadd.f32 %v2908, %v2909
          %2952 = vadd.xlane.f32.xlu0 %v2951
          %v2953 = vpop.xlane.xlu0 %2952
          %v2954 = vadd.f32 %v2910, %v2911
          %2955 = vadd.xlane.f32.xlu0 %v2954
          %v2956 = vpop.xlane.xlu0 %2955
          %v2957 = vadd.f32 %v2912, %v2913
          %2958 = vadd.xlane.f32.xlu0 %v2957
          %v2959 = vpop.xlane.xlu0 %2958
          %v2960 = vadd.f32 %v2914, %v2915
          %2961 = vadd.xlane.f32.xlu0 %v2960
          %v2962 = vpop.xlane.xlu0 %2961
          %v2963 = vadd.f32 %v2916, %v2917
          %2964 = vadd.xlane.f32.xlu0 %v2963
          %v2965 = vpop.xlane.xlu0 %2964
          %v2982 = vlaneseq
          %v2983 = vand.u32 %v2982, 127
          %v2984 = vlaneseq
          %v2985 = vshrl.u32 %v2984, 7
          %v2986 = vsub.s32 %v2983, %v2985
          %v2987 = vrot.slane %v2920, %v2986
          %v2988 = vadd.s32 %v2983, 4294967288
          %v2989 = vlaneseq
          %v2990 = vshrl.u32 %v2989, 7
          %v2991 = vsub.s32 %v2988, %v2990
          %v2992 = vrot.slane %v2923, %v2991
          %vm2993 = vcmask 130112
          %v2994 = vsel %vm2993, %v2992, %v2987
          %v2995 = vlaneseq
          %v2996 = vshrl.u32 %v2995, 7
          %v2997 = vsub.s32 %v2983, %v2996
          %v2998 = vrot.slane %v2926, %v2997
          %v2999 = vlaneseq
          %v3000 = vshrl.u32 %v2999, 7
          %v3001 = vsub.s32 %v2988, %v3000
          %v3002 = vrot.slane %v2929, %v3001
          %v3003 = vsel %vm2993, %v3002, %v2998
          %v3004 = vlaneseq
          %v3005 = vshrl.u32 %v3004, 7
          %v3006 = vsub.s32 %v2983, %v3005
          %v3007 = vrot.slane %v2932, %v3006
          %v3008 = vlaneseq
          %v3009 = vshrl.u32 %v3008, 7
          %v3010 = vsub.s32 %v2988, %v3009
          %v3011 = vrot.slane %v2935, %v3010
          %v3012 = vsel %vm2993, %v3011, %v3007
          %v3013 = vlaneseq
          %v3014 = vshrl.u32 %v3013, 7
          %v3015 = vsub.s32 %v2983, %v3014
          %v3016 = vrot.slane %v2938, %v3015
          %v3017 = vlaneseq
          %v3018 = vshrl.u32 %v3017, 7
          %v3019 = vsub.s32 %v2988, %v3018
          %v3020 = vrot.slane %v2941, %v3019
          %v3021 = vsel %vm2993, %v3020, %v3016
          %v3022 = vlaneseq
          %v3023 = vshrl.u32 %v3022, 7
          %v3024 = vsub.s32 %v2983, %v3023
          %v3025 = vrot.slane %v2944, %v3024
          %v3026 = vlaneseq
          %v3027 = vshrl.u32 %v3026, 7
          %v3028 = vsub.s32 %v2988, %v3027
          %v3029 = vrot.slane %v2947, %v3028
          %v3030 = vsel %vm2993, %v3029, %v3025
          %v3031 = vlaneseq
          %v3032 = vshrl.u32 %v3031, 7
          %v3033 = vsub.s32 %v2983, %v3032
          %v3034 = vrot.slane %v2950, %v3033
          %v3035 = vlaneseq
          %v3036 = vshrl.u32 %v3035, 7
          %v3037 = vsub.s32 %v2988, %v3036
          %v3038 = vrot.slane %v2953, %v3037
          %v3039 = vsel %vm2993, %v3038, %v3034
          %v3040 = vlaneseq
          %v3041 = vshrl.u32 %v3040, 7
          %v3042 = vsub.s32 %v2983, %v3041
          %v3043 = vrot.slane %v2956, %v3042
          %v3044 = vlaneseq
          %v3045 = vshrl.u32 %v3044, 7
          %v3046 = vsub.s32 %v2988, %v3045
          %v3047 = vrot.slane %v2959, %v3046
          %v3048 = vsel %vm2993, %v3047, %v3043
          %v3049 = vlaneseq
          %v3050 = vshrl.u32 %v3049, 7
          %v3051 = vsub.s32 %v2983, %v3050
          %v3052 = vrot.slane %v2962, %v3051
          %v3053 = vlaneseq
          %v3054 = vshrl.u32 %v3053, 7
          %v3055 = vsub.s32 %v2988, %v3054
          %v3056 = vrot.slane %v2965, %v3055
          %v3057 = vsel %vm2993, %v3056, %v3052
          %vm3058 = vcmask 1041409
          %v3059 = vsel %vm3058, %v3003, %v2994
          %vm3060 = vcmask 1042434
          %v3061 = vsel %vm3060, %v3012, %v3059
          %vm3062 = vcmask 1043459
          %v3063 = vsel %vm3062, %v3021, %v3061
          %vm3064 = vcmask 1044484
          %v3065 = vsel %vm3064, %v3030, %v3063
          %vm3066 = vcmask 1045509
          %v3067 = vsel %vm3066, %v3039, %v3065
          %vm3068 = vcmask 1046534
          %v3069 = vsel %vm3068, %v3048, %v3067
          %vm3070 = vcmask 1047559
          %v3071 = vsel %vm3070, %v3057, %v3069
          %vm3073 = vcmask 130048
          %v3074 = vsel %vm3073, %v3071, -inf
          %3075 = vmax.xlane.f32.xlu0 %v3074
          %v3076 = vpop.xlane.xlu0 %3075
          %v3078 = vlaneseq
          %v3079 = vshrl.u32 %v3078, 7
          %v3080 = vsub.s32 0, %v3079
          %v3081 = vrot.slane %v3076, %v3080
          %v3082 = vlaneseq
          %v3083 = vshrl.u32 %v3082, 7
          %v3084 = vsub.s32 1, %v3083
          %v3085 = vrot.slane %v3076, %v3084
          %v3086 = vlaneseq
          %v3087 = vshrl.u32 %v3086, 7
          %v3088 = vsub.s32 2, %v3087
          %v3089 = vrot.slane %v3076, %v3088
          %v3090 = vlaneseq
          %v3091 = vshrl.u32 %v3090, 7
          %v3092 = vsub.s32 3, %v3091
          %v3093 = vrot.slane %v3076, %v3092
          %v3094 = vlaneseq
          %v3095 = vshrl.u32 %v3094, 7
          %v3096 = vsub.s32 4, %v3095
          %v3097 = vrot.slane %v3076, %v3096
          %v3098 = vlaneseq
          %v3099 = vshrl.u32 %v3098, 7
          %v3100 = vsub.s32 5, %v3099
          %v3101 = vrot.slane %v3076, %v3100
          %v3102 = vlaneseq
          %v3103 = vshrl.u32 %v3102, 7
          %v3104 = vsub.s32 6, %v3103
          %v3105 = vrot.slane %v3076, %v3104
          %v3106 = vlaneseq
          %v3107 = vshrl.u32 %v3106, 7
          %v3108 = vsub.s32 7, %v3107
          %v3109 = vrot.slane %v3076, %v3108
          %v3118 = vsub.f32 %v2920, %v3081
          %v3119 = vsub.f32 %v2923, %v3081
          %v3120 = vsub.f32 %v2926, %v3085
          %v3121 = vsub.f32 %v2929, %v3085
          %v3122 = vsub.f32 %v2932, %v3089
          %v3123 = vsub.f32 %v2935, %v3089
          %v3124 = vsub.f32 %v2938, %v3093
          %v3125 = vsub.f32 %v2941, %v3093
          %v3126 = vsub.f32 %v2944, %v3097
          %v3127 = vsub.f32 %v2947, %v3097
          %v3128 = vsub.f32 %v2950, %v3101
          %v3129 = vsub.f32 %v2953, %v3101
          %v3130 = vsub.f32 %v2956, %v3105
          %v3131 = vsub.f32 %v2959, %v3105
          %v3132 = vsub.f32 %v2962, %v3109
          %v3133 = vsub.f32 %v2965, %v3109
          %v3134 = vmul.f32 %v3118, 1.442695
          %v3135 = vpow.pop %v3134
          %v3136 = vmul.f32 %v3119, 1.442695
          %v3137 = vpow.pop %v3136
          %v3138 = vmul.f32 %v3120, 1.442695
          %v3139 = vpow.pop %v3138
          %v3140 = vmul.f32 %v3121, 1.442695
          %v3141 = vpow.pop %v3140
          %v3142 = vmul.f32 %v3122, 1.442695
          %v3143 = vpow.pop %v3142
          %v3144 = vmul.f32 %v3123, 1.442695
          %v3145 = vpow.pop %v3144
          %v3146 = vmul.f32 %v3124, 1.442695
          %v3147 = vpow.pop %v3146
          %v3148 = vmul.f32 %v3125, 1.442695
          %v3149 = vpow.pop %v3148
          %v3150 = vmul.f32 %v3126, 1.442695
          %v3151 = vpow.pop %v3150
          %v3152 = vmul.f32 %v3127, 1.442695
          %v3153 = vpow.pop %v3152
          %v3154 = vmul.f32 %v3128, 1.442695
          %v3155 = vpow.pop %v3154
          %v3156 = vmul.f32 %v3129, 1.442695
          %v3157 = vpow.pop %v3156
          %v3158 = vmul.f32 %v3130, 1.442695
          %v3159 = vpow.pop %v3158
          %v3160 = vmul.f32 %v3131, 1.442695
          %v3161 = vpow.pop %v3160
          %v3162 = vmul.f32 %v3132, 1.442695
          %v3163 = vpow.pop %v3162
          %v3164 = vmul.f32 %v3133, 1.442695
          %v3165 = vpow.pop %v3164
          %3182 = vset.pattern.permute.xlu0 0
          %3183 = vperm.xlu0 %3182, %v3135
          %v3184 = vpop.permute.xlu0 %3183
          %3185 = vset.pattern.permute.xlu0 0
          %3186 = vperm.xlu0 %3185, %v3137
          %v3187 = vpop.permute.xlu0 %3186
          %3188 = vset.pattern.permute.xlu0 0
          %3189 = vperm.xlu0 %3188, %v3139
          %v3190 = vpop.permute.xlu0 %3189
          %3191 = vset.pattern.permute.xlu0 0
          %3192 = vperm.xlu0 %3191, %v3141
          %v3193 = vpop.permute.xlu0 %3192
          %3194 = vset.pattern.permute.xlu0 0
          %3195 = vperm.xlu0 %3194, %v3143
          %v3196 = vpop.permute.xlu0 %3195
          %3197 = vset.pattern.permute.xlu0 0
          %3198 = vperm.xlu0 %3197, %v3145
          %v3199 = vpop.permute.xlu0 %3198
          %3200 = vset.pattern.permute.xlu0 0
          %3201 = vperm.xlu0 %3200, %v3147
          %v3202 = vpop.permute.xlu0 %3201
          %3203 = vset.pattern.permute.xlu0 0
          %3204 = vperm.xlu0 %3203, %v3149
          %v3205 = vpop.permute.xlu0 %3204
          %3206 = vset.pattern.permute.xlu0 0
          %3207 = vperm.xlu0 %3206, %v3151
          %v3208 = vpop.permute.xlu0 %3207
          %3209 = vset.pattern.permute.xlu0 0
          %3210 = vperm.xlu0 %3209, %v3153
          %v3211 = vpop.permute.xlu0 %3210
          %3212 = vset.pattern.permute.xlu0 0
          %3213 = vperm.xlu0 %3212, %v3155
          %v3214 = vpop.permute.xlu0 %3213
          %3215 = vset.pattern.permute.xlu0 0
          %3216 = vperm.xlu0 %3215, %v3157
          %v3217 = vpop.permute.xlu0 %3216
          %3218 = vset.pattern.permute.xlu0 0
          %3219 = vperm.xlu0 %3218, %v3159
          %v3220 = vpop.permute.xlu0 %3219
          %3221 = vset.pattern.permute.xlu0 0
          %3222 = vperm.xlu0 %3221, %v3161
          %v3223 = vpop.permute.xlu0 %3222
          %3224 = vset.pattern.permute.xlu0 0
          %3225 = vperm.xlu0 %3224, %v3163
          %v3226 = vpop.permute.xlu0 %3225
          %3227 = vset.pattern.permute.xlu0 0
          %3228 = vperm.xlu0 %3227, %v3165
          %v3229 = vpop.permute.xlu0 %3228
          %v3230 = vlaneseq
          %v3231 = vshrl.u32 %v3230, 7
          %v3232 = vsub.s32 %v2983, %v3231
          %v3233 = vrot.slane %v3184, %v3232
          %v3234 = vlaneseq
          %v3235 = vshrl.u32 %v3234, 7
          %v3236 = vsub.s32 %v2988, %v3235
          %v3237 = vrot.slane %v3187, %v3236
          %v3238 = vsel %vm2993, %v3237, %v3233
          %v3239 = vlaneseq
          %v3240 = vshrl.u32 %v3239, 7
          %v3241 = vsub.s32 %v2983, %v3240
          %v3242 = vrot.slane %v3190, %v3241
          %v3243 = vlaneseq
          %v3244 = vshrl.u32 %v3243, 7
          %v3245 = vsub.s32 %v2988, %v3244
          %v3246 = vrot.slane %v3193, %v3245
          %v3247 = vsel %vm2993, %v3246, %v3242
          %v3248 = vlaneseq
          %v3249 = vshrl.u32 %v3248, 7
          %v3250 = vsub.s32 %v2983, %v3249
          %v3251 = vrot.slane %v3196, %v3250
          %v3252 = vlaneseq
          %v3253 = vshrl.u32 %v3252, 7
          %v3254 = vsub.s32 %v2988, %v3253
          %v3255 = vrot.slane %v3199, %v3254
          %v3256 = vsel %vm2993, %v3255, %v3251
          %v3257 = vlaneseq
          %v3258 = vshrl.u32 %v3257, 7
          %v3259 = vsub.s32 %v2983, %v3258
          %v3260 = vrot.slane %v3202, %v3259
          %v3261 = vlaneseq
          %v3262 = vshrl.u32 %v3261, 7
          %v3263 = vsub.s32 %v2988, %v3262
          %v3264 = vrot.slane %v3205, %v3263
          %v3265 = vsel %vm2993, %v3264, %v3260
          %v3266 = vlaneseq
          %v3267 = vshrl.u32 %v3266, 7
          %v3268 = vsub.s32 %v2983, %v3267
          %v3269 = vrot.slane %v3208, %v3268
          %v3270 = vlaneseq
          %v3271 = vshrl.u32 %v3270, 7
          %v3272 = vsub.s32 %v2988, %v3271
          %v3273 = vrot.slane %v3211, %v3272
          %v3274 = vsel %vm2993, %v3273, %v3269
          %v3275 = vlaneseq
          %v3276 = vshrl.u32 %v3275, 7
          %v3277 = vsub.s32 %v2983, %v3276
          %v3278 = vrot.slane %v3214, %v3277
          %v3279 = vlaneseq
          %v3280 = vshrl.u32 %v3279, 7
          %v3281 = vsub.s32 %v2988, %v3280
          %v3282 = vrot.slane %v3217, %v3281
          %v3283 = vsel %vm2993, %v3282, %v3278
          %v3284 = vlaneseq
          %v3285 = vshrl.u32 %v3284, 7
          %v3286 = vsub.s32 %v2983, %v3285
          %v3287 = vrot.slane %v3220, %v3286
          %v3288 = vlaneseq
          %v3289 = vshrl.u32 %v3288, 7
          %v3290 = vsub.s32 %v2988, %v3289
          %v3291 = vrot.slane %v3223, %v3290
          %v3292 = vsel %vm2993, %v3291, %v3287
          %v3293 = vlaneseq
          %v3294 = vshrl.u32 %v3293, 7
          %v3295 = vsub.s32 %v2983, %v3294
          %v3296 = vrot.slane %v3226, %v3295
          %v3297 = vlaneseq
          %v3298 = vshrl.u32 %v3297, 7
          %v3299 = vsub.s32 %v2988, %v3298
          %v3300 = vrot.slane %v3229, %v3299
          %v3301 = vsel %vm2993, %v3300, %v3296
          %v3302 = vsel %vm3058, %v3247, %v3238
          %v3303 = vsel %vm3060, %v3256, %v3302
          %v3304 = vsel %vm3062, %v3265, %v3303
          %v3305 = vsel %vm3064, %v3274, %v3304
          %v3306 = vsel %vm3066, %v3283, %v3305
          %v3307 = vsel %vm3068, %v3292, %v3306
          %v3308 = vsel %vm3070, %v3301, %v3307
          %v3310 = vsel %vm3073, %v3308, 0.0
          %3311 = vadd.xlane.f32.xlu0 %v3310
          %v3312 = vpop.xlane.xlu0 %3311
          %v3313 = vrcp.pop %v3312
          %v3315 = vlaneseq
          %v3316 = vshrl.u32 %v3315, 7
          %v3317 = vsub.s32 0, %v3316
          %v3318 = vrot.slane %v3313, %v3317
          %v3319 = vlaneseq
          %v3320 = vshrl.u32 %v3319, 7
          %v3321 = vsub.s32 1, %v3320
          %v3322 = vrot.slane %v3313, %v3321
          %v3323 = vlaneseq
          %v3324 = vshrl.u32 %v3323, 7
          %v3325 = vsub.s32 2, %v3324
          %v3326 = vrot.slane %v3313, %v3325
          %v3327 = vlaneseq
          %v3328 = vshrl.u32 %v3327, 7
          %v3329 = vsub.s32 3, %v3328
          %v3330 = vrot.slane %v3313, %v3329
          %v3331 = vlaneseq
          %v3332 = vshrl.u32 %v3331, 7
          %v3333 = vsub.s32 4, %v3332
          %v3334 = vrot.slane %v3313, %v3333
          %v3335 = vlaneseq
          %v3336 = vshrl.u32 %v3335, 7
          %v3337 = vsub.s32 5, %v3336
          %v3338 = vrot.slane %v3313, %v3337
          %v3339 = vlaneseq
          %v3340 = vshrl.u32 %v3339, 7
          %v3341 = vsub.s32 6, %v3340
          %v3342 = vrot.slane %v3313, %v3341
          %v3343 = vlaneseq
          %v3344 = vshrl.u32 %v3343, 7
          %v3345 = vsub.s32 7, %v3344
          %v3346 = vrot.slane %v3313, %v3345
          %v3355 = vmul.f32 %v3135, %v3318
          %v3356 = vmul.f32 %v3137, %v3318
          %v3357 = vmul.f32 %v3139, %v3322
          %v3358 = vmul.f32 %v3141, %v3322
          %v3359 = vmul.f32 %v3143, %v3326
          %v3360 = vmul.f32 %v3145, %v3326
          %v3361 = vmul.f32 %v3147, %v3330
          %v3362 = vmul.f32 %v3149, %v3330
          %v3363 = vmul.f32 %v3151, %v3334
          %v3364 = vmul.f32 %v3153, %v3334
          %v3365 = vmul.f32 %v3155, %v3338
          %v3366 = vmul.f32 %v3157, %v3338
          %v3367 = vmul.f32 %v3159, %v3342
          %v3368 = vmul.f32 %v3161, %v3342
          %v3369 = vmul.f32 %v3163, %v3346
          %v3370 = vmul.f32 %v3165, %v3346
          %3372 = vset.pattern.permute.xlu0 0
          %3373 = vperm.xlu0 %3372, %v3355
          %v3374 = vpop.permute.xlu0 %3373
          %3377 = vset.pattern.permute.xlu0 0
          %3378 = vperm.xlu0 %3377, %v3356
          %v3379 = vpop.permute.xlu0 %3378
          %3382 = vset.pattern.permute.xlu0 0
          %3383 = vperm.xlu0 %3382, %v3357
          %v3384 = vpop.permute.xlu0 %3383
          %3387 = vset.pattern.permute.xlu0 0
          %3388 = vperm.xlu0 %3387, %v3358
          %v3389 = vpop.permute.xlu0 %3388
          %3392 = vset.pattern.permute.xlu0 0
          %3393 = vperm.xlu0 %3392, %v3359
          %v3394 = vpop.permute.xlu0 %3393
          %3397 = vset.pattern.permute.xlu0 0
          %3398 = vperm.xlu0 %3397, %v3360
          %v3399 = vpop.permute.xlu0 %3398
          %3402 = vset.pattern.permute.xlu0 0
          %3403 = vperm.xlu0 %3402, %v3361
          %v3404 = vpop.permute.xlu0 %3403
          %3407 = vset.pattern.permute.xlu0 0
          %3408 = vperm.xlu0 %3407, %v3362
          %v3409 = vpop.permute.xlu0 %3408
          %3412 = vset.pattern.permute.xlu0 0
          %3413 = vperm.xlu0 %3412, %v3363
          %v3414 = vpop.permute.xlu0 %3413
          %3417 = vset.pattern.permute.xlu0 0
          %3418 = vperm.xlu0 %3417, %v3364
          %v3419 = vpop.permute.xlu0 %3418
          %3422 = vset.pattern.permute.xlu0 0
          %3423 = vperm.xlu0 %3422, %v3365
          %v3424 = vpop.permute.xlu0 %3423
          %3427 = vset.pattern.permute.xlu0 0
          %3428 = vperm.xlu0 %3427, %v3366
          %v3429 = vpop.permute.xlu0 %3428
          %3432 = vset.pattern.permute.xlu0 0
          %3433 = vperm.xlu0 %3432, %v3367
          %v3434 = vpop.permute.xlu0 %3433
          %3437 = vset.pattern.permute.xlu0 0
          %3438 = vperm.xlu0 %3437, %v3368
          %v3439 = vpop.permute.xlu0 %3438
          %3442 = vset.pattern.permute.xlu0 0
          %3443 = vperm.xlu0 %3442, %v3369
          %v3444 = vpop.permute.xlu0 %3443
          %3447 = vset.pattern.permute.xlu0 0
          %3448 = vperm.xlu0 %3447, %v3370
          %v3449 = vpop.permute.xlu0 %3448
          %v3451 = vmul.f32 %v3374, %v2473
          %v3452 = vmul.f32 %v3374, %v2474
          %v3453 = vmul.f32 %v3379, %v2475
          %v3454 = vmul.f32 %v3379, %v2476
          %v3455 = vmul.f32 %v3384, %v2477
          %v3456 = vmul.f32 %v3384, %v2478
          %v3457 = vmul.f32 %v3389, %v2479
          %v3458 = vmul.f32 %v3389, %v2480
          %v3459 = vmul.f32 %v3394, %v2481
          %v3460 = vmul.f32 %v3394, %v2482
          %v3461 = vmul.f32 %v3399, %v2483
          %v3462 = vmul.f32 %v3399, %v2484
          %v3463 = vmul.f32 %v3404, %v2485
          %v3464 = vmul.f32 %v3404, %v2486
          %v3465 = vmul.f32 %v3409, %v2487
          %v3466 = vmul.f32 %v3409, %v2488
          %v3467 = vmul.f32 %v3414, %v2489
          %v3468 = vmul.f32 %v3414, %v2490
          %v3469 = vmul.f32 %v3419, %v2491
          %v3470 = vmul.f32 %v3419, %v2492
          %v3471 = vmul.f32 %v3424, %v2493
          %v3472 = vmul.f32 %v3424, %v2494
          %v3473 = vmul.f32 %v3429, %v2495
          %v3474 = vmul.f32 %v3429, %v2496
          %v3475 = vmul.f32 %v3434, %v2497
          %v3476 = vmul.f32 %v3434, %v2498
          %v3477 = vmul.f32 %v3439, %v2499
          %v3478 = vmul.f32 %v3439, %v2500
          %v3479 = vmul.f32 %v3444, %v2501
          %v3480 = vmul.f32 %v3444, %v2502
          %v3481 = vmul.f32 %v3449, %v2503
          %v3482 = vmul.f32 %v3449, %v2504
          %v3483 = vadd.f32 %v3451, %v3453
          %v3484 = vrot.slane %v3483, 4
          %v3485 = vadd.f32 %v3483, %v3484
          %v3486 = vrot.slane %v3485, 2
          %v3487 = vadd.f32 %v3485, %v3486
          %v3488 = vrot.slane %v3487, 1
          %v3489 = vadd.f32 %v3487, %v3488
          %v3490 = vadd.f32 %v3452, %v3454
          %v3491 = vrot.slane %v3490, 4
          %v3492 = vadd.f32 %v3490, %v3491
          %v3493 = vrot.slane %v3492, 2
          %v3494 = vadd.f32 %v3492, %v3493
          %v3495 = vrot.slane %v3494, 1
          %v3496 = vadd.f32 %v3494, %v3495
          %v3497 = vadd.f32 %v3455, %v3457
          %v3498 = vrot.slane %v3497, 4
          %v3499 = vadd.f32 %v3497, %v3498
          %v3500 = vrot.slane %v3499, 2
          %v3501 = vadd.f32 %v3499, %v3500
          %v3502 = vrot.slane %v3501, 1
          %v3503 = vadd.f32 %v3501, %v3502
          %v3504 = vadd.f32 %v3456, %v3458
          %v3505 = vrot.slane %v3504, 4
          %v3506 = vadd.f32 %v3504, %v3505
          %v3507 = vrot.slane %v3506, 2
          %v3508 = vadd.f32 %v3506, %v3507
          %v3509 = vrot.slane %v3508, 1
          %v3510 = vadd.f32 %v3508, %v3509
          %v3511 = vadd.f32 %v3459, %v3461
          %v3512 = vrot.slane %v3511, 4
          %v3513 = vadd.f32 %v3511, %v3512
          %v3514 = vrot.slane %v3513, 2
          %v3515 = vadd.f32 %v3513, %v3514
          %v3516 = vrot.slane %v3515, 1
          %v3517 = vadd.f32 %v3515, %v3516
          %v3518 = vadd.f32 %v3460, %v3462
          %v3519 = vrot.slane %v3518, 4
          %v3520 = vadd.f32 %v3518, %v3519
          %v3521 = vrot.slane %v3520, 2
          %v3522 = vadd.f32 %v3520, %v3521
          %v3523 = vrot.slane %v3522, 1
          %v3524 = vadd.f32 %v3522, %v3523
          %v3525 = vadd.f32 %v3463, %v3465
          %v3526 = vrot.slane %v3525, 4
          %v3527 = vadd.f32 %v3525, %v3526
          %v3528 = vrot.slane %v3527, 2
          %v3529 = vadd.f32 %v3527, %v3528
          %v3530 = vrot.slane %v3529, 1
          %v3531 = vadd.f32 %v3529, %v3530
          %v3532 = vadd.f32 %v3464, %v3466
          %v3533 = vrot.slane %v3532, 4
          %v3534 = vadd.f32 %v3532, %v3533
          %v3535 = vrot.slane %v3534, 2
          %v3536 = vadd.f32 %v3534, %v3535
          %v3537 = vrot.slane %v3536, 1
          %v3538 = vadd.f32 %v3536, %v3537
          %v3539 = vadd.f32 %v3467, %v3469
          %v3540 = vrot.slane %v3539, 4
          %v3541 = vadd.f32 %v3539, %v3540
          %v3542 = vrot.slane %v3541, 2
          %v3543 = vadd.f32 %v3541, %v3542
          %v3544 = vrot.slane %v3543, 1
          %v3545 = vadd.f32 %v3543, %v3544
          %v3546 = vadd.f32 %v3468, %v3470
          %v3547 = vrot.slane %v3546, 4
          %v3548 = vadd.f32 %v3546, %v3547
          %v3549 = vrot.slane %v3548, 2
          %v3550 = vadd.f32 %v3548, %v3549
          %v3551 = vrot.slane %v3550, 1
          %v3552 = vadd.f32 %v3550, %v3551
          %v3553 = vadd.f32 %v3471, %v3473
          %v3554 = vrot.slane %v3553, 4
          %v3555 = vadd.f32 %v3553, %v3554
          %v3556 = vrot.slane %v3555, 2
          %v3557 = vadd.f32 %v3555, %v3556
          %v3558 = vrot.slane %v3557, 1
          %v3559 = vadd.f32 %v3557, %v3558
          %v3560 = vadd.f32 %v3472, %v3474
          %v3561 = vrot.slane %v3560, 4
          %v3562 = vadd.f32 %v3560, %v3561
          %v3563 = vrot.slane %v3562, 2
          %v3564 = vadd.f32 %v3562, %v3563
          %v3565 = vrot.slane %v3564, 1
          %v3566 = vadd.f32 %v3564, %v3565
          %v3567 = vadd.f32 %v3475, %v3477
          %v3568 = vrot.slane %v3567, 4
          %v3569 = vadd.f32 %v3567, %v3568
          %v3570 = vrot.slane %v3569, 2
          %v3571 = vadd.f32 %v3569, %v3570
          %v3572 = vrot.slane %v3571, 1
          %v3573 = vadd.f32 %v3571, %v3572
          %v3574 = vadd.f32 %v3476, %v3478
          %v3575 = vrot.slane %v3574, 4
          %v3576 = vadd.f32 %v3574, %v3575
          %v3577 = vrot.slane %v3576, 2
          %v3578 = vadd.f32 %v3576, %v3577
          %v3579 = vrot.slane %v3578, 1
          %v3580 = vadd.f32 %v3578, %v3579
          %v3581 = vadd.f32 %v3479, %v3481
          %v3582 = vrot.slane %v3581, 4
          %v3583 = vadd.f32 %v3581, %v3582
          %v3584 = vrot.slane %v3583, 2
          %v3585 = vadd.f32 %v3583, %v3584
          %v3586 = vrot.slane %v3585, 1
          %v3587 = vadd.f32 %v3585, %v3586
          %v3588 = vadd.f32 %v3480, %v3482
          %v3589 = vrot.slane %v3588, 4
          %v3590 = vadd.f32 %v3588, %v3589
          %v3591 = vrot.slane %v3590, 2
          %v3592 = vadd.f32 %v3590, %v3591
          %v3593 = vrot.slane %v3592, 1
          %v3594 = vadd.f32 %v3592, %v3593
          %v3611 = vsel %vm3058, %v3503, %v3489
          %v3612 = vsel %vm3060, %v3517, %v3611
          %v3613 = vsel %vm3062, %v3531, %v3612
          %v3614 = vsel %vm3064, %v3545, %v3613
          %v3615 = vsel %vm3066, %v3559, %v3614
          %v3616 = vsel %vm3068, %v3573, %v3615
          %v3617 = vsel %vm3070, %v3587, %v3616
          %v3618 = vsel %vm3058, %v3510, %v3496
          %v3619 = vsel %vm3060, %v3524, %v3618
          %v3620 = vsel %vm3062, %v3538, %v3619
          %v3621 = vsel %vm3064, %v3552, %v3620
          %v3622 = vsel %vm3066, %v3566, %v3621
          %v3623 = vsel %vm3068, %v3580, %v3622
          %v3624 = vsel %vm3070, %v3594, %v3623
          %3627 = vst [vmem:[#allocation3] sm:$0xff] %v891
          %3628 = vst [vmem:[#allocation3 + $0x8] sm:$0xff] %v3617
          %3629 = vst [vmem:[#allocation3 + $0x10] sm:$0xff] %v3624
        $region80: #{decoder_forward.1} parent=55 // pred_fallthru
          _
        %v3630 = vld [vmem:[#allocation3] sm:$0xff]
        %v3631 = vld [vmem:[#allocation3 + $0x8] sm:$0xff]
        %v3632 = vld [vmem:[#allocation3 + $0x10] sm:$0xff]
        %v3633 = vpack.c.bf16 %v3630, %v3630
        %v3634 = vpack.c.bf16 %v3631, %v3631
        %v3635 = vpack.c.bf16 %v3632, %v3632
        %v3636 = vld [vmem:[%s431] sm:$0xff]
        %v3637 = vld [vmem:[%s431 + $0x8] sm:$0xff]
        %v3638 = vld [vmem:[%s431 + $0x10] sm:$0xff]
        %v3639 = vld [vmem:[%s431 + $0x18] sm:$0xff]
        %v3640 = vld [vmem:[%s431 + $0x20] sm:$0xff]
        %v3641 = vld [vmem:[%s431 + $0x28] sm:$0xff]
        %v3642 = vld [vmem:[%s431 + $0x30] sm:$0xff]
        %v3643 = vld [vmem:[%s431 + $0x38] sm:$0xff]
        %v3644 = vld [vmem:[%s431 + $0x40] sm:$0xff]
        %v3645 = vld [vmem:[%s431 + $0x48] sm:$0xff]
        %v3646 = vld [vmem:[%s431 + $0x50] sm:$0xff]
        %v3647 = vld [vmem:[%s431 + $0x58] sm:$0xff]
        %v3648 = vld [vmem:[%s431 + $0x60] sm:$0xff]
        %v3649 = vld [vmem:[%s431 + $0x68] sm:$0xff]
        %v3650 = vld [vmem:[%s431 + $0x70] sm:$0xff]
        %v3651 = vld [vmem:[%s431 + $0x78] sm:$0xff]
        %v3652 = vld [vmem:[%s431 + $0x80] sm:$0xff]
        %v3653 = vld [vmem:[%s431 + $0x88] sm:$0xff]
        %v3654 = vld [vmem:[%s431 + $0x90] sm:$0xff]
        %v3655 = vld [vmem:[%s431 + $0x98] sm:$0xff]
        %v3656 = vld [vmem:[%s431 + $0xa0] sm:$0xff]
        %v3657 = vld [vmem:[%s431 + $0xa8] sm:$0xff]
        %v3658 = vld [vmem:[%s431 + $0xb0] sm:$0xff]
        %v3659 = vld [vmem:[%s431 + $0xb8] sm:$0xff]
        %v3660 = vld [vmem:[%s431 + $0xc0] sm:$0xff]
        %v3661 = vld [vmem:[%s431 + $0xc8] sm:$0xff]
        %v3662 = vld [vmem:[%s431 + $0xd0] sm:$0xff]
        %v3663 = vld [vmem:[%s431 + $0xd8] sm:$0xff]
        %v3664 = vld [vmem:[%s431 + $0xe0] sm:$0xff]
        %v3665 = vld [vmem:[%s431 + $0xe8] sm:$0xff]
        %v3666 = vld [vmem:[%s431 + $0xf0] sm:$0xff]
        %v3667 = vld [vmem:[%s431 + $0xf8] sm:$0xff]
        %v3668 = vld [vmem:[%s431 + $0x100] sm:$0xff]
        %v3669 = vld [vmem:[%s431 + $0x108] sm:$0xff]
        %v3670 = vld [vmem:[%s431 + $0x110] sm:$0xff]
        %v3671 = vld [vmem:[%s431 + $0x118] sm:$0xff]
        %v3672 = vld [vmem:[%s431 + $0x120] sm:$0xff]
        %v3673 = vld [vmem:[%s431 + $0x128] sm:$0xff]
        %v3674 = vld [vmem:[%s431 + $0x130] sm:$0xff]
        %v3675 = vld [vmem:[%s431 + $0x138] sm:$0xff]
        %v3676 = vld [vmem:[%s431 + $0x140] sm:$0xff]
        %v3677 = vld [vmem:[%s431 + $0x148] sm:$0xff]
        %v3678 = vld [vmem:[%s431 + $0x150] sm:$0xff]
        %v3679 = vld [vmem:[%s431 + $0x158] sm:$0xff]
        %v3680 = vld [vmem:[%s431 + $0x160] sm:$0xff]
        %v3681 = vld [vmem:[%s431 + $0x168] sm:$0xff]
        %v3682 = vld [vmem:[%s431 + $0x170] sm:$0xff]
        %v3683 = vld [vmem:[%s431 + $0x178] sm:$0xff]
        %v3684 = vld [vmem:[%s440] sm:$0x3]
        %v3686 = vlaneseq
        %v3687 = vshrl.u32 %v3686, 7
        %v3688 = vsub.s32 0, %v3687
        %v3689 = vrot.slane %v3684, %v3688
        %v3690 = vlaneseq
        %v3691 = vshrl.u32 %v3690, 7
        %v3692 = vsub.s32 1, %v3691
        %v3693 = vrot.slane %v3684, %v3692
        %v3744 = vunpack.c.l.b16 %v3636
        %v3745 = vunpack.c.h.b16 %v3636
        %v3746 = vunpack.c.l.b16 %v3637
        %v3747 = vunpack.c.h.b16 %v3637
        %v3748 = vunpack.c.l.b16 %v3638
        %v3749 = vunpack.c.h.b16 %v3638
        %v3750 = vunpack.c.l.b16 %v3639
        %v3751 = vunpack.c.h.b16 %v3639
        %v3752 = vunpack.c.l.b16 %v3640
        %v3753 = vunpack.c.h.b16 %v3640
        %v3754 = vunpack.c.l.b16 %v3641
        %v3755 = vunpack.c.h.b16 %v3641
        %v3756 = vunpack.c.l.b16 %v3642
        %v3757 = vunpack.c.h.b16 %v3642
        %v3758 = vunpack.c.l.b16 %v3643
        %v3759 = vunpack.c.h.b16 %v3643
        %v3760 = vunpack.c.l.b16 %v3644
        %v3761 = vunpack.c.h.b16 %v3644
        %v3762 = vunpack.c.l.b16 %v3645
        %v3763 = vunpack.c.h.b16 %v3645
        %v3764 = vunpack.c.l.b16 %v3646
        %v3765 = vunpack.c.h.b16 %v3646
        %v3766 = vunpack.c.l.b16 %v3647
        %v3767 = vunpack.c.h.b16 %v3647
        %v3768 = vunpack.c.l.b16 %v3648
        %v3769 = vunpack.c.h.b16 %v3648
        %v3770 = vunpack.c.l.b16 %v3649
        %v3771 = vunpack.c.h.b16 %v3649
        %v3772 = vunpack.c.l.b16 %v3650
        %v3773 = vunpack.c.h.b16 %v3650
        %v3774 = vunpack.c.l.b16 %v3651
        %v3775 = vunpack.c.h.b16 %v3651
        %v3776 = vunpack.c.l.b16 %v3652
        %v3777 = vunpack.c.h.b16 %v3652
        %v3778 = vunpack.c.l.b16 %v3653
        %v3779 = vunpack.c.h.b16 %v3653
        %v3780 = vunpack.c.l.b16 %v3654
        %v3781 = vunpack.c.h.b16 %v3654
        %v3782 = vunpack.c.l.b16 %v3655
        %v3783 = vunpack.c.h.b16 %v3655
        %v3784 = vunpack.c.l.b16 %v3656
        %v3785 = vunpack.c.h.b16 %v3656
        %v3786 = vunpack.c.l.b16 %v3657
        %v3787 = vunpack.c.h.b16 %v3657
        %v3788 = vunpack.c.l.b16 %v3658
        %v3789 = vunpack.c.h.b16 %v3658
        %v3790 = vunpack.c.l.b16 %v3659
        %v3791 = vunpack.c.h.b16 %v3659
        %v3792 = vunpack.c.l.b16 %v3660
        %v3793 = vunpack.c.h.b16 %v3660
        %v3794 = vunpack.c.l.b16 %v3661
        %v3795 = vunpack.c.h.b16 %v3661
        %v3796 = vunpack.c.l.b16 %v3662
        %v3797 = vunpack.c.h.b16 %v3662
        %v3798 = vunpack.c.l.b16 %v3663
        %v3799 = vunpack.c.h.b16 %v3663
        %v3800 = vunpack.c.l.b16 %v3664
        %v3801 = vunpack.c.h.b16 %v3664
        %v3802 = vunpack.c.l.b16 %v3665
        %v3803 = vunpack.c.h.b16 %v3665
        %v3804 = vunpack.c.l.b16 %v3666
        %v3805 = vunpack.c.h.b16 %v3666
        %v3806 = vunpack.c.l.b16 %v3667
        %v3807 = vunpack.c.h.b16 %v3667
        %v3808 = vunpack.c.l.b16 %v3668
        %v3809 = vunpack.c.h.b16 %v3668
        %v3810 = vunpack.c.l.b16 %v3669
        %v3811 = vunpack.c.h.b16 %v3669
        %v3812 = vunpack.c.l.b16 %v3670
        %v3813 = vunpack.c.h.b16 %v3670
        %v3814 = vunpack.c.l.b16 %v3671
        %v3815 = vunpack.c.h.b16 %v3671
        %v3816 = vunpack.c.l.b16 %v3672
        %v3817 = vunpack.c.h.b16 %v3672
        %v3818 = vunpack.c.l.b16 %v3673
        %v3819 = vunpack.c.h.b16 %v3673
        %v3820 = vunpack.c.l.b16 %v3674
        %v3821 = vunpack.c.h.b16 %v3674
        %v3822 = vunpack.c.l.b16 %v3675
        %v3823 = vunpack.c.h.b16 %v3675
        %v3824 = vunpack.c.l.b16 %v3676
        %v3825 = vunpack.c.h.b16 %v3676
        %v3826 = vunpack.c.l.b16 %v3677
        %v3827 = vunpack.c.h.b16 %v3677
        %v3828 = vunpack.c.l.b16 %v3678
        %v3829 = vunpack.c.h.b16 %v3678
        %v3830 = vunpack.c.l.b16 %v3679
        %v3831 = vunpack.c.h.b16 %v3679
        %v3832 = vunpack.c.l.b16 %v3680
        %v3833 = vunpack.c.h.b16 %v3680
        %v3834 = vunpack.c.l.b16 %v3681
        %v3835 = vunpack.c.h.b16 %v3681
        %v3836 = vunpack.c.l.b16 %v3682
        %v3837 = vunpack.c.h.b16 %v3682
        %v3838 = vunpack.c.l.b16 %v3683
        %v3839 = vunpack.c.h.b16 %v3683
        %v3840 = vpack.c.b16 %v3746, %v3744
        %v3841 = vpack.c.b16 %v3747, %v3745
        %v3842 = vpack.c.b16 %v3750, %v3748
        %v3843 = vpack.c.b16 %v3751, %v3749
        %v3844 = vpack.c.b16 %v3754, %v3752
        %v3845 = vpack.c.b16 %v3755, %v3753
        %v3846 = vpack.c.b16 %v3758, %v3756
        %v3847 = vpack.c.b16 %v3759, %v3757
        %v3848 = vpack.c.b16 %v3762, %v3760
        %v3849 = vpack.c.b16 %v3763, %v3761
        %v3850 = vpack.c.b16 %v3766, %v3764
        %v3851 = vpack.c.b16 %v3767, %v3765
        %v3852 = vpack.c.b16 %v3770, %v3768
        %v3853 = vpack.c.b16 %v3771, %v3769
        %v3854 = vpack.c.b16 %v3774, %v3772
        %v3855 = vpack.c.b16 %v3775, %v3773
        %v3856 = vpack.c.b16 %v3778, %v3776
        %v3857 = vpack.c.b16 %v3779, %v3777
        %v3858 = vpack.c.b16 %v3782, %v3780
        %v3859 = vpack.c.b16 %v3783, %v3781
        %v3860 = vpack.c.b16 %v3786, %v3784
        %v3861 = vpack.c.b16 %v3787, %v3785
        %v3862 = vpack.c.b16 %v3790, %v3788
        %v3863 = vpack.c.b16 %v3791, %v3789
        %v3864 = vpack.c.b16 %v3794, %v3792
        %v3865 = vpack.c.b16 %v3795, %v3793
        %v3866 = vpack.c.b16 %v3798, %v3796
        %v3867 = vpack.c.b16 %v3799, %v3797
        %v3868 = vpack.c.b16 %v3802, %v3800
        %v3869 = vpack.c.b16 %v3803, %v3801
        %v3870 = vpack.c.b16 %v3806, %v3804
        %v3871 = vpack.c.b16 %v3807, %v3805
        %v3872 = vpack.c.b16 %v3810, %v3808
        %v3873 = vpack.c.b16 %v3811, %v3809
        %v3874 = vpack.c.b16 %v3814, %v3812
        %v3875 = vpack.c.b16 %v3815, %v3813
        %v3876 = vpack.c.b16 %v3818, %v3816
        %v3877 = vpack.c.b16 %v3819, %v3817
        %v3878 = vpack.c.b16 %v3822, %v3820
        %v3879 = vpack.c.b16 %v3823, %v3821
        %v3880 = vpack.c.b16 %v3826, %v3824
        %v3881 = vpack.c.b16 %v3827, %v3825
        %v3882 = vpack.c.b16 %v3830, %v3828
        %v3883 = vpack.c.b16 %v3831, %v3829
        %v3884 = vpack.c.b16 %v3834, %v3832
        %v3885 = vpack.c.b16 %v3835, %v3833
        %v3886 = vpack.c.b16 %v3838, %v3836
        %v3887 = vpack.c.b16 %v3839, %v3837
        %3936 = vmatprep.subr.bf16.mxu0 %v3841
        %3937 = vmatpush1.bf16.msra.mxu0 %v3840
        %3938 = vmatprep.subr.bf16.mxu0 %v3843
        %3939 = vmatpush1.bf16.msra.mxu0 %v3842
        %3940 = vmatprep.subr.bf16.mxu0 %v3845
        %3941 = vmatpush1.bf16.msra.mxu0 %v3844
        %3942 = vmatprep.subr.bf16.mxu0 %v3847
        %3943 = vmatpush1.bf16.msra.mxu0 %v3846
        %3944 = vmatprep.subr.bf16.mxu0 %v3849
        %3945 = vmatpush1.bf16.msra.mxu0 %v3848
        %3946 = vmatprep.subr.bf16.mxu0 %v3851
        %3947 = vmatpush1.bf16.msra.mxu0 %v3850
        %3948 = vmatprep.subr.bf16.mxu0 %v3853
        %3949 = vmatpush1.bf16.msra.mxu0 %v3852
        %3950 = vmatprep.subr.bf16.mxu0 %v3855
        %3951 = vmatpush1.bf16.msra.mxu0 %v3854
        %3952 = vmatprep.subr.bf16.mxu0 %v3857
        %3953 = vmatpush1.bf16.msra.mxu0 %v3856
        %3954 = vmatprep.subr.bf16.mxu0 %v3859
        %3955 = vmatpush1.bf16.msra.mxu0 %v3858
        %3956 = vmatprep.subr.bf16.mxu0 %v3861
        %3957 = vmatpush1.bf16.msra.mxu0 %v3860
        %3958 = vmatprep.subr.bf16.mxu0 %v3863
        %3959 = vmatpush1.bf16.msra.mxu0 %v3862
        %3960 = vmatprep.subr.bf16.mxu0 %v3865
        %3961 = vmatpush1.bf16.msra.mxu0 %v3864
        %3962 = vmatprep.subr.bf16.mxu0 %v3867
        %3963 = vmatpush1.bf16.msra.mxu0 %v3866
        %3964 = vmatprep.subr.bf16.mxu0 %v3869
        %3965 = vmatpush1.bf16.msra.mxu0 %v3868
        %3966 = vmatprep.subr.bf16.mxu0 %v3871
        %3967 = vmatpush1.bf16.msra.mxu0 %v3870
        %3968 = vmatprep.mubr.bf16.mxu0 %v3634
        %3969 = vmatmul.mubr.bf16.gmra.mrb[0].mxu0 %v3633
        %v3970 = vpop.f32.mrb[0].mxu0
        %v3971 = vadd.f32 %v3689, %v3970
        %v3972 = vpop.f32.mrb[0].mxu0
        %v3973 = vadd.f32 %v3693, %v3972
        %v3974 = vpop.f32.mrb[0].mxu0
        %v3975 = vpop.f32.mrb[0].mxu0
        %3976 = vdwg.mxu0
        %3977 = vmatprep.subr.bf16.mxu0 %v3873
        %3978 = vmatpush1.bf16.msra.mxu0 %v3872
        %3979 = vmatprep.subr.bf16.mxu0 %v3875
        %3980 = vmatpush1.bf16.msra.mxu0 %v3874
        %3981 = vmatprep.subr.bf16.mxu0 %v3877
        %3982 = vmatpush1.bf16.msra.mxu0 %v3876
        %3983 = vmatprep.subr.bf16.mxu0 %v3879
        %3984 = vmatpush1.bf16.msra.mxu0 %v3878
        %3985 = vmatprep.subr.bf16.mxu0 %v3881
        %3986 = vmatpush1.bf16.msra.mxu0 %v3880
        %3987 = vmatprep.subr.bf16.mxu0 %v3883
        %3988 = vmatpush1.bf16.msra.mxu0 %v3882
        %3989 = vmatprep.subr.bf16.mxu0 %v3885
        %3990 = vmatpush1.bf16.msra.mxu0 %v3884
        %3991 = vmatprep.subr.bf16.mxu0 %v3887
        %3992 = vmatpush1.bf16.msra.mxu0 %v3886
        %3993 = vmatprep.subr.bf16.mxu0 0
        %3994 = vmatpush1.bf16.msra.mxu0 0
        %3995 = vmatprep.subr.bf16.mxu0 0
        %3996 = vmatpush1.bf16.msra.mxu0 0
        %3997 = vmatprep.subr.bf16.mxu0 0
        %3998 = vmatpush1.bf16.msra.mxu0 0
        %3999 = vmatprep.subr.bf16.mxu0 0
        %4000 = vmatpush1.bf16.msra.mxu0 0
        %4001 = vmatprep.subr.bf16.mxu0 0
        %4002 = vmatpush1.bf16.msra.mxu0 0
        %4003 = vmatprep.subr.bf16.mxu0 0
        %4004 = vmatpush1.bf16.msra.mxu0 0
        %4005 = vmatprep.subr.bf16.mxu0 0
        %4006 = vmatpush1.bf16.msra.mxu0 0
        %4007 = vmatprep.subr.bf16.mxu0 0
        %4008 = vmatpush1.bf16.msra.mxu0 0
        %4009 = vmatprep.mubr.bf16.mxu0 0
        %4010 = vmatmul.mubr.bf16.gmra.mrb[0].mxu0 %v3635
        %v4011 = vpop.f32.mrb[0].mxu0
        %v4012 = vadd.f32 %v3971, %v4011
        %v4013 = vpop.f32.mrb[0].mxu0
        %v4014 = vadd.f32 %v3973, %v4013
        %v4015 = vpop.f32.mrb[0].mxu0
        %v4016 = vpop.f32.mrb[0].mxu0
        %4017 = vdwg.mxu0
        %4018 = vst [vmem:[%s479] sm:$0xff] %v4012
        %4019 = vst [vmem:[%s479 + $0x8] sm:$0xff] %v4014
        %s4020 = sand.u32 %s245, 1
        %s4021 = scalar_lea.sflag [#allocation9], %s4020
        %s4022 = sand.u32 %s245, 1
        %s4023 = smul.addr %s4022, 16
        %s4024 = scalar_lea.vmem [#allocation16], %s4023
        // Predicated region
        $region321: #{decoder_forward.1} parent=55 // pred_check
          %p4025 = pneg %p255
        $region322: #{decoder_forward.1} parent=55 // pred_check_branch
          %4027 = sbr.rel (%p4025) target = $region324
        $region323: #{decoder_forward.1} parent=55 // pred_region
          %s4028 = smul.u32 2, %s38
          %s4030 = ssub.s32 256, 256
          %4031 = vsyncadd %s4021, %s4030
          %s4032 = smul.addr %s4028, 128
          %s4033 = scalar_lea.hbm %s11, %s4032
          %s4035 = sshll.u32 %s4024, 4
          %s4036 = int_to_ptr.vmem [resolvable:$true] %s4035
          %4038 = dma.vmem_to_hbm [thread:$0]  %s4036, 256, %s4033, %s4021
        $region324: #{decoder_forward.1} parent=55 // pred_fallthru
          _
        // Predicated region
        $region325: #{decoder_forward.1} parent=55 // pred_check
          %p4039 = pneg %p276
        $region326: #{decoder_forward.1} parent=55 // pred_check_branch
          %4041 = sbr.rel (%p4039) target = $region328
        $region327: #{decoder_forward.1} parent=55 // pred_region
          %s4043 = ssub.s32 256, 256
          %4044 = vsyncadd [#allocation18], %s4043
          %s4046 = sshll.u32 [#allocation17], 4
          %s4047 = int_to_ptr.vmem [resolvable:$true] %s4046
          %4049 = dma.vmem_to_hbm [thread:$0]  %s4047, 256, %s12, [#allocation18]
        $region328: #{decoder_forward.1} parent=55 // pred_fallthru
          _
        // Predicated region
        $region329: #{decoder_forward.1} parent=55 // pred_check
          %p4050 = pneg %p297
        $region330: #{decoder_forward.1} parent=55 // pred_check_branch
          %4052 = sbr.rel (%p4050) target = $region332
        $region331: #{decoder_forward.1} parent=55 // pred_region
          %s4054 = ssub.s32 256, 256
          %4055 = vsyncadd [#allocation18], %s4054
          %s4057 = sshll.u32 [#allocation19], 4
          %s4058 = int_to_ptr.vmem [resolvable:$true] %s4057
          %4060 = dma.vmem_to_hbm [thread:$0]  %s4058, 256, %s13, [#allocation18]
        $region332: #{decoder_forward.1} parent=55 // pred_fallthru
          _
        // Predicated region
        $region333: #{decoder_forward.1} parent=55 // pred_check
          %p4061 = pneg %p276
        $region334: #{decoder_forward.1} parent=55 // pred_check_branch
          %4063 = sbr.rel (%p4061) target = $region336
        $region335: #{decoder_forward.1} parent=55 // pred_region
          %4064 = dma.done [#allocation18], 256
        $region336: #{decoder_forward.1} parent=55 // pred_fallthru
          _
        // Predicated region
        $region337: #{decoder_forward.1} parent=55 // pred_check
          %p4065 = pneg %p297
        $region338: #{decoder_forward.1} parent=55 // pred_check_branch
          %4067 = sbr.rel (%p4065) target = $region340
        $region339: #{decoder_forward.1} parent=55 // pred_region
          %4068 = dma.done [#allocation18], 256
        $region340: #{decoder_forward.1} parent=55 // pred_fallthru
          _
      $region56: #{decoder_forward.1} parent=5 // pred_fallthru
        _
      %p4069 = scmp.le.s32.totalorder 2, %s33
      // Predicated region
      $region341: #{decoder_forward.1} parent=5 // pred_check
        %p4070 = pneg %p4069
      $region342: #{decoder_forward.1} parent=5 // pred_check_branch
        %4072 = sbr.rel (%p4070) target = $region344
      $region343: #{decoder_forward.1} parent=5 // pred_region
        %s4073 = ssub.s32 %s33, 2
        // Predicated region
        $region345: #{decoder_forward.1} parent=343 // pred_check
          %p4074 = pneg %p261
        $region346: #{decoder_forward.1} parent=343 // pred_check_branch
          %4076 = sbr.rel (%p4074) target = $region348
        $region347: #{decoder_forward.1} parent=343 // pred_region
          %s4077 = sand.u32 %s246, 1
          %s4078 = scalar_lea.sflag [#allocation9], %s4077
          %s4079 = sand.u32 %s246, 1
          %s4080 = smul.addr %s4079, 16
          %s4081 = scalar_lea.vmem [#allocation16], %s4080
          %4082 = dma.done %s4078, 256
        $region348: #{decoder_forward.1} parent=343 // pred_fallthru
          _
      $region344: #{decoder_forward.1} parent=5 // pred_fallthru
        _
    $region6: #{decoder_forward.1} parent=1 // loop_footer
      %s37 = sadd.s32 1, %s33
    $region7: #{decoder_forward.1} parent=1 // loop_footer_branch
      %32 = sbr.rel target = $region3
    $region8: #{decoder_forward.1} parent=1 // loop_exit
      _
    %4083 = vsyncpa [#allocation8], 1
    %s4084 = scalar_lea.sflag [#allocation8], 1
    %4085 = vsyncpa %s4084, 1
    %4086 = vsyncpa [#allocation11], 1
    %4087 = vsyncpa [#allocation14], 1
    %s4088 = scalar_lea.sflag [#allocation14], 1
    %4089 = vsyncpa %s4088, 1
    %4090 = vsyncpa [#allocation9], 1
    %s4091 = scalar_lea.sflag [#allocation9], 1
    %4092 = vsyncpa %s4091, 1
    %4093 = vsyncpa [#allocation18], 1
  %4094 = vsyncmov [#allocation4]
  %s4095 = vpop.sfrf %4094
  %p4096 = scmp.eq.s32.totalorder %s4095, 0
  %p4097 = pneg %p4096
  %4099 = shalt.err (%p4097)
  %s4100 = scalar_lea.sflag [#allocation4], 1
  %4101 = vsyncmov %s4100
  %s4102 = vpop.sfrf %4101
  %p4103 = scmp.eq.s32.totalorder %s4102, 0
  %p4104 = pneg %p4103
  %4106 = shalt.err (%p4104)
  %s4107 = scalar_lea.sflag [#allocation4], 2
  %4108 = vsyncmov %s4107
  %s4109 = vpop.sfrf %4108
  %p4110 = scmp.eq.s32.totalorder %s4109, 0
  %p4111 = pneg %p4110
  %4113 = shalt.err (%p4111)
  %s4114 = scalar_lea.sflag [#allocation4], 3
  %4115 = vsyncmov %s4114
  %s4116 = vpop.sfrf %4115
  %p4117 = scmp.eq.s32.totalorder %s4116, 0
  %p4118 = pneg %p4117
  %4120 = shalt.err (%p4118)
  %s4121 = scalar_lea.sflag [#allocation4], 4
  %4122 = vsyncmov %s4121
  %s4123 = vpop.sfrf %4122
  %p4124 = scmp.eq.s32.totalorder %s4123, 0
  %p4125 = pneg %p4124
  %4127 = shalt.err (%p4125)
  %s4128 = scalar_lea.sflag [#allocation4], 5
  %4129 = vsyncmov %s4128
  %s4130 = vpop.sfrf %4129
  %p4131 = scmp.eq.s32.totalorder %s4130, 0
  %p4132 = pneg %p4131
  %4134 = shalt.err (%p4132)
  %s4135 = scalar_lea.sflag [#allocation4], 6
  %4136 = vsyncmov %s4135
  %s4137 = vpop.sfrf %4136
  %p4138 = scmp.eq.s32.totalorder %s4137, 0
  %p4139 = pneg %p4138
  %4141 = shalt.err (%p4139)
  %s4142 = scalar_lea.sflag [#allocation4], 7
  %4143 = vsyncmov %s4142
  %s4144 = vpop.sfrf %4143
  %p4145 = scmp.eq.s32.totalorder %s4144, 0
  %p4146 = pneg %p4145
  %4148 = shalt.err (%p4146)

</llo_original>
